<compile_context>
chip_gen: v5e
topology: v5e:2x2
jax: 0.10.0
libtpu: 0.0.40
codegen_flags: <defaults>
</compile_context>

<pallas_src>
import functools

import jax
import jax.numpy as jnp
from jax import lax
from jax.experimental import pallas as pl
from jax.experimental.pallas import tpu as pltpu

_EPS = 1e-6
_C1 = 0.01 ** 2
_C2 = 0.03 ** 2
_WIN = 5                 # SSIM window_size
_PAD = _WIN // 2         # 2
_ROW0 = 8                # sublane-aligned first interior row in the scratch
_ROWS_EXTRA = 16         # scratch rows = H + 16 (covers 2-row halo top/bottom)


def _hybrid_loss_kernel(o_ref, t_ref, out_ref, scr, *,
                        n_total, H, W, mask_tail, approx_recip):
    """One grid step: partial sums (mrae, ssim, tv_h, tv_w) for a tile of planes."""
    n = o_ref.shape[0]
    f32 = jnp.float32

    def recip(x):
        # EUP reciprocal; exact path by default (loss must match the reference).
        return pl.reciprocal(x, approx=True) if approx_recip else 1.0 / x

    # Native-dtype ingest; upcast in VMEM.
    o = o_ref[...].astype(f32)           # (n, H, W)
    t = t_ref[...].astype(f32)

    if mask_tail:
        # grid = cdiv(N, n): the last tile may hang off the end of the array;
        # zero the out-of-range planes so they contribute nothing.
        first = pl.program_id(0) * n
        pidx = first + lax.broadcasted_iota(jnp.int32, (n, H, W), 0)
        valid = pidx < n_total
        o = jnp.where(valid, o, 0.0)
        t = jnp.where(valid, t, 0.0)

    # ---------------- MRAE partial sum (log / reciprocal on the EUP) ---------
    mrae_map = jnp.log(1.0 + jnp.abs(o - t) * recip(jnp.abs(t) + f32(_EPS)))
    s_mrae = jnp.sum(mrae_map)

    # ---------------- TV partial sums (per-plane, no cross-tile terms) -------
    s_tvh = jnp.sum(jnp.abs(o[:, 1:, :] - o[:, :-1, :]))
    s_tvw = jnp.sum(jnp.abs(o[:, :, 1:] - o[:, :, :-1]))

    # ---------------- SSIM: separable 5x5 box SUM, concat-free ---------------
    r0 = _ROW0
    zero_rows = jnp.zeros((5 * n, _PAD, W), f32)
    scr[:, r0 - _PAD:r0, :] = zero_rows                    # top halo rows
    scr[:, r0 + H:r0 + H + _PAD, :] = zero_rows            # bottom halo rows
    scr[0 * n:1 * n, r0:r0 + H, :] = o                     # aligned interior stores
    scr[1 * n:2 * n, r0:r0 + H, :] = t
    scr[2 * n:3 * n, r0:r0 + H, :] = o * o
    scr[3 * n:4 * n, r0:r0 + H, :] = t * t
    scr[4 * n:5 * n, r0:r0 + H, :] = o * t

    # Vertical 5-tap sum via offset row reads from the zero-halo scratch.
    vv = scr[:, r0 - _PAD:r0 - _PAD + H, :]
    for k in range(1, _WIN):
        vv = vv + scr[:, r0 - _PAD + k:r0 - _PAD + k + H, :]

    # Zero-extend by 2 lanes on each side (register-level, single small concat
    # on the batched value; replaces the previous full padded-slab copies).
    zc = jnp.zeros((5 * n, H, _PAD), f32)
    vvp = jnp.concatenate([zc, vv, zc], axis=2)            # (5n, H, W + 4)

    # Horizontal 5-tap sum as a 3-add shift cascade.
    a = vvp[:, :, 0:W + 3] + vvp[:, :, 1:W + 4]            # x[j] + x[j+1]
    b = a[:, :, 0:W + 1] + a[:, :, 2:W + 3]                # x[j .. j+3]
    boxed = b[:, :, 0:W] + vvp[:, :, 4:W + 4]              # x[j .. j+4] (5x5 SUM)

    Sx = boxed[0 * n:1 * n]
    Sy = boxed[1 * n:2 * n]
    Sxx = boxed[2 * n:3 * n]
    Syy = boxed[3 * n:4 * n]
    Sxy = boxed[4 * n:5 * n]

    # SSIM on raw box sums: the 1/25 normalization is folded into the constants
    # (numerator and denominator each pick up 25**4, which cancels).
    K = f32(_WIN * _WIN)                  # 25
    c1 = f32(_C1 * (_WIN ** 4))           # 625 * C1
    c2 = f32(_C2 * (_WIN ** 4))           # 625 * C2
    eK = f32(_EPS * (_WIN ** 4))          # 625 * eps (sigma clamp, same scaling)
    A = Sx * Sy
    Bq = Sx * Sx
    Cq = Sy * Sy
    s1 = jnp.maximum(K * Sxx - Bq, eK)
    s2 = jnp.maximum(K * Syy - Cq, eK)
    s12 = jnp.maximum(K * Sxy - A, eK)
    num = (2.0 * A + c1) * (2.0 * s12 + c2)
    den = (Bq + Cq + c1) * (s1 + s2 + c2)
    ssim_map = num * recip(den)
    if mask_tail:
        # All-zero out-of-range planes would otherwise contribute ssim == 1.
        ssim_map = jnp.where(valid, ssim_map, 0.0)
    s_ssim = jnp.sum(ssim_map)

    # ---------------- lane-dense per-tile partial output ---------------------
    sub = lax.broadcasted_iota(jnp.int32, (8, 128), 0)
    lane = lax.broadcasted_iota(jnp.int32, (8, 128), 1)
    at0 = lane == 0
    slab = jnp.where((sub == 0) & at0, s_mrae, 0.0)
    slab = slab + jnp.where((sub == 1) & at0, s_ssim, 0.0)
    slab = slab + jnp.where((sub == 2) & at0, s_tvh, 0.0)
    slab = slab + jnp.where((sub == 3) & at0, s_tvw, 0.0)
    out_ref[...] = slab


def _per_plane_vmem_bytes(H, W, in_itemsize):
    f32 = 4
    px = H * W
    scratch = 5 * (H + _ROWS_EXTRA) * W * f32
    values = 20 * px * f32                  # vv, boxed, o/t/products/ssim temps
    inputs = 2 * 2 * px * in_itemsize       # double-buffered input blocks
    return scratch + values + inputs


def hybrid_loss(output, target, ssim_weight=0.1, tv_weight=1e-5,
                planes_per_tile=None, vmem_limit_bytes=None,
                approx_recip=False):
    """Pallas TPU implementation of HybridLoss.forward for NCHW inputs."""
    assert output.shape == target.shape and output.ndim == 4
    B, C, H, W = output.shape
    N = B * C
    # No wrapper-side pad / cast: single HBM read of each input per call.
    o = output.reshape(N, H, W)
    t = target.reshape(N, H, W)

    if vmem_limit_bytes is None:
        # Bigger tiles on 128-MiB-VMEM parts (v5e/v6e), smaller on 64-MiB v7x.
        try:
            cap = int(pltpu.get_tpu_info().vmem_capacity_bytes)
        except Exception:
            cap = 64 * 1024 * 1024
        vmem_limit_bytes = min(cap * 3 // 4, 100 * 1024 * 1024)
    vmem_limit_bytes = int(vmem_limit_bytes)

    if planes_per_tile is None:
        per_plane = _per_plane_vmem_bytes(H, W, output.dtype.itemsize)
        planes_per_tile = (vmem_limit_bytes // 2) // max(per_plane, 1)
    planes_per_tile = int(min(max(int(planes_per_tile), 1), N))

    num_tiles = -(-N // planes_per_tile)            # cdiv; tail masked in-kernel
    mask_tail = (N % planes_per_tile) != 0

    kernel = functools.partial(
        _hybrid_loss_kernel, n_total=N, H=H, W=W,
        mask_tail=mask_tail, approx_recip=bool(approx_recip))

    parts = pl.pallas_call(
        kernel,
        grid=(num_tiles,),
        in_specs=[
            pl.BlockSpec((planes_per_tile, H, W), lambda i: (i, 0, 0)),
            pl.BlockSpec((planes_per_tile, H, W), lambda i: (i, 0, 0)),
        ],
        # Per-tile partial sums (no shared accumulator scratch), so the plane
        # axis can be sharded across TensorCores on v7x.
        out_specs=pl.BlockSpec((8, 128), lambda i: (i, 0)),
        out_shape=jax.ShapeDtypeStruct((num_tiles * 8, 128), jnp.float32),
        scratch_shapes=[
            pltpu.VMEM((5 * planes_per_tile, H + _ROWS_EXTRA, W), jnp.float32),
        ],
        compiler_params=pltpu.CompilerParams(
            dimension_semantics=("parallel",),
            vmem_limit_bytes=vmem_limit_bytes),
    )(o, t)

    # Tiny finalization in plain XLA: per-tile partials -> means/clamps/weights.
    p = parts.reshape(num_tiles, 8, 128)[:, :4, 0]        # (num_tiles, 4)
    sums = jnp.sum(p, axis=0)
    n_px = jnp.float32(N * H * W)
    mrae = sums[0] / n_px
    ssim_l = 1.0 - sums[1] / n_px
    # Note: H == 1 or W == 1 gives an empty TV mean (nan), matching PyTorch.
    tv = jnp.maximum(sums[2] / jnp.float32(N * (H - 1) * W) +
                     sums[3] / jnp.float32(N * H * (W - 1)),
                     jnp.float32(_EPS))
    return mrae + jnp.float32(ssim_weight) * ssim_l + jnp.float32(tv_weight) * tv


# ---------------- pure-JAX reference (correctness sanity check) --------------
def _hybrid_loss_ref(output, target, ssim_weight=0.1, tv_weight=1e-5):
    eps = 1e-6
    C1, C2 = 0.01 ** 2, 0.03 ** 2
    o = output.astype(jnp.float32)
    t = target.astype(jnp.float32)

    mrae = jnp.mean(jnp.log(1 + jnp.abs(o - t) / (jnp.abs(t) + eps)))

    def avg_pool(x, k=5):
        s = lax.reduce_window(x, 0.0, lax.add, (1, 1, k, k), (1, 1, 1, 1), "SAME")
        return s / (k * k)

    mu1, mu2 = avg_pool(o), avg_pool(t)
    s1 = jnp.clip(avg_pool(o * o) - mu1 ** 2, eps, None)
    s2 = jnp.clip(avg_pool(t * t) - mu2 ** 2, eps, None)
    s12 = jnp.clip(avg_pool(o * t) - mu1 * mu2, eps, None)
    ssim_map = (2 * mu1 * mu2 + C1) * (2 * s12 + C2) / (
        (mu1 ** 2 + mu2 ** 2 + C1) * (s1 + s2 + C2))
    ssim_l = 1 - jnp.mean(ssim_map)

    loss_h = jnp.mean(jnp.abs(o[:, :, 1:, :] - o[:, :, :-1, :]))
    loss_w = jnp.mean(jnp.abs(o[:, :, :, 1:] - o[:, :, :, :-1]))
    tv = jnp.clip(loss_h + loss_w, eps, None)
    return mrae + ssim_weight * ssim_l + tv_weight * tv


if __name__ == "__main__":
    key = jax.random.PRNGKey(0)
    k1, k2, k3, k4 = jax.random.split(key, 4)

    B, C, H, W = 2, 4, 16, 16
    output = jax.random.normal(k1, (B, C, H, W), dtype=jnp.float32)
    target = jax.random.normal(k2, (B, C, H, W), dtype=jnp.float32)

    ref = jax.block_until_ready(_hybrid_loss_ref(output, target))

    # 1) default tiling (single grid step at this size).
    loss = jax.block_until_ready(hybrid_loss(output, target))
    assert jnp.isfinite(loss), "loss is not finite"
    assert jnp.allclose(loss, ref, rtol=1e-5, atol=1e-5), (loss, ref)

    # 2) multi-step grid with a ragged tail (8 planes, 3 per tile):
    #    exercises cdiv grid + in-kernel tail masking + per-tile partials.
    loss_tiled = jax.block_until_ready(
        hybrid_loss(output, target, planes_per_tile=3))
    assert jnp.allclose(loss_tiled, ref, rtol=1e-5, atol=1e-5), (loss_tiled, ref)

    # 3) non-square, non-128 spatial shape with a ragged tail.
    out2 = jax.random.normal(k3, (1, 3, 24, 40), dtype=jnp.float32)
    tgt2 = jax.random.normal(k4, (1, 3, 24, 40), dtype=jnp.float32)
    ref2 = jax.block_until_ready(_hybrid_loss_ref(out2, tgt2))
    loss2 = jax.block_until_ready(hybrid_loss(out2, tgt2, planes_per_tile=2))
    assert jnp.allclose(loss2, ref2, rtol=1e-5, atol=1e-5), (loss2, ref2)

    # 4) native bf16 ingest (upcast happens inside the kernel).
    o_bf, t_bf = output.astype(jnp.bfloat16), target.astype(jnp.bfloat16)
    ref_bf = jax.block_until_ready(
        _hybrid_loss_ref(o_bf.astype(jnp.float32), t_bf.astype(jnp.float32)))
    loss_bf = jax.block_until_ready(hybrid_loss(o_bf, t_bf))
    assert jnp.allclose(loss_bf, ref_bf, rtol=1e-4, atol=1e-4), (loss_bf, ref_bf)

    # 5) approximate-reciprocal (EUP) path: looser tolerance.
    loss_ap = jax.block_until_ready(hybrid_loss(output, target, approx_recip=True))
    assert jnp.allclose(loss_ap, ref, rtol=3e-2, atol=3e-2), (loss_ap, ref)

    print("KERNEL_OK")
</pallas_src>

<mosaic_0001>
module attributes {stable_mosaic.version = 11 : i64} {
  func.func @_hybrid_loss_kernel(%arg0: i32, %arg1: memref<8x16x16xf32, #tpu.memory_space<vmem>>, %arg2: memref<8x16x16xf32, #tpu.memory_space<vmem>>, %arg3: memref<8x128xf32, #tpu.memory_space<vmem>>, %arg4: memref<40x32x16xf32, #tpu.memory_space<vmem>>) attributes {dimension_semantics = [#tpu.dimension_semantics<parallel>], iteration_bounds = array<i64: 1>, scalar_prefetch = 0 : i64, scratch_operands = 1 : i64, tpu.core_type = #tpu.core_type<tc>, window_params = [{transform_indices = @transform_0, window_bounds = array<i64: 8, 16, 16>}, {transform_indices = @transform_1, window_bounds = array<i64: 8, 16, 16>}, {transform_indices = @transform_2, window_bounds = array<i64: 8, 128>}]} {
    %c0 = arith.constant 0 : index
    %c0_0 = arith.constant 0 : index
    %c0_1 = arith.constant 0 : index
    %0 = vector.load %arg1[%c0, %c0_0, %c0_1] : memref<8x16x16xf32, #tpu.memory_space<vmem>>, vector<8x16x16xf32>
    %c0_2 = arith.constant 0 : index
    %c0_3 = arith.constant 0 : index
    %c0_4 = arith.constant 0 : index
    %1 = vector.load %arg2[%c0_2, %c0_3, %c0_4] : memref<8x16x16xf32, #tpu.memory_space<vmem>>, vector<8x16x16xf32>
    %2 = arith.subf %0, %1 : vector<8x16x16xf32>
    %3 = math.absf %2 : vector<8x16x16xf32>
    %4 = math.absf %1 : vector<8x16x16xf32>
    %cst = arith.constant 9.99999997E-7 : f32
    %5 = vector.broadcast %cst : f32 to vector<8x16x16xf32>
    %6 = arith.addf %4, %5 : vector<8x16x16xf32>
    %cst_5 = arith.constant 1.000000e+00 : f32
    %7 = vector.broadcast %cst_5 : f32 to vector<8x16x16xf32>
    %8 = arith.divf %7, %6 : vector<8x16x16xf32>
    %9 = arith.mulf %3, %8 : vector<8x16x16xf32>
    %cst_6 = arith.constant 1.000000e+00 : f32
    %10 = vector.broadcast %cst_6 : f32 to vector<8x16x16xf32>
    %11 = arith.addf %10, %9 : vector<8x16x16xf32>
    %12 = math.log %11 : vector<8x16x16xf32>
    %13 = vector.shape_cast %12 : vector<8x16x16xf32> to vector<1x8x16x16xf32>
    %cst_7 = arith.constant dense<0.000000e+00> : vector<1xf32>
    %14 = vector.multi_reduction <add>, %13, %cst_7 [1, 2, 3] : vector<1x8x16x16xf32> to vector<1xf32>
    %15 = vector.shape_cast %14 : vector<1xf32> to vector<1x1x1x1xf32>
    %16 = vector.extract %15[0, 0, 0, 0] : f32 from vector<1x1x1x1xf32>
    %17 = vector.extract_strided_slice %0 {offsets = [0, 1, 0], sizes = [8, 15, 16], strides = [1, 1, 1]} : vector<8x16x16xf32> to vector<8x15x16xf32>
    %18 = vector.extract_strided_slice %0 {offsets = [0, 0, 0], sizes = [8, 15, 16], strides = [1, 1, 1]} : vector<8x16x16xf32> to vector<8x15x16xf32>
    %19 = arith.subf %17, %18 : vector<8x15x16xf32>
    %20 = math.absf %19 : vector<8x15x16xf32>
    %21 = vector.shape_cast %20 : vector<8x15x16xf32> to vector<1x8x15x16xf32>
    %cst_8 = arith.constant dense<0.000000e+00> : vector<1xf32>
    %22 = vector.multi_reduction <add>, %21, %cst_8 [1, 2, 3] : vector<1x8x15x16xf32> to vector<1xf32>
    %23 = vector.shape_cast %22 : vector<1xf32> to vector<1x1x1x1xf32>
    %24 = vector.extract %23[0, 0, 0, 0] : f32 from vector<1x1x1x1xf32>
    %25 = vector.extract_strided_slice %0 {offsets = [0, 0, 1], sizes = [8, 16, 15], strides = [1, 1, 1]} : vector<8x16x16xf32> to vector<8x16x15xf32>
    %26 = vector.extract_strided_slice %0 {offsets = [0, 0, 0], sizes = [8, 16, 15], strides = [1, 1, 1]} : vector<8x16x16xf32> to vector<8x16x15xf32>
    %27 = arith.subf %25, %26 : vector<8x16x15xf32>
    %28 = math.absf %27 : vector<8x16x15xf32>
    %29 = vector.shape_cast %28 : vector<8x16x15xf32> to vector<1x8x16x15xf32>
    %cst_9 = arith.constant dense<0.000000e+00> : vector<1xf32>
    %30 = vector.multi_reduction <add>, %29, %cst_9 [1, 2, 3] : vector<1x8x16x15xf32> to vector<1xf32>
    %31 = vector.shape_cast %30 : vector<1xf32> to vector<1x1x1x1xf32>
    %32 = vector.extract %31[0, 0, 0, 0] : f32 from vector<1x1x1x1xf32>
    %cst_10 = arith.constant 0.000000e+00 : f32
    %33 = vector.broadcast %cst_10 : f32 to vector<40x2x16xf32>
    %c0_11 = arith.constant 0 : index
    %c6 = arith.constant 6 : index
    %c0_12 = arith.constant 0 : index
    %34 = vector.load %arg4[%c0_11, %c6, %c0_12] : memref<40x32x16xf32, #tpu.memory_space<vmem>>, vector<40x2x16xf32>
    tpu.vector_store %arg4[%c0_11, %c6, %c0_12], %33 {strides = array<i32>} : memref<40x32x16xf32, #tpu.memory_space<vmem>>, vector<40x2x16xf32>,
    %c0_13 = arith.constant 0 : index
    %c24 = arith.constant 24 : index
    %c0_14 = arith.constant 0 : index
    %35 = vector.load %arg4[%c0_13, %c24, %c0_14] : memref<40x32x16xf32, #tpu.memory_space<vmem>>, vector<40x2x16xf32>
    tpu.vector_store %arg4[%c0_13, %c24, %c0_14], %33 {strides = array<i32>} : memref<40x32x16xf32, #tpu.memory_space<vmem>>, vector<40x2x16xf32>,
    %c0_15 = arith.constant 0 : index
    %c8 = arith.constant 8 : index
    %c0_16 = arith.constant 0 : index
    %36 = vector.load %arg4[%c0_15, %c8, %c0_16] : memref<40x32x16xf32, #tpu.memory_space<vmem>>, vector<8x16x16xf32>
    tpu.vector_store %arg4[%c0_15, %c8, %c0_16], %0 {strides = array<i32>} : memref<40x32x16xf32, #tpu.memory_space<vmem>>, vector<8x16x16xf32>,
    %c8_17 = arith.constant 8 : index
    %c8_18 = arith.constant 8 : index
    %c0_19 = arith.constant 0 : index
    %37 = vector.load %arg4[%c8_17, %c8_18, %c0_19] : memref<40x32x16xf32, #tpu.memory_space<vmem>>, vector<8x16x16xf32>
    tpu.vector_store %arg4[%c8_17, %c8_18, %c0_19], %1 {strides = array<i32>} : memref<40x32x16xf32, #tpu.memory_space<vmem>>, vector<8x16x16xf32>,
    %38 = arith.mulf %0, %0 : vector<8x16x16xf32>
    %c16 = arith.constant 16 : index
    %c8_20 = arith.constant 8 : index
    %c0_21 = arith.constant 0 : index
    %39 = vector.load %arg4[%c16, %c8_20, %c0_21] : memref<40x32x16xf32, #tpu.memory_space<vmem>>, vector<8x16x16xf32>
    tpu.vector_store %arg4[%c16, %c8_20, %c0_21], %38 {strides = array<i32>} : memref<40x32x16xf32, #tpu.memory_space<vmem>>, vector<8x16x16xf32>,
    %40 = arith.mulf %1, %1 : vector<8x16x16xf32>
    %c24_22 = arith.constant 24 : index
    %c8_23 = arith.constant 8 : index
    %c0_24 = arith.constant 0 : index
    %41 = vector.load %arg4[%c24_22, %c8_23, %c0_24] : memref<40x32x16xf32, #tpu.memory_space<vmem>>, vector<8x16x16xf32>
    tpu.vector_store %arg4[%c24_22, %c8_23, %c0_24], %40 {strides = array<i32>} : memref<40x32x16xf32, #tpu.memory_space<vmem>>, vector<8x16x16xf32>,
    %42 = arith.mulf %0, %1 : vector<8x16x16xf32>
    %c32 = arith.constant 32 : index
    %c8_25 = arith.constant 8 : index
    %c0_26 = arith.constant 0 : index
    %43 = vector.load %arg4[%c32, %c8_25, %c0_26] : memref<40x32x16xf32, #tpu.memory_space<vmem>>, vector<8x16x16xf32>
    tpu.vector_store %arg4[%c32, %c8_25, %c0_26], %42 {strides = array<i32>} : memref<40x32x16xf32, #tpu.memory_space<vmem>>, vector<8x16x16xf32>,
    %c0_27 = arith.constant 0 : index
    %c6_28 = arith.constant 6 : index
    %c0_29 = arith.constant 0 : index
    %44 = vector.load %arg4[%c0_27, %c6_28, %c0_29] : memref<40x32x16xf32, #tpu.memory_space<vmem>>, vector<40x16x16xf32>
    %c0_30 = arith.constant 0 : index
    %c7 = arith.constant 7 : index
    %c0_31 = arith.constant 0 : index
    %45 = vector.load %arg4[%c0_30, %c7, %c0_31] : memref<40x32x16xf32, #tpu.memory_space<vmem>>, vector<40x16x16xf32>
    %46 = arith.addf %44, %45 : vector<40x16x16xf32>
    %c0_32 = arith.constant 0 : index
    %c8_33 = arith.constant 8 : index
    %c0_34 = arith.constant 0 : index
    %47 = vector.load %arg4[%c0_32, %c8_33, %c0_34] : memref<40x32x16xf32, #tpu.memory_space<vmem>>, vector<40x16x16xf32>
    %48 = arith.addf %46, %47 : vector<40x16x16xf32>
    %c0_35 = arith.constant 0 : index
    %c9 = arith.constant 9 : index
    %c0_36 = arith.constant 0 : index
    %49 = vector.load %arg4[%c0_35, %c9, %c0_36] : memref<40x32x16xf32, #tpu.memory_space<vmem>>, vector<40x16x16xf32>
    %50 = arith.addf %48, %49 : vector<40x16x16xf32>
    %c0_37 = arith.constant 0 : index
    %c10 = arith.constant 10 : index
    %c0_38 = arith.constant 0 : index
    %51 = vector.load %arg4[%c0_37, %c10, %c0_38] : memref<40x32x16xf32, #tpu.memory_space<vmem>>, vector<40x16x16xf32>
    %52 = arith.addf %50, %51 : vector<40x16x16xf32>
    %cst_39 = arith.constant 0.000000e+00 : f32
    %53 = vector.broadcast %cst_39 : f32 to vector<40x16x2xf32>
    %54 = tpu.concatenate %53, %52, %53 in 2 : vector<40x16x2xf32>, vector<40x16x16xf32>, vector<40x16x2xf32> -> vector<40x16x20xf32>
    %55 = vector.extract_strided_slice %54 {offsets = [0, 0, 0], sizes = [40, 16, 19], strides = [1, 1, 1]} : vector<40x16x20xf32> to vector<40x16x19xf32>
    %56 = vector.extract_strided_slice %54 {offsets = [0, 0, 1], sizes = [40, 16, 19], strides = [1, 1, 1]} : vector<40x16x20xf32> to vector<40x16x19xf32>
    %57 = arith.addf %55, %56 : vector<40x16x19xf32>
    %58 = vector.extract_strided_slice %57 {offsets = [0, 0, 0], sizes = [40, 16, 17], strides = [1, 1, 1]} : vector<40x16x19xf32> to vector<40x16x17xf32>
    %59 = vector.extract_strided_slice %57 {offsets = [0, 0, 2], sizes = [40, 16, 17], strides = [1, 1, 1]} : vector<40x16x19xf32> to vector<40x16x17xf32>
    %60 = arith.addf %58, %59 : vector<40x16x17xf32>
    %61 = vector.extract_strided_slice %60 {offsets = [0, 0, 0], sizes = [40, 16, 16], strides = [1, 1, 1]} : vector<40x16x17xf32> to vector<40x16x16xf32>
    %62 = vector.extract_strided_slice %54 {offsets = [0, 0, 4], sizes = [40, 16, 16], strides = [1, 1, 1]} : vector<40x16x20xf32> to vector<40x16x16xf32>
    %63 = arith.addf %61, %62 : vector<40x16x16xf32>
    %64 = vector.extract_strided_slice %63 {offsets = [0, 0, 0], sizes = [8, 16, 16], strides = [1, 1, 1]} : vector<40x16x16xf32> to vector<8x16x16xf32>
    %65 = vector.extract_strided_slice %63 {offsets = [8, 0, 0], sizes = [8, 16, 16], strides = [1, 1, 1]} : vector<40x16x16xf32> to vector<8x16x16xf32>
    %66 = vector.extract_strided_slice %63 {offsets = [16, 0, 0], sizes = [8, 16, 16], strides = [1, 1, 1]} : vector<40x16x16xf32> to vector<8x16x16xf32>
    %67 = vector.extract_strided_slice %63 {offsets = [24, 0, 0], sizes = [8, 16, 16], strides = [1, 1, 1]} : vector<40x16x16xf32> to vector<8x16x16xf32>
    %68 = vector.extract_strided_slice %63 {offsets = [32, 0, 0], sizes = [8, 16, 16], strides = [1, 1, 1]} : vector<40x16x16xf32> to vector<8x16x16xf32>
    %69 = arith.mulf %64, %65 : vector<8x16x16xf32>
    %70 = arith.mulf %64, %64 : vector<8x16x16xf32>
    %71 = arith.mulf %65, %65 : vector<8x16x16xf32>
    %cst_40 = arith.constant 2.500000e+01 : f32
    %72 = vector.broadcast %cst_40 : f32 to vector<8x16x16xf32>
    %73 = arith.mulf %72, %66 : vector<8x16x16xf32>
    %74 = arith.subf %73, %70 : vector<8x16x16xf32>
    %cst_41 = arith.constant 6.250000e-04 : f32
    %75 = vector.broadcast %cst_41 : f32 to vector<8x16x16xf32>
    %76 = arith.maximumf %74, %75 : vector<8x16x16xf32>
    %cst_42 = arith.constant 2.500000e+01 : f32
    %77 = vector.broadcast %cst_42 : f32 to vector<8x16x16xf32>
    %78 = arith.mulf %77, %67 : vector<8x16x16xf32>
    %79 = arith.subf %78, %71 : vector<8x16x16xf32>
    %cst_43 = arith.constant 6.250000e-04 : f32
    %80 = vector.broadcast %cst_43 : f32 to vector<8x16x16xf32>
    %81 = arith.maximumf %79, %80 : vector<8x16x16xf32>
    %cst_44 = arith.constant 2.500000e+01 : f32
    %82 = vector.broadcast %cst_44 : f32 to vector<8x16x16xf32>
    %83 = arith.mulf %82, %68 : vector<8x16x16xf32>
    %84 = arith.subf %83, %69 : vector<8x16x16xf32>
    %cst_45 = arith.constant 6.250000e-04 : f32
    %85 = vector.broadcast %cst_45 : f32 to vector<8x16x16xf32>
    %86 = arith.maximumf %84, %85 : vector<8x16x16xf32>
    %cst_46 = arith.constant 2.000000e+00 : f32
    %87 = vector.broadcast %cst_46 : f32 to vector<8x16x16xf32>
    %88 = arith.mulf %87, %69 : vector<8x16x16xf32>
    %cst_47 = arith.constant 6.250000e-02 : f32
    %89 = vector.broadcast %cst_47 : f32 to vector<8x16x16xf32>
    %90 = arith.addf %88, %89 : vector<8x16x16xf32>
    %cst_48 = arith.constant 2.000000e+00 : f32
    %91 = vector.broadcast %cst_48 : f32 to vector<8x16x16xf32>
    %92 = arith.mulf %91, %86 : vector<8x16x16xf32>
    %cst_49 = arith.constant 5.625000e-01 : f32
    %93 = vector.broadcast %cst_49 : f32 to vector<8x16x16xf32>
    %94 = arith.addf %92, %93 : vector<8x16x16xf32>
    %95 = arith.mulf %90, %94 : vector<8x16x16xf32>
    %96 = arith.addf %70, %71 : vector<8x16x16xf32>
    %cst_50 = arith.constant 6.250000e-02 : f32
    %97 = vector.broadcast %cst_50 : f32 to vector<8x16x16xf32>
    %98 = arith.addf %96, %97 : vector<8x16x16xf32>
    %99 = arith.addf %76, %81 : vector<8x16x16xf32>
    %cst_51 = arith.constant 5.625000e-01 : f32
    %100 = vector.broadcast %cst_51 : f32 to vector<8x16x16xf32>
    %101 = arith.addf %99, %100 : vector<8x16x16xf32>
    %102 = arith.mulf %98, %101 : vector<8x16x16xf32>
    %cst_52 = arith.constant 1.000000e+00 : f32
    %103 = vector.broadcast %cst_52 : f32 to vector<8x16x16xf32>
    %104 = arith.divf %103, %102 : vector<8x16x16xf32>
    %105 = arith.mulf %95, %104 : vector<8x16x16xf32>
    %106 = vector.shape_cast %105 : vector<8x16x16xf32> to vector<1x8x16x16xf32>
    %cst_53 = arith.constant dense<0.000000e+00> : vector<1xf32>
    %107 = vector.multi_reduction <add>, %106, %cst_53 [1, 2, 3] : vector<1x8x16x16xf32> to vector<1xf32>
    %108 = vector.shape_cast %107 : vector<1xf32> to vector<1x1x1x1xf32>
    %109 = vector.extract %108[0, 0, 0, 0] : f32 from vector<1x1x1x1xf32>
    %110 = tpu.iota {dimensions = array<i32: 0>} : vector<8x128xi32>
    %111 = tpu.iota {dimensions = array<i32: 1>} : vector<8x128xi32>
    %c0_i32 = arith.constant 0 : i32
    %112 = vector.broadcast %c0_i32 : i32 to vector<8x128xi32>
    %113 = arith.cmpi eq, %111, %112 : vector<8x128xi32>
    %c0_i32_54 = arith.constant 0 : i32
    %114 = vector.broadcast %c0_i32_54 : i32 to vector<8x128xi32>
    %115 = arith.cmpi eq, %110, %114 : vector<8x128xi32>
    %116 = arith.andi %115, %113 : vector<8x128xi1>
    %cst_55 = arith.constant 0.000000e+00 : f32
    %117 = vector.broadcast %16 : f32 to vector<8x128xf32>
    %118 = vector.broadcast %cst_55 : f32 to vector<8x128xf32>
    %119 = arith.select %116, %117, %118 : vector<8x128xi1>, vector<8x128xf32>
    %c1_i32 = arith.constant 1 : i32
    %120 = vector.broadcast %c1_i32 : i32 to vector<8x128xi32>
    %121 = arith.cmpi eq, %110, %120 : vector<8x128xi32>
    %122 = arith.andi %121, %113 : vector<8x128xi1>
    %cst_56 = arith.constant 0.000000e+00 : f32
    %123 = vector.broadcast %109 : f32 to vector<8x128xf32>
    %124 = vector.broadcast %cst_56 : f32 to vector<8x128xf32>
    %125 = arith.select %122, %123, %124 : vector<8x128xi1>, vector<8x128xf32>
    %126 = arith.addf %119, %125 : vector<8x128xf32>
    %c2_i32 = arith.constant 2 : i32
    %127 = vector.broadcast %c2_i32 : i32 to vector<8x128xi32>
    %128 = arith.cmpi eq, %110, %127 : vector<8x128xi32>
    %129 = arith.andi %128, %113 : vector<8x128xi1>
    %cst_57 = arith.constant 0.000000e+00 : f32
    %130 = vector.broadcast %24 : f32 to vector<8x128xf32>
    %131 = vector.broadcast %cst_57 : f32 to vector<8x128xf32>
    %132 = arith.select %129, %130, %131 : vector<8x128xi1>, vector<8x128xf32>
    %133 = arith.addf %126, %132 : vector<8x128xf32>
    %c3_i32 = arith.constant 3 : i32
    %134 = vector.broadcast %c3_i32 : i32 to vector<8x128xi32>
    %135 = arith.cmpi eq, %110, %134 : vector<8x128xi32>
    %136 = arith.andi %135, %113 : vector<8x128xi1>
    %cst_58 = arith.constant 0.000000e+00 : f32
    %137 = vector.broadcast %32 : f32 to vector<8x128xf32>
    %138 = vector.broadcast %cst_58 : f32 to vector<8x128xf32>
    %139 = arith.select %136, %137, %138 : vector<8x128xi1>, vector<8x128xf32>
    %140 = arith.addf %133, %139 : vector<8x128xf32>
    %c0_59 = arith.constant 0 : index
    %c0_60 = arith.constant 0 : index
    %141 = vector.load %arg3[%c0_59, %c0_60] : memref<8x128xf32, #tpu.memory_space<vmem>>, vector<8x128xf32>
    tpu.vector_store %arg3[%c0_59, %c0_60], %140 {strides = array<i32>} : memref<8x128xf32, #tpu.memory_space<vmem>>, vector<8x128xf32>,
    return
  }
  func.func @transform_0(%arg0: i32) -> (i32, i32, i32) {
    %c0_i32 = arith.constant 0 : i32
    %c0_i32_0 = arith.constant 0 : i32
    %c0_i32_1 = arith.constant 0 : i32
    return %arg0, %c0_i32, %c0_i32_0 : i32, i32, i32
  }
  func.func @transform_1(%arg0: i32) -> (i32, i32, i32) {
    %c0_i32 = arith.constant 0 : i32
    %c0_i32_0 = arith.constant 0 : i32
    %c0_i32_1 = arith.constant 0 : i32
    return %arg0, %c0_i32, %c0_i32_0 : i32, i32, i32
  }
  func.func @transform_2(%arg0: i32) -> (i32, i32) {
    %c0_i32 = arith.constant 0 : i32
    %c0_i32_0 = arith.constant 0 : i32
    return %arg0, %c0_i32 : i32, i32
  }
}

</mosaic_0001>

<llo_original>
// kernel: tpu_custom_call.1
$region0: #{tpu_custom_call.1}
  #allocation0 [shape = 'u32[]', space=smem, size = 0x4, offset = 0x4, fixed_abs, tag = 'smem constant byte address 0x4 - core index']
  #allocation1 [shape = 'u32[72,128]{1,0:T(1,128)}', space=vmem, size = 0x9000, scoped, tag = 'internal scratch']
  #allocation2 [shape = 'f32[40,32,16]{2,1,0:T(8,128)}', space=vmem, size = 0xa0000, scoped, tag = 'scratch operand']
  %s0 = inlined_call_operand.hbm [shape: f32[8,16,16], index: 0, kind: input, shape index: {}]
  %s1 = inlined_call_operand.hbm [shape: f32[8,16,16], index: 1, kind: input, shape index: {}]
  %s2 = inlined_call_operand.hbm [shape: f32[8,128], index: 2, kind: output, shape index: {}]
  %s3 = sld [smem:[#allocation0]]
  $region26: #{tpu_custom_call.1} parent=0
    _
  %s5 = ssub.s32 1, %s3
  %s6 = scalar_select 0, %s5, %s3
  $region1: #{tpu_custom_call.1} parent=0
    #allocation3 [shape = 'u8[65536]{0}', space=vmem, size = 0x10000, scoped, tag = 'input window, operand 0, single buffered']
    #allocation4 [shape = 's32[1]{0}', space=sflag, size = 0x4, scoped, tag = 'scoped memory for tpu_custom_call.1']
    #allocation5 [shape = 's32[1]{0}', space=sflag, size = 0x4, scoped, tag = 'scoped memory for tpu_custom_call.1']
    #allocation6 [shape = 'u8[65536]{0}', space=vmem, size = 0x10000, scoped, tag = 'input window, operand 1, single buffered']
    #allocation7 [shape = 's32[1]{0}', space=sflag, size = 0x4, scoped, tag = 'scoped memory for tpu_custom_call.1']
    #allocation8 [shape = 'u8[4096]{0}', space=vmem, size = 0x1000, scoped, tag = 'output window, operand 0, single buffered']
    %7 = vsyncpa [#allocation4], 0
    %8 = vsyncpa [#allocation7], 0
    %9 = vsyncpa [#allocation5], 0
    // Predicated region
    $region2: #{tpu_custom_call.1} parent=1 // pred_check
      _
    $region3: #{tpu_custom_call.1} parent=1 // pred_check_branch
      %11 = sbr.rel (0) target = $region5
    $region4: #{tpu_custom_call.1} parent=1 // pred_region
      %13 = vsyncadd [#allocation4], 0
      %s14 = sshll.u32 %s0, 4
      %s15 = int_to_ptr.hbm [resolvable:$true] %s14
      %s16 = sshll.u32 [#allocation3], 4
      %s17 = int_to_ptr.vmem [resolvable:$true] %s16
      %22 = dma.hbm_to_vmem [thread:$0]  %s15, 2048, %s17, [#allocation4], 128, 128, 8
    $region5: #{tpu_custom_call.1} parent=1 // pred_fallthru
      _
    // Predicated region
    $region6: #{tpu_custom_call.1} parent=1 // pred_check
      _
    $region7: #{tpu_custom_call.1} parent=1 // pred_check_branch
      %24 = sbr.rel (0) target = $region9
    $region8: #{tpu_custom_call.1} parent=1 // pred_region
      %26 = vsyncadd [#allocation7], 0
      %s27 = sshll.u32 %s1, 4
      %s28 = int_to_ptr.hbm [resolvable:$true] %s27
      %s29 = sshll.u32 [#allocation6], 4
      %s30 = int_to_ptr.vmem [resolvable:$true] %s29
      %35 = dma.hbm_to_vmem [thread:$0]  %s28, 2048, %s30, [#allocation7], 128, 128, 8
    $region9: #{tpu_custom_call.1} parent=1 // pred_fallthru
      _
    // Predicated region
    $region10: #{tpu_custom_call.1} parent=1 // pred_check
      _
    $region11: #{tpu_custom_call.1} parent=1 // pred_check_branch
      %37 = sbr.rel (0) target = $region13
    $region12: #{tpu_custom_call.1} parent=1 // pred_region
      %39 = dma.done [#allocation4], 2048
    $region13: #{tpu_custom_call.1} parent=1 // pred_fallthru
      _
    // Predicated region
    $region14: #{tpu_custom_call.1} parent=1 // pred_check
      _
    $region15: #{tpu_custom_call.1} parent=1 // pred_check_branch
      %41 = sbr.rel (0) target = $region17
    $region16: #{tpu_custom_call.1} parent=1 // pred_region
      %43 = dma.done [#allocation7], 2048
    $region17: #{tpu_custom_call.1} parent=1 // pred_fallthru
      _
    %v44 = vld [vmem:[#allocation3] sm:$0xff]
    %v45 = vld [vmem:[#allocation3 + $0x8] sm:$0xff]
    %v46 = vld [vmem:[#allocation3 + $0x10] sm:$0xff]
    %v47 = vld [vmem:[#allocation3 + $0x18] sm:$0xff]
    %v48 = vld [vmem:[#allocation3 + $0x20] sm:$0xff]
    %v49 = vld [vmem:[#allocation3 + $0x28] sm:$0xff]
    %v50 = vld [vmem:[#allocation3 + $0x30] sm:$0xff]
    %v51 = vld [vmem:[#allocation3 + $0x38] sm:$0xff]
    %v52 = vld [vmem:[#allocation3 + $0x40] sm:$0xff]
    %v53 = vld [vmem:[#allocation3 + $0x48] sm:$0xff]
    %v54 = vld [vmem:[#allocation3 + $0x50] sm:$0xff]
    %v55 = vld [vmem:[#allocation3 + $0x58] sm:$0xff]
    %v56 = vld [vmem:[#allocation3 + $0x60] sm:$0xff]
    %v57 = vld [vmem:[#allocation3 + $0x68] sm:$0xff]
    %v58 = vld [vmem:[#allocation3 + $0x70] sm:$0xff]
    %v59 = vld [vmem:[#allocation3 + $0x78] sm:$0xff]
    %v60 = vld [vmem:[#allocation6] sm:$0xff]
    %v61 = vld [vmem:[#allocation6 + $0x8] sm:$0xff]
    %v62 = vld [vmem:[#allocation6 + $0x10] sm:$0xff]
    %v63 = vld [vmem:[#allocation6 + $0x18] sm:$0xff]
    %v64 = vld [vmem:[#allocation6 + $0x20] sm:$0xff]
    %v65 = vld [vmem:[#allocation6 + $0x28] sm:$0xff]
    %v66 = vld [vmem:[#allocation6 + $0x30] sm:$0xff]
    %v67 = vld [vmem:[#allocation6 + $0x38] sm:$0xff]
    %v68 = vld [vmem:[#allocation6 + $0x40] sm:$0xff]
    %v69 = vld [vmem:[#allocation6 + $0x48] sm:$0xff]
    %v70 = vld [vmem:[#allocation6 + $0x50] sm:$0xff]
    %v71 = vld [vmem:[#allocation6 + $0x58] sm:$0xff]
    %v72 = vld [vmem:[#allocation6 + $0x60] sm:$0xff]
    %v73 = vld [vmem:[#allocation6 + $0x68] sm:$0xff]
    %v74 = vld [vmem:[#allocation6 + $0x70] sm:$0xff]
    %v75 = vld [vmem:[#allocation6 + $0x78] sm:$0xff]
    %v76 = vsub.f32 %v44, %v60
    %v77 = vsub.f32 %v45, %v61
    %v78 = vsub.f32 %v46, %v62
    %v79 = vsub.f32 %v47, %v63
    %v80 = vsub.f32 %v48, %v64
    %v81 = vsub.f32 %v49, %v65
    %v82 = vsub.f32 %v50, %v66
    %v83 = vsub.f32 %v51, %v67
    %v84 = vsub.f32 %v52, %v68
    %v85 = vsub.f32 %v53, %v69
    %v86 = vsub.f32 %v54, %v70
    %v87 = vsub.f32 %v55, %v71
    %v88 = vsub.f32 %v56, %v72
    %v89 = vsub.f32 %v57, %v73
    %v90 = vsub.f32 %v58, %v74
    %v91 = vsub.f32 %v59, %v75
    %v92 = vand.u32 2147483647, %v76
    %v93 = vand.u32 2147483647, %v77
    %v94 = vand.u32 2147483647, %v78
    %v95 = vand.u32 2147483647, %v79
    %v96 = vand.u32 2147483647, %v80
    %v97 = vand.u32 2147483647, %v81
    %v98 = vand.u32 2147483647, %v82
    %v99 = vand.u32 2147483647, %v83
    %v100 = vand.u32 2147483647, %v84
    %v101 = vand.u32 2147483647, %v85
    %v102 = vand.u32 2147483647, %v86
    %v103 = vand.u32 2147483647, %v87
    %v104 = vand.u32 2147483647, %v88
    %v105 = vand.u32 2147483647, %v89
    %v106 = vand.u32 2147483647, %v90
    %v107 = vand.u32 2147483647, %v91
    %v108 = vand.u32 2147483647, %v60
    %v109 = vand.u32 2147483647, %v61
    %v110 = vand.u32 2147483647, %v62
    %v111 = vand.u32 2147483647, %v63
    %v112 = vand.u32 2147483647, %v64
    %v113 = vand.u32 2147483647, %v65
    %v114 = vand.u32 2147483647, %v66
    %v115 = vand.u32 2147483647, %v67
    %v116 = vand.u32 2147483647, %v68
    %v117 = vand.u32 2147483647, %v69
    %v118 = vand.u32 2147483647, %v70
    %v119 = vand.u32 2147483647, %v71
    %v120 = vand.u32 2147483647, %v72
    %v121 = vand.u32 2147483647, %v73
    %v122 = vand.u32 2147483647, %v74
    %v123 = vand.u32 2147483647, %v75
    %v124 = vadd.f32 %v108, 1e-06
    %v125 = vadd.f32 %v109, 1e-06
    %v126 = vadd.f32 %v110, 1e-06
    %v127 = vadd.f32 %v111, 1e-06
    %v128 = vadd.f32 %v112, 1e-06
    %v129 = vadd.f32 %v113, 1e-06
    %v130 = vadd.f32 %v114, 1e-06
    %v131 = vadd.f32 %v115, 1e-06
    %v132 = vadd.f32 %v116, 1e-06
    %v133 = vadd.f32 %v117, 1e-06
    %v134 = vadd.f32 %v118, 1e-06
    %v135 = vadd.f32 %v119, 1e-06
    %v136 = vadd.f32 %v120, 1e-06
    %v137 = vadd.f32 %v121, 1e-06
    %v138 = vadd.f32 %v122, 1e-06
    %v139 = vadd.f32 %v123, 1e-06
    %v140 = vrcp.pop %v124
    %v141 = vmul.f32 %v124, %v140
    %v142 = vsub.f32 1.0, %v141
    %v143 = vmul.f32 %v140, %v142
    %v144 = vadd.f32 %v140, %v143
    %vm145 = vweird.f32 %v124
    %vm146 = vweird.f32 %v140
    %vm147 = vmor %vm145, %vm146
    %v148 = vsel %vm147, %v140, %v144
    %v149 = vand.u32 2147483647, %v124
    %vm150 = vcmp.eq.f32.partialorder %v149, 8.507059e+37
    %v151 = vand.u32 %v124, 2147483648
    %v152 = vor.u32 1.1754944e-38, %v151
    %v153 = vsel %vm150, %v152, %v148
    %v154 = vmul.f32 1.0, %v153
    %v155 = vrcp.pop %v125
    %v156 = vmul.f32 %v125, %v155
    %v157 = vsub.f32 1.0, %v156
    %v158 = vmul.f32 %v155, %v157
    %v159 = vadd.f32 %v155, %v158
    %vm160 = vweird.f32 %v125
    %vm161 = vweird.f32 %v155
    %vm162 = vmor %vm160, %vm161
    %v163 = vsel %vm162, %v155, %v159
    %v164 = vand.u32 2147483647, %v125
    %vm165 = vcmp.eq.f32.partialorder %v164, 8.507059e+37
    %v166 = vand.u32 %v125, 2147483648
    %v167 = vor.u32 1.1754944e-38, %v166
    %v168 = vsel %vm165, %v167, %v163
    %v169 = vmul.f32 1.0, %v168
    %v170 = vrcp.pop %v126
    %v171 = vmul.f32 %v126, %v170
    %v172 = vsub.f32 1.0, %v171
    %v173 = vmul.f32 %v170, %v172
    %v174 = vadd.f32 %v170, %v173
    %vm175 = vweird.f32 %v126
    %vm176 = vweird.f32 %v170
    %vm177 = vmor %vm175, %vm176
    %v178 = vsel %vm177, %v170, %v174
    %v179 = vand.u32 2147483647, %v126
    %vm180 = vcmp.eq.f32.partialorder %v179, 8.507059e+37
    %v181 = vand.u32 %v126, 2147483648
    %v182 = vor.u32 1.1754944e-38, %v181
    %v183 = vsel %vm180, %v182, %v178
    %v184 = vmul.f32 1.0, %v183
    %v185 = vrcp.pop %v127
    %v186 = vmul.f32 %v127, %v185
    %v187 = vsub.f32 1.0, %v186
    %v188 = vmul.f32 %v185, %v187
    %v189 = vadd.f32 %v185, %v188
    %vm190 = vweird.f32 %v127
    %vm191 = vweird.f32 %v185
    %vm192 = vmor %vm190, %vm191
    %v193 = vsel %vm192, %v185, %v189
    %v194 = vand.u32 2147483647, %v127
    %vm195 = vcmp.eq.f32.partialorder %v194, 8.507059e+37
    %v196 = vand.u32 %v127, 2147483648
    %v197 = vor.u32 1.1754944e-38, %v196
    %v198 = vsel %vm195, %v197, %v193
    %v199 = vmul.f32 1.0, %v198
    %v200 = vrcp.pop %v128
    %v201 = vmul.f32 %v128, %v200
    %v202 = vsub.f32 1.0, %v201
    %v203 = vmul.f32 %v200, %v202
    %v204 = vadd.f32 %v200, %v203
    %vm205 = vweird.f32 %v128
    %vm206 = vweird.f32 %v200
    %vm207 = vmor %vm205, %vm206
    %v208 = vsel %vm207, %v200, %v204
    %v209 = vand.u32 2147483647, %v128
    %vm210 = vcmp.eq.f32.partialorder %v209, 8.507059e+37
    %v211 = vand.u32 %v128, 2147483648
    %v212 = vor.u32 1.1754944e-38, %v211
    %v213 = vsel %vm210, %v212, %v208
    %v214 = vmul.f32 1.0, %v213
    %v215 = vrcp.pop %v129
    %v216 = vmul.f32 %v129, %v215
    %v217 = vsub.f32 1.0, %v216
    %v218 = vmul.f32 %v215, %v217
    %v219 = vadd.f32 %v215, %v218
    %vm220 = vweird.f32 %v129
    %vm221 = vweird.f32 %v215
    %vm222 = vmor %vm220, %vm221
    %v223 = vsel %vm222, %v215, %v219
    %v224 = vand.u32 2147483647, %v129
    %vm225 = vcmp.eq.f32.partialorder %v224, 8.507059e+37
    %v226 = vand.u32 %v129, 2147483648
    %v227 = vor.u32 1.1754944e-38, %v226
    %v228 = vsel %vm225, %v227, %v223
    %v229 = vmul.f32 1.0, %v228
    %v230 = vrcp.pop %v130
    %v231 = vmul.f32 %v130, %v230
    %v232 = vsub.f32 1.0, %v231
    %v233 = vmul.f32 %v230, %v232
    %v234 = vadd.f32 %v230, %v233
    %vm235 = vweird.f32 %v130
    %vm236 = vweird.f32 %v230
    %vm237 = vmor %vm235, %vm236
    %v238 = vsel %vm237, %v230, %v234
    %v239 = vand.u32 2147483647, %v130
    %vm240 = vcmp.eq.f32.partialorder %v239, 8.507059e+37
    %v241 = vand.u32 %v130, 2147483648
    %v242 = vor.u32 1.1754944e-38, %v241
    %v243 = vsel %vm240, %v242, %v238
    %v244 = vmul.f32 1.0, %v243
    %v245 = vrcp.pop %v131
    %v246 = vmul.f32 %v131, %v245
    %v247 = vsub.f32 1.0, %v246
    %v248 = vmul.f32 %v245, %v247
    %v249 = vadd.f32 %v245, %v248
    %vm250 = vweird.f32 %v131
    %vm251 = vweird.f32 %v245
    %vm252 = vmor %vm250, %vm251
    %v253 = vsel %vm252, %v245, %v249
    %v254 = vand.u32 2147483647, %v131
    %vm255 = vcmp.eq.f32.partialorder %v254, 8.507059e+37
    %v256 = vand.u32 %v131, 2147483648
    %v257 = vor.u32 1.1754944e-38, %v256
    %v258 = vsel %vm255, %v257, %v253
    %v259 = vmul.f32 1.0, %v258
    %v260 = vrcp.pop %v132
    %v261 = vmul.f32 %v132, %v260
    %v262 = vsub.f32 1.0, %v261
    %v263 = vmul.f32 %v260, %v262
    %v264 = vadd.f32 %v260, %v263
    %vm265 = vweird.f32 %v132
    %vm266 = vweird.f32 %v260
    %vm267 = vmor %vm265, %vm266
    %v268 = vsel %vm267, %v260, %v264
    %v269 = vand.u32 2147483647, %v132
    %vm270 = vcmp.eq.f32.partialorder %v269, 8.507059e+37
    %v271 = vand.u32 %v132, 2147483648
    %v272 = vor.u32 1.1754944e-38, %v271
    %v273 = vsel %vm270, %v272, %v268
    %v274 = vmul.f32 1.0, %v273
    %v275 = vrcp.pop %v133
    %v276 = vmul.f32 %v133, %v275
    %v277 = vsub.f32 1.0, %v276
    %v278 = vmul.f32 %v275, %v277
    %v279 = vadd.f32 %v275, %v278
    %vm280 = vweird.f32 %v133
    %vm281 = vweird.f32 %v275
    %vm282 = vmor %vm280, %vm281
    %v283 = vsel %vm282, %v275, %v279
    %v284 = vand.u32 2147483647, %v133
    %vm285 = vcmp.eq.f32.partialorder %v284, 8.507059e+37
    %v286 = vand.u32 %v133, 2147483648
    %v287 = vor.u32 1.1754944e-38, %v286
    %v288 = vsel %vm285, %v287, %v283
    %v289 = vmul.f32 1.0, %v288
    %v290 = vrcp.pop %v134
    %v291 = vmul.f32 %v134, %v290
    %v292 = vsub.f32 1.0, %v291
    %v293 = vmul.f32 %v290, %v292
    %v294 = vadd.f32 %v290, %v293
    %vm295 = vweird.f32 %v134
    %vm296 = vweird.f32 %v290
    %vm297 = vmor %vm295, %vm296
    %v298 = vsel %vm297, %v290, %v294
    %v299 = vand.u32 2147483647, %v134
    %vm300 = vcmp.eq.f32.partialorder %v299, 8.507059e+37
    %v301 = vand.u32 %v134, 2147483648
    %v302 = vor.u32 1.1754944e-38, %v301
    %v303 = vsel %vm300, %v302, %v298
    %v304 = vmul.f32 1.0, %v303
    %v305 = vrcp.pop %v135
    %v306 = vmul.f32 %v135, %v305
    %v307 = vsub.f32 1.0, %v306
    %v308 = vmul.f32 %v305, %v307
    %v309 = vadd.f32 %v305, %v308
    %vm310 = vweird.f32 %v135
    %vm311 = vweird.f32 %v305
    %vm312 = vmor %vm310, %vm311
    %v313 = vsel %vm312, %v305, %v309
    %v314 = vand.u32 2147483647, %v135
    %vm315 = vcmp.eq.f32.partialorder %v314, 8.507059e+37
    %v316 = vand.u32 %v135, 2147483648
    %v317 = vor.u32 1.1754944e-38, %v316
    %v318 = vsel %vm315, %v317, %v313
    %v319 = vmul.f32 1.0, %v318
    %v320 = vrcp.pop %v136
    %v321 = vmul.f32 %v136, %v320
    %v322 = vsub.f32 1.0, %v321
    %v323 = vmul.f32 %v320, %v322
    %v324 = vadd.f32 %v320, %v323
    %vm325 = vweird.f32 %v136
    %vm326 = vweird.f32 %v320
    %vm327 = vmor %vm325, %vm326
    %v328 = vsel %vm327, %v320, %v324
    %v329 = vand.u32 2147483647, %v136
    %vm330 = vcmp.eq.f32.partialorder %v329, 8.507059e+37
    %v331 = vand.u32 %v136, 2147483648
    %v332 = vor.u32 1.1754944e-38, %v331
    %v333 = vsel %vm330, %v332, %v328
    %v334 = vmul.f32 1.0, %v333
    %v335 = vrcp.pop %v137
    %v336 = vmul.f32 %v137, %v335
    %v337 = vsub.f32 1.0, %v336
    %v338 = vmul.f32 %v335, %v337
    %v339 = vadd.f32 %v335, %v338
    %vm340 = vweird.f32 %v137
    %vm341 = vweird.f32 %v335
    %vm342 = vmor %vm340, %vm341
    %v343 = vsel %vm342, %v335, %v339
    %v344 = vand.u32 2147483647, %v137
    %vm345 = vcmp.eq.f32.partialorder %v344, 8.507059e+37
    %v346 = vand.u32 %v137, 2147483648
    %v347 = vor.u32 1.1754944e-38, %v346
    %v348 = vsel %vm345, %v347, %v343
    %v349 = vmul.f32 1.0, %v348
    %v350 = vrcp.pop %v138
    %v351 = vmul.f32 %v138, %v350
    %v352 = vsub.f32 1.0, %v351
    %v353 = vmul.f32 %v350, %v352
    %v354 = vadd.f32 %v350, %v353
    %vm355 = vweird.f32 %v138
    %vm356 = vweird.f32 %v350
    %vm357 = vmor %vm355, %vm356
    %v358 = vsel %vm357, %v350, %v354
    %v359 = vand.u32 2147483647, %v138
    %vm360 = vcmp.eq.f32.partialorder %v359, 8.507059e+37
    %v361 = vand.u32 %v138, 2147483648
    %v362 = vor.u32 1.1754944e-38, %v361
    %v363 = vsel %vm360, %v362, %v358
    %v364 = vmul.f32 1.0, %v363
    %v365 = vrcp.pop %v139
    %v366 = vmul.f32 %v139, %v365
    %v367 = vsub.f32 1.0, %v366
    %v368 = vmul.f32 %v365, %v367
    %v369 = vadd.f32 %v365, %v368
    %vm370 = vweird.f32 %v139
    %vm371 = vweird.f32 %v365
    %vm372 = vmor %vm370, %vm371
    %v373 = vsel %vm372, %v365, %v369
    %v374 = vand.u32 2147483647, %v139
    %vm375 = vcmp.eq.f32.partialorder %v374, 8.507059e+37
    %v376 = vand.u32 %v139, 2147483648
    %v377 = vor.u32 1.1754944e-38, %v376
    %v378 = vsel %vm375, %v377, %v373
    %v379 = vmul.f32 1.0, %v378
    %v380 = vmul.f32 %v92, %v154
    %v381 = vmul.f32 %v93, %v169
    %v382 = vmul.f32 %v94, %v184
    %v383 = vmul.f32 %v95, %v199
    %v384 = vmul.f32 %v96, %v214
    %v385 = vmul.f32 %v97, %v229
    %v386 = vmul.f32 %v98, %v244
    %v387 = vmul.f32 %v99, %v259
    %v388 = vmul.f32 %v100, %v274
    %v389 = vmul.f32 %v101, %v289
    %v390 = vmul.f32 %v102, %v304
    %v391 = vmul.f32 %v103, %v319
    %v392 = vmul.f32 %v104, %v334
    %v393 = vmul.f32 %v105, %v349
    %v394 = vmul.f32 %v106, %v364
    %v395 = vmul.f32 %v107, %v379
    %v396 = vadd.f32 %v380, 1.0
    %v397 = vadd.f32 %v381, 1.0
    %v398 = vadd.f32 %v382, 1.0
    %v399 = vadd.f32 %v383, 1.0
    %v400 = vadd.f32 %v384, 1.0
    %v401 = vadd.f32 %v385, 1.0
    %v402 = vadd.f32 %v386, 1.0
    %v403 = vadd.f32 %v387, 1.0
    %v404 = vadd.f32 %v388, 1.0
    %v405 = vadd.f32 %v389, 1.0
    %v406 = vadd.f32 %v390, 1.0
    %v407 = vadd.f32 %v391, 1.0
    %v408 = vadd.f32 %v392, 1.0
    %v409 = vadd.f32 %v393, 1.0
    %v410 = vadd.f32 %v394, 1.0
    %v411 = vadd.f32 %v395, 1.0
    %v412 = vlog2.pop %v396
    %v413 = vmul.f32 %v412, 0.6931472
    %v414 = vlog2.pop %v397
    %v415 = vmul.f32 %v414, 0.6931472
    %v416 = vlog2.pop %v398
    %v417 = vmul.f32 %v416, 0.6931472
    %v418 = vlog2.pop %v399
    %v419 = vmul.f32 %v418, 0.6931472
    %v420 = vlog2.pop %v400
    %v421 = vmul.f32 %v420, 0.6931472
    %v422 = vlog2.pop %v401
    %v423 = vmul.f32 %v422, 0.6931472
    %v424 = vlog2.pop %v402
    %v425 = vmul.f32 %v424, 0.6931472
    %v426 = vlog2.pop %v403
    %v427 = vmul.f32 %v426, 0.6931472
    %v428 = vlog2.pop %v404
    %v429 = vmul.f32 %v428, 0.6931472
    %v430 = vlog2.pop %v405
    %v431 = vmul.f32 %v430, 0.6931472
    %v432 = vlog2.pop %v406
    %v433 = vmul.f32 %v432, 0.6931472
    %v434 = vlog2.pop %v407
    %v435 = vmul.f32 %v434, 0.6931472
    %v436 = vlog2.pop %v408
    %v437 = vmul.f32 %v436, 0.6931472
    %v438 = vlog2.pop %v409
    %v439 = vmul.f32 %v438, 0.6931472
    %v440 = vlog2.pop %v410
    %v441 = vmul.f32 %v440, 0.6931472
    %v442 = vlog2.pop %v411
    %v443 = vmul.f32 %v442, 0.6931472
    %vm444 = vcmask 130048
    %v445 = vsel %vm444, %v413, 0.0
    %v446 = vsel %vm444, %v415, 0.0
    %v447 = vadd.f32 %v445, %v446
    %v448 = vsel %vm444, %v417, 0.0
    %v449 = vadd.f32 %v447, %v448
    %v450 = vsel %vm444, %v419, 0.0
    %v451 = vadd.f32 %v449, %v450
    %v452 = vsel %vm444, %v421, 0.0
    %v453 = vadd.f32 %v451, %v452
    %v454 = vsel %vm444, %v423, 0.0
    %v455 = vadd.f32 %v453, %v454
    %v456 = vsel %vm444, %v425, 0.0
    %v457 = vadd.f32 %v455, %v456
    %v458 = vsel %vm444, %v427, 0.0
    %v459 = vadd.f32 %v457, %v458
    %v460 = vsel %vm444, %v429, 0.0
    %v461 = vadd.f32 %v459, %v460
    %v462 = vsel %vm444, %v431, 0.0
    %v463 = vadd.f32 %v461, %v462
    %v464 = vsel %vm444, %v433, 0.0
    %v465 = vadd.f32 %v463, %v464
    %v466 = vsel %vm444, %v435, 0.0
    %v467 = vadd.f32 %v465, %v466
    %v468 = vsel %vm444, %v437, 0.0
    %v469 = vadd.f32 %v467, %v468
    %v470 = vsel %vm444, %v439, 0.0
    %v471 = vadd.f32 %v469, %v470
    %v472 = vsel %vm444, %v441, 0.0
    %v473 = vadd.f32 %v471, %v472
    %v474 = vsel %vm444, %v443, 0.0
    %v475 = vadd.f32 %v473, %v474
    %476 = vadd.xlane.f32.xlu0 %v475
    %v477 = vpop.xlane.xlu0 %476
    %v478 = vrot.slane %v477, 4
    %v479 = vadd.f32 %v477, %v478
    %v480 = vrot.slane %v479, 2
    %v481 = vadd.f32 %v479, %v480
    %v482 = vrot.slane %v481, 1
    %v483 = vadd.f32 %v481, %v482
    %s484 = vtos %v483
    %vm501 = vcmask 1040384
    %v502 = vrot.slane %v44, 7
    %v503 = vrot.slane %v45, 7
    %v504 = vsel %vm501, %v502, %v503
    %v505 = vrot.slane %v46, 7
    %v506 = vrot.slane %v47, 7
    %v507 = vsel %vm501, %v505, %v506
    %v508 = vrot.slane %v48, 7
    %v509 = vrot.slane %v49, 7
    %v510 = vsel %vm501, %v508, %v509
    %v511 = vrot.slane %v50, 7
    %v512 = vrot.slane %v51, 7
    %v513 = vsel %vm501, %v511, %v512
    %v514 = vrot.slane %v52, 7
    %v515 = vrot.slane %v53, 7
    %v516 = vsel %vm501, %v514, %v515
    %v517 = vrot.slane %v54, 7
    %v518 = vrot.slane %v55, 7
    %v519 = vsel %vm501, %v517, %v518
    %v520 = vrot.slane %v56, 7
    %v521 = vrot.slane %v57, 7
    %v522 = vsel %vm501, %v520, %v521
    %v523 = vrot.slane %v58, 7
    %v524 = vrot.slane %v59, 7
    %v525 = vsel %vm501, %v523, %v524
    %v542 = vsub.f32 %v44, %v502
    %v543 = vsub.f32 %v45, %v504
    %v544 = vsub.f32 %v46, %v505
    %v545 = vsub.f32 %v47, %v507
    %v546 = vsub.f32 %v48, %v508
    %v547 = vsub.f32 %v49, %v510
    %v548 = vsub.f32 %v50, %v511
    %v549 = vsub.f32 %v51, %v513
    %v550 = vsub.f32 %v52, %v514
    %v551 = vsub.f32 %v53, %v516
    %v552 = vsub.f32 %v54, %v517
    %v553 = vsub.f32 %v55, %v519
    %v554 = vsub.f32 %v56, %v520
    %v555 = vsub.f32 %v57, %v522
    %v556 = vsub.f32 %v58, %v523
    %v557 = vsub.f32 %v59, %v525
    %v558 = vand.u32 2147483647, %v542
    %v559 = vand.u32 2147483647, %v543
    %v560 = vand.u32 2147483647, %v544
    %v561 = vand.u32 2147483647, %v545
    %v562 = vand.u32 2147483647, %v546
    %v563 = vand.u32 2147483647, %v547
    %v564 = vand.u32 2147483647, %v548
    %v565 = vand.u32 2147483647, %v549
    %v566 = vand.u32 2147483647, %v550
    %v567 = vand.u32 2147483647, %v551
    %v568 = vand.u32 2147483647, %v552
    %v569 = vand.u32 2147483647, %v553
    %v570 = vand.u32 2147483647, %v554
    %v571 = vand.u32 2147483647, %v555
    %v572 = vand.u32 2147483647, %v556
    %v573 = vand.u32 2147483647, %v557
    %vm590 = vcmask 1046528
    %v591 = vrot.slane %v558, 1
    %v592 = vrot.slane %v559, 1
    %v593 = vsel %vm590, %v591, %v592
    %v594 = vrot.slane %v560, 1
    %v595 = vrot.slane %v561, 1
    %v596 = vsel %vm590, %v594, %v595
    %v597 = vrot.slane %v562, 1
    %v598 = vrot.slane %v563, 1
    %v599 = vsel %vm590, %v597, %v598
    %v600 = vrot.slane %v564, 1
    %v601 = vrot.slane %v565, 1
    %v602 = vsel %vm590, %v600, %v601
    %v603 = vrot.slane %v566, 1
    %v604 = vrot.slane %v567, 1
    %v605 = vsel %vm590, %v603, %v604
    %v606 = vrot.slane %v568, 1
    %v607 = vrot.slane %v569, 1
    %v608 = vsel %vm590, %v606, %v607
    %v609 = vrot.slane %v570, 1
    %v610 = vrot.slane %v571, 1
    %v611 = vsel %vm590, %v609, %v610
    %v612 = vrot.slane %v572, 1
    %v613 = vrot.slane %v573, 1
    %v614 = vsel %vm590, %v612, %v613
    %v631 = vsel %vm444, %v593, 0.0
    %vm632 = vcmask 129024
    %v633 = vsel %vm632, %v592, 0.0
    %v634 = vadd.f32 %v631, %v633
    %v635 = vsel %vm444, %v596, 0.0
    %v636 = vadd.f32 %v634, %v635
    %v637 = vsel %vm632, %v595, 0.0
    %v638 = vadd.f32 %v636, %v637
    %v639 = vsel %vm444, %v599, 0.0
    %v640 = vadd.f32 %v638, %v639
    %v641 = vsel %vm632, %v598, 0.0
    %v642 = vadd.f32 %v640, %v641
    %v643 = vsel %vm444, %v602, 0.0
    %v644 = vadd.f32 %v642, %v643
    %v645 = vsel %vm632, %v601, 0.0
    %v646 = vadd.f32 %v644, %v645
    %v647 = vsel %vm444, %v605, 0.0
    %v648 = vadd.f32 %v646, %v647
    %v649 = vsel %vm632, %v604, 0.0
    %v650 = vadd.f32 %v648, %v649
    %v651 = vsel %vm444, %v608, 0.0
    %v652 = vadd.f32 %v650, %v651
    %v653 = vsel %vm632, %v607, 0.0
    %v654 = vadd.f32 %v652, %v653
    %v655 = vsel %vm444, %v611, 0.0
    %v656 = vadd.f32 %v654, %v655
    %v657 = vsel %vm632, %v610, 0.0
    %v658 = vadd.f32 %v656, %v657
    %v659 = vsel %vm444, %v614, 0.0
    %v660 = vadd.f32 %v658, %v659
    %v661 = vsel %vm632, %v613, 0.0
    %v662 = vadd.f32 %v660, %v661
    %663 = vadd.xlane.f32.xlu0 %v662
    %v664 = vpop.xlane.xlu0 %663
    %v665 = vrot.slane %v664, 4
    %v666 = vadd.f32 %v664, %v665
    %v667 = vrot.slane %v666, 2
    %v668 = vadd.f32 %v666, %v667
    %v669 = vrot.slane %v668, 1
    %v670 = vadd.f32 %v668, %v669
    %s671 = vtos %v670
    %672 = vrot.lane.b32.xlu0 %v44, 1
    %v673 = vpop.permute.xlu0 %672
    %674 = vrot.lane.b32.xlu0 %v45, 1
    %v675 = vpop.permute.xlu0 %674
    %676 = vrot.lane.b32.xlu0 %v46, 1
    %v677 = vpop.permute.xlu0 %676
    %678 = vrot.lane.b32.xlu0 %v47, 1
    %v679 = vpop.permute.xlu0 %678
    %680 = vrot.lane.b32.xlu0 %v48, 1
    %v681 = vpop.permute.xlu0 %680
    %682 = vrot.lane.b32.xlu0 %v49, 1
    %v683 = vpop.permute.xlu0 %682
    %684 = vrot.lane.b32.xlu0 %v50, 1
    %v685 = vpop.permute.xlu0 %684
    %686 = vrot.lane.b32.xlu0 %v51, 1
    %v687 = vpop.permute.xlu0 %686
    %688 = vrot.lane.b32.xlu0 %v52, 1
    %v689 = vpop.permute.xlu0 %688
    %690 = vrot.lane.b32.xlu0 %v53, 1
    %v691 = vpop.permute.xlu0 %690
    %692 = vrot.lane.b32.xlu0 %v54, 1
    %v693 = vpop.permute.xlu0 %692
    %694 = vrot.lane.b32.xlu0 %v55, 1
    %v695 = vpop.permute.xlu0 %694
    %696 = vrot.lane.b32.xlu0 %v56, 1
    %v697 = vpop.permute.xlu0 %696
    %698 = vrot.lane.b32.xlu0 %v57, 1
    %v699 = vpop.permute.xlu0 %698
    %700 = vrot.lane.b32.xlu0 %v58, 1
    %v701 = vpop.permute.xlu0 %700
    %702 = vrot.lane.b32.xlu0 %v59, 1
    %v703 = vpop.permute.xlu0 %702
    %v720 = vsub.f32 %v44, %v673
    %v721 = vsub.f32 %v45, %v675
    %v722 = vsub.f32 %v46, %v677
    %v723 = vsub.f32 %v47, %v679
    %v724 = vsub.f32 %v48, %v681
    %v725 = vsub.f32 %v49, %v683
    %v726 = vsub.f32 %v50, %v685
    %v727 = vsub.f32 %v51, %v687
    %v728 = vsub.f32 %v52, %v689
    %v729 = vsub.f32 %v53, %v691
    %v730 = vsub.f32 %v54, %v693
    %v731 = vsub.f32 %v55, %v695
    %v732 = vsub.f32 %v56, %v697
    %v733 = vsub.f32 %v57, %v699
    %v734 = vsub.f32 %v58, %v701
    %v735 = vsub.f32 %v59, %v703
    %v736 = vand.u32 2147483647, %v720
    %v737 = vand.u32 2147483647, %v721
    %v738 = vand.u32 2147483647, %v722
    %v739 = vand.u32 2147483647, %v723
    %v740 = vand.u32 2147483647, %v724
    %v741 = vand.u32 2147483647, %v725
    %v742 = vand.u32 2147483647, %v726
    %v743 = vand.u32 2147483647, %v727
    %v744 = vand.u32 2147483647, %v728
    %v745 = vand.u32 2147483647, %v729
    %v746 = vand.u32 2147483647, %v730
    %v747 = vand.u32 2147483647, %v731
    %v748 = vand.u32 2147483647, %v732
    %v749 = vand.u32 2147483647, %v733
    %v750 = vand.u32 2147483647, %v734
    %v751 = vand.u32 2147483647, %v735
    %768 = vrot.lane.b32.xlu0 %v736, 127
    %v769 = vpop.permute.xlu0 %768
    %770 = vrot.lane.b32.xlu0 %v737, 127
    %v771 = vpop.permute.xlu0 %770
    %772 = vrot.lane.b32.xlu0 %v738, 127
    %v773 = vpop.permute.xlu0 %772
    %774 = vrot.lane.b32.xlu0 %v739, 127
    %v775 = vpop.permute.xlu0 %774
    %776 = vrot.lane.b32.xlu0 %v740, 127
    %v777 = vpop.permute.xlu0 %776
    %778 = vrot.lane.b32.xlu0 %v741, 127
    %v779 = vpop.permute.xlu0 %778
    %780 = vrot.lane.b32.xlu0 %v742, 127
    %v781 = vpop.permute.xlu0 %780
    %782 = vrot.lane.b32.xlu0 %v743, 127
    %v783 = vpop.permute.xlu0 %782
    %784 = vrot.lane.b32.xlu0 %v744, 127
    %v785 = vpop.permute.xlu0 %784
    %786 = vrot.lane.b32.xlu0 %v745, 127
    %v787 = vpop.permute.xlu0 %786
    %788 = vrot.lane.b32.xlu0 %v746, 127
    %v789 = vpop.permute.xlu0 %788
    %790 = vrot.lane.b32.xlu0 %v747, 127
    %v791 = vpop.permute.xlu0 %790
    %792 = vrot.lane.b32.xlu0 %v748, 127
    %v793 = vpop.permute.xlu0 %792
    %794 = vrot.lane.b32.xlu0 %v749, 127
    %v795 = vpop.permute.xlu0 %794
    %796 = vrot.lane.b32.xlu0 %v750, 127
    %v797 = vpop.permute.xlu0 %796
    %798 = vrot.lane.b32.xlu0 %v751, 127
    %v799 = vpop.permute.xlu0 %798
    %vm816 = vcmask 121856
    %v817 = vsel %vm816, %v769, 0.0
    %v818 = vsel %vm816, %v771, 0.0
    %v819 = vadd.f32 %v817, %v818
    %v820 = vsel %vm816, %v773, 0.0
    %v821 = vadd.f32 %v819, %v820
    %v822 = vsel %vm816, %v775, 0.0
    %v823 = vadd.f32 %v821, %v822
    %v824 = vsel %vm816, %v777, 0.0
    %v825 = vadd.f32 %v823, %v824
    %v826 = vsel %vm816, %v779, 0.0
    %v827 = vadd.f32 %v825, %v826
    %v828 = vsel %vm816, %v781, 0.0
    %v829 = vadd.f32 %v827, %v828
    %v830 = vsel %vm816, %v783, 0.0
    %v831 = vadd.f32 %v829, %v830
    %v832 = vsel %vm816, %v785, 0.0
    %v833 = vadd.f32 %v831, %v832
    %v834 = vsel %vm816, %v787, 0.0
    %v835 = vadd.f32 %v833, %v834
    %v836 = vsel %vm816, %v789, 0.0
    %v837 = vadd.f32 %v835, %v836
    %v838 = vsel %vm816, %v791, 0.0
    %v839 = vadd.f32 %v837, %v838
    %v840 = vsel %vm816, %v793, 0.0
    %v841 = vadd.f32 %v839, %v840
    %v842 = vsel %vm816, %v795, 0.0
    %v843 = vadd.f32 %v841, %v842
    %v844 = vsel %vm816, %v797, 0.0
    %v845 = vadd.f32 %v843, %v844
    %v846 = vsel %vm816, %v799, 0.0
    %v847 = vadd.f32 %v845, %v846
    %848 = vadd.xlane.f32.xlu0 %v847
    %v849 = vpop.xlane.xlu0 %848
    %v850 = vrot.slane %v849, 4
    %v851 = vadd.f32 %v849, %v850
    %v852 = vrot.slane %v851, 2
    %v853 = vadd.f32 %v851, %v852
    %v854 = vrot.slane %v853, 1
    %v855 = vadd.f32 %v853, %v854
    %s856 = vtos %v855
    %vm857 = vcmask 123904
    %858 = vst.msk [vmem:[#allocation2 + $0x6] sm:$0x3] %vm857, 0.0
    %859 = vst.msk [vmem:[#allocation2 + $0x26] sm:$0x3] %vm857, 0.0
    %860 = vst.msk [vmem:[#allocation2 + $0x46] sm:$0x3] %vm857, 0.0
    %861 = vst.msk [vmem:[#allocation2 + $0x66] sm:$0x3] %vm857, 0.0
    %862 = vst.msk [vmem:[#allocation2 + $0x86] sm:$0x3] %vm857, 0.0
    %863 = vst.msk [vmem:[#allocation2 + $0xa6] sm:$0x3] %vm857, 0.0
    %864 = vst.msk [vmem:[#allocation2 + $0xc6] sm:$0x3] %vm857, 0.0
    %865 = vst.msk [vmem:[#allocation2 + $0xe6] sm:$0x3] %vm857, 0.0
    %866 = vst.msk [vmem:[#allocation2 + $0x106] sm:$0x3] %vm857, 0.0
    %867 = vst.msk [vmem:[#allocation2 + $0x126] sm:$0x3] %vm857, 0.0
    %868 = vst.msk [vmem:[#allocation2 + $0x146] sm:$0x3] %vm857, 0.0
    %869 = vst.msk [vmem:[#allocation2 + $0x166] sm:$0x3] %vm857, 0.0
    %870 = vst.msk [vmem:[#allocation2 + $0x186] sm:$0x3] %vm857, 0.0
    %871 = vst.msk [vmem:[#allocation2 + $0x1a6] sm:$0x3] %vm857, 0.0
    %872 = vst.msk [vmem:[#allocation2 + $0x1c6] sm:$0x3] %vm857, 0.0
    %873 = vst.msk [vmem:[#allocation2 + $0x1e6] sm:$0x3] %vm857, 0.0
    %874 = vst.msk [vmem:[#allocation2 + $0x206] sm:$0x3] %vm857, 0.0
    %875 = vst.msk [vmem:[#allocation2 + $0x226] sm:$0x3] %vm857, 0.0
    %876 = vst.msk [vmem:[#allocation2 + $0x246] sm:$0x3] %vm857, 0.0
    %877 = vst.msk [vmem:[#allocation2 + $0x266] sm:$0x3] %vm857, 0.0
    %878 = vst.msk [vmem:[#allocation2 + $0x286] sm:$0x3] %vm857, 0.0
    %879 = vst.msk [vmem:[#allocation2 + $0x2a6] sm:$0x3] %vm857, 0.0
    %880 = vst.msk [vmem:[#allocation2 + $0x2c6] sm:$0x3] %vm857, 0.0
    %881 = vst.msk [vmem:[#allocation2 + $0x2e6] sm:$0x3] %vm857, 0.0
    %882 = vst.msk [vmem:[#allocation2 + $0x306] sm:$0x3] %vm857, 0.0
    %883 = vst.msk [vmem:[#allocation2 + $0x326] sm:$0x3] %vm857, 0.0
    %884 = vst.msk [vmem:[#allocation2 + $0x346] sm:$0x3] %vm857, 0.0
    %885 = vst.msk [vmem:[#allocation2 + $0x366] sm:$0x3] %vm857, 0.0
    %886 = vst.msk [vmem:[#allocation2 + $0x386] sm:$0x3] %vm857, 0.0
    %887 = vst.msk [vmem:[#allocation2 + $0x3a6] sm:$0x3] %vm857, 0.0
    %888 = vst.msk [vmem:[#allocation2 + $0x3c6] sm:$0x3] %vm857, 0.0
    %889 = vst.msk [vmem:[#allocation2 + $0x3e6] sm:$0x3] %vm857, 0.0
    %890 = vst.msk [vmem:[#allocation2 + $0x406] sm:$0x3] %vm857, 0.0
    %891 = vst.msk [vmem:[#allocation2 + $0x426] sm:$0x3] %vm857, 0.0
    %892 = vst.msk [vmem:[#allocation2 + $0x446] sm:$0x3] %vm857, 0.0
    %893 = vst.msk [vmem:[#allocation2 + $0x466] sm:$0x3] %vm857, 0.0
    %894 = vst.msk [vmem:[#allocation2 + $0x486] sm:$0x3] %vm857, 0.0
    %895 = vst.msk [vmem:[#allocation2 + $0x4a6] sm:$0x3] %vm857, 0.0
    %896 = vst.msk [vmem:[#allocation2 + $0x4c6] sm:$0x3] %vm857, 0.0
    %897 = vst.msk [vmem:[#allocation2 + $0x4e6] sm:$0x3] %vm857, 0.0
    %898 = vst.msk [vmem:[#allocation2 + $0x18] sm:$0x3] %vm857, 0.0
    %899 = vst.msk [vmem:[#allocation2 + $0x38] sm:$0x3] %vm857, 0.0
    %900 = vst.msk [vmem:[#allocation2 + $0x58] sm:$0x3] %vm857, 0.0
    %901 = vst.msk [vmem:[#allocation2 + $0x78] sm:$0x3] %vm857, 0.0
    %902 = vst.msk [vmem:[#allocation2 + $0x98] sm:$0x3] %vm857, 0.0
    %903 = vst.msk [vmem:[#allocation2 + $0xb8] sm:$0x3] %vm857, 0.0
    %904 = vst.msk [vmem:[#allocation2 + $0xd8] sm:$0x3] %vm857, 0.0
    %905 = vst.msk [vmem:[#allocation2 + $0xf8] sm:$0x3] %vm857, 0.0
    %906 = vst.msk [vmem:[#allocation2 + $0x118] sm:$0x3] %vm857, 0.0
    %907 = vst.msk [vmem:[#allocation2 + $0x138] sm:$0x3] %vm857, 0.0
    %908 = vst.msk [vmem:[#allocation2 + $0x158] sm:$0x3] %vm857, 0.0
    %909 = vst.msk [vmem:[#allocation2 + $0x178] sm:$0x3] %vm857, 0.0
    %910 = vst.msk [vmem:[#allocation2 + $0x198] sm:$0x3] %vm857, 0.0
    %911 = vst.msk [vmem:[#allocation2 + $0x1b8] sm:$0x3] %vm857, 0.0
    %912 = vst.msk [vmem:[#allocation2 + $0x1d8] sm:$0x3] %vm857, 0.0
    %913 = vst.msk [vmem:[#allocation2 + $0x1f8] sm:$0x3] %vm857, 0.0
    %914 = vst.msk [vmem:[#allocation2 + $0x218] sm:$0x3] %vm857, 0.0
    %915 = vst.msk [vmem:[#allocation2 + $0x238] sm:$0x3] %vm857, 0.0
    %916 = vst.msk [vmem:[#allocation2 + $0x258] sm:$0x3] %vm857, 0.0
    %917 = vst.msk [vmem:[#allocation2 + $0x278] sm:$0x3] %vm857, 0.0
    %918 = vst.msk [vmem:[#allocation2 + $0x298] sm:$0x3] %vm857, 0.0
    %919 = vst.msk [vmem:[#allocation2 + $0x2b8] sm:$0x3] %vm857, 0.0
    %920 = vst.msk [vmem:[#allocation2 + $0x2d8] sm:$0x3] %vm857, 0.0
    %921 = vst.msk [vmem:[#allocation2 + $0x2f8] sm:$0x3] %vm857, 0.0
    %922 = vst.msk [vmem:[#allocation2 + $0x318] sm:$0x3] %vm857, 0.0
    %923 = vst.msk [vmem:[#allocation2 + $0x338] sm:$0x3] %vm857, 0.0
    %924 = vst.msk [vmem:[#allocation2 + $0x358] sm:$0x3] %vm857, 0.0
    %925 = vst.msk [vmem:[#allocation2 + $0x378] sm:$0x3] %vm857, 0.0
    %926 = vst.msk [vmem:[#allocation2 + $0x398] sm:$0x3] %vm857, 0.0
    %927 = vst.msk [vmem:[#allocation2 + $0x3b8] sm:$0x3] %vm857, 0.0
    %928 = vst.msk [vmem:[#allocation2 + $0x3d8] sm:$0x3] %vm857, 0.0
    %929 = vst.msk [vmem:[#allocation2 + $0x3f8] sm:$0x3] %vm857, 0.0
    %930 = vst.msk [vmem:[#allocation2 + $0x418] sm:$0x3] %vm857, 0.0
    %931 = vst.msk [vmem:[#allocation2 + $0x438] sm:$0x3] %vm857, 0.0
    %932 = vst.msk [vmem:[#allocation2 + $0x458] sm:$0x3] %vm857, 0.0
    %933 = vst.msk [vmem:[#allocation2 + $0x478] sm:$0x3] %vm857, 0.0
    %934 = vst.msk [vmem:[#allocation2 + $0x498] sm:$0x3] %vm857, 0.0
    %935 = vst.msk [vmem:[#allocation2 + $0x4b8] sm:$0x3] %vm857, 0.0
    %936 = vst.msk [vmem:[#allocation2 + $0x4d8] sm:$0x3] %vm857, 0.0
    %937 = vst.msk [vmem:[#allocation2 + $0x4f8] sm:$0x3] %vm857, 0.0
    %938 = vst.msk [vmem:[#allocation2 + $0x8] sm:$0xff] %vm444, %v44
    %939 = vst.msk [vmem:[#allocation2 + $0x10] sm:$0xff] %vm444, %v45
    %940 = vst.msk [vmem:[#allocation2 + $0x28] sm:$0xff] %vm444, %v46
    %941 = vst.msk [vmem:[#allocation2 + $0x30] sm:$0xff] %vm444, %v47
    %942 = vst.msk [vmem:[#allocation2 + $0x48] sm:$0xff] %vm444, %v48
    %943 = vst.msk [vmem:[#allocation2 + $0x50] sm:$0xff] %vm444, %v49
    %944 = vst.msk [vmem:[#allocation2 + $0x68] sm:$0xff] %vm444, %v50
    %945 = vst.msk [vmem:[#allocation2 + $0x70] sm:$0xff] %vm444, %v51
    %946 = vst.msk [vmem:[#allocation2 + $0x88] sm:$0xff] %vm444, %v52
    %947 = vst.msk [vmem:[#allocation2 + $0x90] sm:$0xff] %vm444, %v53
    %948 = vst.msk [vmem:[#allocation2 + $0xa8] sm:$0xff] %vm444, %v54
    %949 = vst.msk [vmem:[#allocation2 + $0xb0] sm:$0xff] %vm444, %v55
    %950 = vst.msk [vmem:[#allocation2 + $0xc8] sm:$0xff] %vm444, %v56
    %951 = vst.msk [vmem:[#allocation2 + $0xd0] sm:$0xff] %vm444, %v57
    %952 = vst.msk [vmem:[#allocation2 + $0xe8] sm:$0xff] %vm444, %v58
    %953 = vst.msk [vmem:[#allocation2 + $0xf0] sm:$0xff] %vm444, %v59
    %s954 = scalar_lea.vmem [#allocation2], 256
    %955 = vst.msk [vmem:[%s954 + $0x8] sm:$0xff] %vm444, %v60
    %956 = vst.msk [vmem:[%s954 + $0x10] sm:$0xff] %vm444, %v61
    %957 = vst.msk [vmem:[%s954 + $0x28] sm:$0xff] %vm444, %v62
    %958 = vst.msk [vmem:[%s954 + $0x30] sm:$0xff] %vm444, %v63
    %959 = vst.msk [vmem:[%s954 + $0x48] sm:$0xff] %vm444, %v64
    %960 = vst.msk [vmem:[%s954 + $0x50] sm:$0xff] %vm444, %v65
    %961 = vst.msk [vmem:[%s954 + $0x68] sm:$0xff] %vm444, %v66
    %962 = vst.msk [vmem:[%s954 + $0x70] sm:$0xff] %vm444, %v67
    %963 = vst.msk [vmem:[%s954 + $0x88] sm:$0xff] %vm444, %v68
    %964 = vst.msk [vmem:[%s954 + $0x90] sm:$0xff] %vm444, %v69
    %965 = vst.msk [vmem:[%s954 + $0xa8] sm:$0xff] %vm444, %v70
    %966 = vst.msk [vmem:[%s954 + $0xb0] sm:$0xff] %vm444, %v71
    %967 = vst.msk [vmem:[%s954 + $0xc8] sm:$0xff] %vm444, %v72
    %968 = vst.msk [vmem:[%s954 + $0xd0] sm:$0xff] %vm444, %v73
    %969 = vst.msk [vmem:[%s954 + $0xe8] sm:$0xff] %vm444, %v74
    %970 = vst.msk [vmem:[%s954 + $0xf0] sm:$0xff] %vm444, %v75
    %v971 = vmul.f32 %v44, %v44
    %v972 = vmul.f32 %v45, %v45
    %v973 = vmul.f32 %v46, %v46
    %v974 = vmul.f32 %v47, %v47
    %v975 = vmul.f32 %v48, %v48
    %v976 = vmul.f32 %v49, %v49
    %v977 = vmul.f32 %v50, %v50
    %v978 = vmul.f32 %v51, %v51
    %v979 = vmul.f32 %v52, %v52
    %v980 = vmul.f32 %v53, %v53
    %v981 = vmul.f32 %v54, %v54
    %v982 = vmul.f32 %v55, %v55
    %v983 = vmul.f32 %v56, %v56
    %v984 = vmul.f32 %v57, %v57
    %v985 = vmul.f32 %v58, %v58
    %v986 = vmul.f32 %v59, %v59
    %s987 = scalar_lea.vmem [#allocation2], 512
    %988 = vst.msk [vmem:[%s987 + $0x8] sm:$0xff] %vm444, %v971
    %989 = vst.msk [vmem:[%s987 + $0x10] sm:$0xff] %vm444, %v972
    %990 = vst.msk [vmem:[%s987 + $0x28] sm:$0xff] %vm444, %v973
    %991 = vst.msk [vmem:[%s987 + $0x30] sm:$0xff] %vm444, %v974
    %992 = vst.msk [vmem:[%s987 + $0x48] sm:$0xff] %vm444, %v975
    %993 = vst.msk [vmem:[%s987 + $0x50] sm:$0xff] %vm444, %v976
    %994 = vst.msk [vmem:[%s987 + $0x68] sm:$0xff] %vm444, %v977
    %995 = vst.msk [vmem:[%s987 + $0x70] sm:$0xff] %vm444, %v978
    %996 = vst.msk [vmem:[%s987 + $0x88] sm:$0xff] %vm444, %v979
    %997 = vst.msk [vmem:[%s987 + $0x90] sm:$0xff] %vm444, %v980
    %998 = vst.msk [vmem:[%s987 + $0xa8] sm:$0xff] %vm444, %v981
    %999 = vst.msk [vmem:[%s987 + $0xb0] sm:$0xff] %vm444, %v982
    %1000 = vst.msk [vmem:[%s987 + $0xc8] sm:$0xff] %vm444, %v983
    %1001 = vst.msk [vmem:[%s987 + $0xd0] sm:$0xff] %vm444, %v984
    %1002 = vst.msk [vmem:[%s987 + $0xe8] sm:$0xff] %vm444, %v985
    %1003 = vst.msk [vmem:[%s987 + $0xf0] sm:$0xff] %vm444, %v986
    %v1004 = vmul.f32 %v60, %v60
    %v1005 = vmul.f32 %v61, %v61
    %v1006 = vmul.f32 %v62, %v62
    %v1007 = vmul.f32 %v63, %v63
    %v1008 = vmul.f32 %v64, %v64
    %v1009 = vmul.f32 %v65, %v65
    %v1010 = vmul.f32 %v66, %v66
    %v1011 = vmul.f32 %v67, %v67
    %v1012 = vmul.f32 %v68, %v68
    %v1013 = vmul.f32 %v69, %v69
    %v1014 = vmul.f32 %v70, %v70
    %v1015 = vmul.f32 %v71, %v71
    %v1016 = vmul.f32 %v72, %v72
    %v1017 = vmul.f32 %v73, %v73
    %v1018 = vmul.f32 %v74, %v74
    %v1019 = vmul.f32 %v75, %v75
    %s1020 = scalar_lea.vmem [#allocation2], 768
    %1021 = vst.msk [vmem:[%s1020 + $0x8] sm:$0xff] %vm444, %v1004
    %1022 = vst.msk [vmem:[%s1020 + $0x10] sm:$0xff] %vm444, %v1005
    %1023 = vst.msk [vmem:[%s1020 + $0x28] sm:$0xff] %vm444, %v1006
    %1024 = vst.msk [vmem:[%s1020 + $0x30] sm:$0xff] %vm444, %v1007
    %1025 = vst.msk [vmem:[%s1020 + $0x48] sm:$0xff] %vm444, %v1008
    %1026 = vst.msk [vmem:[%s1020 + $0x50] sm:$0xff] %vm444, %v1009
    %1027 = vst.msk [vmem:[%s1020 + $0x68] sm:$0xff] %vm444, %v1010
    %1028 = vst.msk [vmem:[%s1020 + $0x70] sm:$0xff] %vm444, %v1011
    %1029 = vst.msk [vmem:[%s1020 + $0x88] sm:$0xff] %vm444, %v1012
    %1030 = vst.msk [vmem:[%s1020 + $0x90] sm:$0xff] %vm444, %v1013
    %1031 = vst.msk [vmem:[%s1020 + $0xa8] sm:$0xff] %vm444, %v1014
    %1032 = vst.msk [vmem:[%s1020 + $0xb0] sm:$0xff] %vm444, %v1015
    %1033 = vst.msk [vmem:[%s1020 + $0xc8] sm:$0xff] %vm444, %v1016
    %1034 = vst.msk [vmem:[%s1020 + $0xd0] sm:$0xff] %vm444, %v1017
    %1035 = vst.msk [vmem:[%s1020 + $0xe8] sm:$0xff] %vm444, %v1018
    %1036 = vst.msk [vmem:[%s1020 + $0xf0] sm:$0xff] %vm444, %v1019
    %v1037 = vmul.f32 %v44, %v60
    %v1038 = vmul.f32 %v45, %v61
    %v1039 = vmul.f32 %v46, %v62
    %v1040 = vmul.f32 %v47, %v63
    %v1041 = vmul.f32 %v48, %v64
    %v1042 = vmul.f32 %v49, %v65
    %v1043 = vmul.f32 %v50, %v66
    %v1044 = vmul.f32 %v51, %v67
    %v1045 = vmul.f32 %v52, %v68
    %v1046 = vmul.f32 %v53, %v69
    %v1047 = vmul.f32 %v54, %v70
    %v1048 = vmul.f32 %v55, %v71
    %v1049 = vmul.f32 %v56, %v72
    %v1050 = vmul.f32 %v57, %v73
    %v1051 = vmul.f32 %v58, %v74
    %v1052 = vmul.f32 %v59, %v75
    %s1053 = scalar_lea.vmem [#allocation2], 1024
    %1054 = vst.msk [vmem:[%s1053 + $0x8] sm:$0xff] %vm444, %v1037
    %1055 = vst.msk [vmem:[%s1053 + $0x10] sm:$0xff] %vm444, %v1038
    %1056 = vst.msk [vmem:[%s1053 + $0x28] sm:$0xff] %vm444, %v1039
    %1057 = vst.msk [vmem:[%s1053 + $0x30] sm:$0xff] %vm444, %v1040
    %1058 = vst.msk [vmem:[%s1053 + $0x48] sm:$0xff] %vm444, %v1041
    %1059 = vst.msk [vmem:[%s1053 + $0x50] sm:$0xff] %vm444, %v1042
    %1060 = vst.msk [vmem:[%s1053 + $0x68] sm:$0xff] %vm444, %v1043
    %1061 = vst.msk [vmem:[%s1053 + $0x70] sm:$0xff] %vm444, %v1044
    %1062 = vst.msk [vmem:[%s1053 + $0x88] sm:$0xff] %vm444, %v1045
    %1063 = vst.msk [vmem:[%s1053 + $0x90] sm:$0xff] %vm444, %v1046
    %1064 = vst.msk [vmem:[%s1053 + $0xa8] sm:$0xff] %vm444, %v1047
    %1065 = vst.msk [vmem:[%s1053 + $0xb0] sm:$0xff] %vm444, %v1048
    %1066 = vst.msk [vmem:[%s1053 + $0xc8] sm:$0xff] %vm444, %v1049
    %1067 = vst.msk [vmem:[%s1053 + $0xd0] sm:$0xff] %vm444, %v1050
    %1068 = vst.msk [vmem:[%s1053 + $0xe8] sm:$0xff] %vm444, %v1051
    %1069 = vst.msk [vmem:[%s1053 + $0xf0] sm:$0xff] %vm444, %v1052
    %v1070 = vld [vmem:[#allocation2 + $0x6] sm:$0xff]
    %v1071 = vld [vmem:[#allocation2 + $0xe] sm:$0xff]
    %v1072 = vld [vmem:[#allocation2 + $0x26] sm:$0xff]
    %v1073 = vld [vmem:[#allocation2 + $0x2e] sm:$0xff]
    %v1074 = vld [vmem:[#allocation2 + $0x46] sm:$0xff]
    %v1075 = vld [vmem:[#allocation2 + $0x4e] sm:$0xff]
    %v1076 = vld [vmem:[#allocation2 + $0x66] sm:$0xff]
    %v1077 = vld [vmem:[#allocation2 + $0x6e] sm:$0xff]
    %v1078 = vld [vmem:[#allocation2 + $0x86] sm:$0xff]
    %v1079 = vld [vmem:[#allocation2 + $0x8e] sm:$0xff]
    %v1080 = vld [vmem:[#allocation2 + $0xa6] sm:$0xff]
    %v1081 = vld [vmem:[#allocation2 + $0xae] sm:$0xff]
    %v1082 = vld [vmem:[#allocation2 + $0xc6] sm:$0xff]
    %v1083 = vld [vmem:[#allocation2 + $0xce] sm:$0xff]
    %v1084 = vld [vmem:[#allocation2 + $0xe6] sm:$0xff]
    %v1085 = vld [vmem:[#allocation2 + $0xee] sm:$0xff]
    %v1086 = vld [vmem:[#allocation2 + $0x106] sm:$0xff]
    %v1087 = vld [vmem:[#allocation2 + $0x10e] sm:$0xff]
    %v1088 = vld [vmem:[#allocation2 + $0x126] sm:$0xff]
    %v1089 = vld [vmem:[#allocation2 + $0x12e] sm:$0xff]
    %v1090 = vld [vmem:[#allocation2 + $0x146] sm:$0xff]
    %v1091 = vld [vmem:[#allocation2 + $0x14e] sm:$0xff]
    %v1092 = vld [vmem:[#allocation2 + $0x166] sm:$0xff]
    %v1093 = vld [vmem:[#allocation2 + $0x16e] sm:$0xff]
    %v1094 = vld [vmem:[#allocation2 + $0x186] sm:$0xff]
    %v1095 = vld [vmem:[#allocation2 + $0x18e] sm:$0xff]
    %v1096 = vld [vmem:[#allocation2 + $0x1a6] sm:$0xff]
    %v1097 = vld [vmem:[#allocation2 + $0x1ae] sm:$0xff]
    %v1098 = vld [vmem:[#allocation2 + $0x1c6] sm:$0xff]
    %v1099 = vld [vmem:[#allocation2 + $0x1ce] sm:$0xff]
    %v1100 = vld [vmem:[#allocation2 + $0x1e6] sm:$0xff]
    %v1101 = vld [vmem:[#allocation2 + $0x1ee] sm:$0xff]
    %v1102 = vld [vmem:[#allocation2 + $0x206] sm:$0xff]
    %v1103 = vld [vmem:[#allocation2 + $0x20e] sm:$0xff]
    %v1104 = vld [vmem:[#allocation2 + $0x226] sm:$0xff]
    %v1105 = vld [vmem:[#allocation2 + $0x22e] sm:$0xff]
    %v1106 = vld [vmem:[#allocation2 + $0x246] sm:$0xff]
    %v1107 = vld [vmem:[#allocation2 + $0x24e] sm:$0xff]
    %v1108 = vld [vmem:[#allocation2 + $0x266] sm:$0xff]
    %v1109 = vld [vmem:[#allocation2 + $0x26e] sm:$0xff]
    %v1110 = vld [vmem:[#allocation2 + $0x286] sm:$0xff]
    %v1111 = vld [vmem:[#allocation2 + $0x28e] sm:$0xff]
    %v1112 = vld [vmem:[#allocation2 + $0x2a6] sm:$0xff]
    %v1113 = vld [vmem:[#allocation2 + $0x2ae] sm:$0xff]
    %v1114 = vld [vmem:[#allocation2 + $0x2c6] sm:$0xff]
    %v1115 = vld [vmem:[#allocation2 + $0x2ce] sm:$0xff]
    %v1116 = vld [vmem:[#allocation2 + $0x2e6] sm:$0xff]
    %v1117 = vld [vmem:[#allocation2 + $0x2ee] sm:$0xff]
    %v1118 = vld [vmem:[#allocation2 + $0x306] sm:$0xff]
    %v1119 = vld [vmem:[#allocation2 + $0x30e] sm:$0xff]
    %v1120 = vld [vmem:[#allocation2 + $0x326] sm:$0xff]
    %v1121 = vld [vmem:[#allocation2 + $0x32e] sm:$0xff]
    %v1122 = vld [vmem:[#allocation2 + $0x346] sm:$0xff]
    %v1123 = vld [vmem:[#allocation2 + $0x34e] sm:$0xff]
    %v1124 = vld [vmem:[#allocation2 + $0x366] sm:$0xff]
    %v1125 = vld [vmem:[#allocation2 + $0x36e] sm:$0xff]
    %v1126 = vld [vmem:[#allocation2 + $0x386] sm:$0xff]
    %v1127 = vld [vmem:[#allocation2 + $0x38e] sm:$0xff]
    %v1128 = vld [vmem:[#allocation2 + $0x3a6] sm:$0xff]
    %v1129 = vld [vmem:[#allocation2 + $0x3ae] sm:$0xff]
    %v1130 = vld [vmem:[#allocation2 + $0x3c6] sm:$0xff]
    %v1131 = vld [vmem:[#allocation2 + $0x3ce] sm:$0xff]
    %v1132 = vld [vmem:[#allocation2 + $0x3e6] sm:$0xff]
    %v1133 = vld [vmem:[#allocation2 + $0x3ee] sm:$0xff]
    %v1134 = vld [vmem:[#allocation2 + $0x406] sm:$0xff]
    %v1135 = vld [vmem:[#allocation2 + $0x40e] sm:$0xff]
    %v1136 = vld [vmem:[#allocation2 + $0x426] sm:$0xff]
    %v1137 = vld [vmem:[#allocation2 + $0x42e] sm:$0xff]
    %v1138 = vld [vmem:[#allocation2 + $0x446] sm:$0xff]
    %v1139 = vld [vmem:[#allocation2 + $0x44e] sm:$0xff]
    %v1140 = vld [vmem:[#allocation2 + $0x466] sm:$0xff]
    %v1141 = vld [vmem:[#allocation2 + $0x46e] sm:$0xff]
    %v1142 = vld [vmem:[#allocation2 + $0x486] sm:$0xff]
    %v1143 = vld [vmem:[#allocation2 + $0x48e] sm:$0xff]
    %v1144 = vld [vmem:[#allocation2 + $0x4a6] sm:$0xff]
    %v1145 = vld [vmem:[#allocation2 + $0x4ae] sm:$0xff]
    %v1146 = vld [vmem:[#allocation2 + $0x4c6] sm:$0xff]
    %v1147 = vld [vmem:[#allocation2 + $0x4ce] sm:$0xff]
    %v1148 = vld [vmem:[#allocation2 + $0x4e6] sm:$0xff]
    %v1149 = vld [vmem:[#allocation2 + $0x4ee] sm:$0xff]
    %v1150 = vld [vmem:[#allocation2 + $0x7] sm:$0xff]
    %v1151 = vld [vmem:[#allocation2 + $0xf] sm:$0xff]
    %v1152 = vld [vmem:[#allocation2 + $0x27] sm:$0xff]
    %v1153 = vld [vmem:[#allocation2 + $0x2f] sm:$0xff]
    %v1154 = vld [vmem:[#allocation2 + $0x47] sm:$0xff]
    %v1155 = vld [vmem:[#allocation2 + $0x4f] sm:$0xff]
    %v1156 = vld [vmem:[#allocation2 + $0x67] sm:$0xff]
    %v1157 = vld [vmem:[#allocation2 + $0x6f] sm:$0xff]
    %v1158 = vld [vmem:[#allocation2 + $0x87] sm:$0xff]
    %v1159 = vld [vmem:[#allocation2 + $0x8f] sm:$0xff]
    %v1160 = vld [vmem:[#allocation2 + $0xa7] sm:$0xff]
    %v1161 = vld [vmem:[#allocation2 + $0xaf] sm:$0xff]
    %v1162 = vld [vmem:[#allocation2 + $0xc7] sm:$0xff]
    %v1163 = vld [vmem:[#allocation2 + $0xcf] sm:$0xff]
    %v1164 = vld [vmem:[#allocation2 + $0xe7] sm:$0xff]
    %v1165 = vld [vmem:[#allocation2 + $0xef] sm:$0xff]
    %v1166 = vld [vmem:[#allocation2 + $0x107] sm:$0xff]
    %v1167 = vld [vmem:[#allocation2 + $0x10f] sm:$0xff]
    %v1168 = vld [vmem:[#allocation2 + $0x127] sm:$0xff]
    %v1169 = vld [vmem:[#allocation2 + $0x12f] sm:$0xff]
    %v1170 = vld [vmem:[#allocation2 + $0x147] sm:$0xff]
    %v1171 = vld [vmem:[#allocation2 + $0x14f] sm:$0xff]
    %v1172 = vld [vmem:[#allocation2 + $0x167] sm:$0xff]
    %v1173 = vld [vmem:[#allocation2 + $0x16f] sm:$0xff]
    %v1174 = vld [vmem:[#allocation2 + $0x187] sm:$0xff]
    %v1175 = vld [vmem:[#allocation2 + $0x18f] sm:$0xff]
    %v1176 = vld [vmem:[#allocation2 + $0x1a7] sm:$0xff]
    %v1177 = vld [vmem:[#allocation2 + $0x1af] sm:$0xff]
    %v1178 = vld [vmem:[#allocation2 + $0x1c7] sm:$0xff]
    %v1179 = vld [vmem:[#allocation2 + $0x1cf] sm:$0xff]
    %v1180 = vld [vmem:[#allocation2 + $0x1e7] sm:$0xff]
    %v1181 = vld [vmem:[#allocation2 + $0x1ef] sm:$0xff]
    %v1182 = vld [vmem:[#allocation2 + $0x207] sm:$0xff]
    %v1183 = vld [vmem:[#allocation2 + $0x20f] sm:$0xff]
    %v1184 = vld [vmem:[#allocation2 + $0x227] sm:$0xff]
    %v1185 = vld [vmem:[#allocation2 + $0x22f] sm:$0xff]
    %v1186 = vld [vmem:[#allocation2 + $0x247] sm:$0xff]
    %v1187 = vld [vmem:[#allocation2 + $0x24f] sm:$0xff]
    %v1188 = vld [vmem:[#allocation2 + $0x267] sm:$0xff]
    %v1189 = vld [vmem:[#allocation2 + $0x26f] sm:$0xff]
    %v1190 = vld [vmem:[#allocation2 + $0x287] sm:$0xff]
    %v1191 = vld [vmem:[#allocation2 + $0x28f] sm:$0xff]
    %v1192 = vld [vmem:[#allocation2 + $0x2a7] sm:$0xff]
    %v1193 = vld [vmem:[#allocation2 + $0x2af] sm:$0xff]
    %v1194 = vld [vmem:[#allocation2 + $0x2c7] sm:$0xff]
    %v1195 = vld [vmem:[#allocation2 + $0x2cf] sm:$0xff]
    %v1196 = vld [vmem:[#allocation2 + $0x2e7] sm:$0xff]
    %v1197 = vld [vmem:[#allocation2 + $0x2ef] sm:$0xff]
    %v1198 = vld [vmem:[#allocation2 + $0x307] sm:$0xff]
    %v1199 = vld [vmem:[#allocation2 + $0x30f] sm:$0xff]
    %v1200 = vld [vmem:[#allocation2 + $0x327] sm:$0xff]
    %v1201 = vld [vmem:[#allocation2 + $0x32f] sm:$0xff]
    %v1202 = vld [vmem:[#allocation2 + $0x347] sm:$0xff]
    %v1203 = vld [vmem:[#allocation2 + $0x34f] sm:$0xff]
    %v1204 = vld [vmem:[#allocation2 + $0x367] sm:$0xff]
    %v1205 = vld [vmem:[#allocation2 + $0x36f] sm:$0xff]
    %v1206 = vld [vmem:[#allocation2 + $0x387] sm:$0xff]
    %v1207 = vld [vmem:[#allocation2 + $0x38f] sm:$0xff]
    %v1208 = vld [vmem:[#allocation2 + $0x3a7] sm:$0xff]
    %v1209 = vld [vmem:[#allocation2 + $0x3af] sm:$0xff]
    %v1210 = vld [vmem:[#allocation2 + $0x3c7] sm:$0xff]
    %v1211 = vld [vmem:[#allocation2 + $0x3cf] sm:$0xff]
    %v1212 = vld [vmem:[#allocation2 + $0x3e7] sm:$0xff]
    %v1213 = vld [vmem:[#allocation2 + $0x3ef] sm:$0xff]
    %v1214 = vld [vmem:[#allocation2 + $0x407] sm:$0xff]
    %v1215 = vld [vmem:[#allocation2 + $0x40f] sm:$0xff]
    %v1216 = vld [vmem:[#allocation2 + $0x427] sm:$0xff]
    %v1217 = vld [vmem:[#allocation2 + $0x42f] sm:$0xff]
    %v1218 = vld [vmem:[#allocation2 + $0x447] sm:$0xff]
    %v1219 = vld [vmem:[#allocation2 + $0x44f] sm:$0xff]
    %v1220 = vld [vmem:[#allocation2 + $0x467] sm:$0xff]
    %v1221 = vld [vmem:[#allocation2 + $0x46f] sm:$0xff]
    %v1222 = vld [vmem:[#allocation2 + $0x487] sm:$0xff]
    %v1223 = vld [vmem:[#allocation2 + $0x48f] sm:$0xff]
    %v1224 = vld [vmem:[#allocation2 + $0x4a7] sm:$0xff]
    %v1225 = vld [vmem:[#allocation2 + $0x4af] sm:$0xff]
    %v1226 = vld [vmem:[#allocation2 + $0x4c7] sm:$0xff]
    %v1227 = vld [vmem:[#allocation2 + $0x4cf] sm:$0xff]
    %v1228 = vld [vmem:[#allocation2 + $0x4e7] sm:$0xff]
    %v1229 = vld [vmem:[#allocation2 + $0x4ef] sm:$0xff]
    %v1230 = vadd.f32 %v1070, %v1150
    %v1231 = vadd.f32 %v1071, %v1151
    %v1232 = vadd.f32 %v1072, %v1152
    %v1233 = vadd.f32 %v1073, %v1153
    %v1234 = vadd.f32 %v1074, %v1154
    %v1235 = vadd.f32 %v1075, %v1155
    %v1236 = vadd.f32 %v1076, %v1156
    %v1237 = vadd.f32 %v1077, %v1157
    %v1238 = vadd.f32 %v1078, %v1158
    %v1239 = vadd.f32 %v1079, %v1159
    %v1240 = vadd.f32 %v1080, %v1160
    %v1241 = vadd.f32 %v1081, %v1161
    %v1242 = vadd.f32 %v1082, %v1162
    %v1243 = vadd.f32 %v1083, %v1163
    %v1244 = vadd.f32 %v1084, %v1164
    %v1245 = vadd.f32 %v1085, %v1165
    %v1246 = vadd.f32 %v1086, %v1166
    %v1247 = vadd.f32 %v1087, %v1167
    %v1248 = vadd.f32 %v1088, %v1168
    %v1249 = vadd.f32 %v1089, %v1169
    %v1250 = vadd.f32 %v1090, %v1170
    %v1251 = vadd.f32 %v1091, %v1171
    %v1252 = vadd.f32 %v1092, %v1172
    %v1253 = vadd.f32 %v1093, %v1173
    %v1254 = vadd.f32 %v1094, %v1174
    %v1255 = vadd.f32 %v1095, %v1175
    %v1256 = vadd.f32 %v1096, %v1176
    %v1257 = vadd.f32 %v1097, %v1177
    %v1258 = vadd.f32 %v1098, %v1178
    %v1259 = vadd.f32 %v1099, %v1179
    %v1260 = vadd.f32 %v1100, %v1180
    %v1261 = vadd.f32 %v1101, %v1181
    %v1262 = vadd.f32 %v1102, %v1182
    %v1263 = vadd.f32 %v1103, %v1183
    %v1264 = vadd.f32 %v1104, %v1184
    %v1265 = vadd.f32 %v1105, %v1185
    %v1266 = vadd.f32 %v1106, %v1186
    %v1267 = vadd.f32 %v1107, %v1187
    %v1268 = vadd.f32 %v1108, %v1188
    %v1269 = vadd.f32 %v1109, %v1189
    %v1270 = vadd.f32 %v1110, %v1190
    %v1271 = vadd.f32 %v1111, %v1191
    %v1272 = vadd.f32 %v1112, %v1192
    %v1273 = vadd.f32 %v1113, %v1193
    %v1274 = vadd.f32 %v1114, %v1194
    %v1275 = vadd.f32 %v1115, %v1195
    %v1276 = vadd.f32 %v1116, %v1196
    %v1277 = vadd.f32 %v1117, %v1197
    %v1278 = vadd.f32 %v1118, %v1198
    %v1279 = vadd.f32 %v1119, %v1199
    %v1280 = vadd.f32 %v1120, %v1200
    %v1281 = vadd.f32 %v1121, %v1201
    %v1282 = vadd.f32 %v1122, %v1202
    %v1283 = vadd.f32 %v1123, %v1203
    %v1284 = vadd.f32 %v1124, %v1204
    %v1285 = vadd.f32 %v1125, %v1205
    %v1286 = vadd.f32 %v1126, %v1206
    %v1287 = vadd.f32 %v1127, %v1207
    %v1288 = vadd.f32 %v1128, %v1208
    %v1289 = vadd.f32 %v1129, %v1209
    %v1290 = vadd.f32 %v1130, %v1210
    %v1291 = vadd.f32 %v1131, %v1211
    %v1292 = vadd.f32 %v1132, %v1212
    %v1293 = vadd.f32 %v1133, %v1213
    %v1294 = vadd.f32 %v1134, %v1214
    %v1295 = vadd.f32 %v1135, %v1215
    %v1296 = vadd.f32 %v1136, %v1216
    %v1297 = vadd.f32 %v1137, %v1217
    %v1298 = vadd.f32 %v1138, %v1218
    %v1299 = vadd.f32 %v1139, %v1219
    %v1300 = vadd.f32 %v1140, %v1220
    %v1301 = vadd.f32 %v1141, %v1221
    %v1302 = vadd.f32 %v1142, %v1222
    %v1303 = vadd.f32 %v1143, %v1223
    %v1304 = vadd.f32 %v1144, %v1224
    %v1305 = vadd.f32 %v1145, %v1225
    %v1306 = vadd.f32 %v1146, %v1226
    %v1307 = vadd.f32 %v1147, %v1227
    %v1308 = vadd.f32 %v1148, %v1228
    %v1309 = vadd.f32 %v1149, %v1229
    %v1310 = vld [vmem:[#allocation2 + $0x8] sm:$0xff]
    %v1311 = vld [vmem:[#allocation2 + $0x10] sm:$0xff]
    %v1312 = vld [vmem:[#allocation2 + $0x28] sm:$0xff]
    %v1313 = vld [vmem:[#allocation2 + $0x30] sm:$0xff]
    %v1314 = vld [vmem:[#allocation2 + $0x48] sm:$0xff]
    %v1315 = vld [vmem:[#allocation2 + $0x50] sm:$0xff]
    %v1316 = vld [vmem:[#allocation2 + $0x68] sm:$0xff]
    %v1317 = vld [vmem:[#allocation2 + $0x70] sm:$0xff]
    %v1318 = vld [vmem:[#allocation2 + $0x88] sm:$0xff]
    %v1319 = vld [vmem:[#allocation2 + $0x90] sm:$0xff]
    %v1320 = vld [vmem:[#allocation2 + $0xa8] sm:$0xff]
    %v1321 = vld [vmem:[#allocation2 + $0xb0] sm:$0xff]
    %v1322 = vld [vmem:[#allocation2 + $0xc8] sm:$0xff]
    %v1323 = vld [vmem:[#allocation2 + $0xd0] sm:$0xff]
    %v1324 = vld [vmem:[#allocation2 + $0xe8] sm:$0xff]
    %v1325 = vld [vmem:[#allocation2 + $0xf0] sm:$0xff]
    %v1326 = vld [vmem:[#allocation2 + $0x108] sm:$0xff]
    %v1327 = vld [vmem:[#allocation2 + $0x110] sm:$0xff]
    %v1328 = vld [vmem:[#allocation2 + $0x128] sm:$0xff]
    %v1329 = vld [vmem:[#allocation2 + $0x130] sm:$0xff]
    %v1330 = vld [vmem:[#allocation2 + $0x148] sm:$0xff]
    %v1331 = vld [vmem:[#allocation2 + $0x150] sm:$0xff]
    %v1332 = vld [vmem:[#allocation2 + $0x168] sm:$0xff]
    %v1333 = vld [vmem:[#allocation2 + $0x170] sm:$0xff]
    %v1334 = vld [vmem:[#allocation2 + $0x188] sm:$0xff]
    %v1335 = vld [vmem:[#allocation2 + $0x190] sm:$0xff]
    %v1336 = vld [vmem:[#allocation2 + $0x1a8] sm:$0xff]
    %v1337 = vld [vmem:[#allocation2 + $0x1b0] sm:$0xff]
    %v1338 = vld [vmem:[#allocation2 + $0x1c8] sm:$0xff]
    %v1339 = vld [vmem:[#allocation2 + $0x1d0] sm:$0xff]
    %v1340 = vld [vmem:[#allocation2 + $0x1e8] sm:$0xff]
    %v1341 = vld [vmem:[#allocation2 + $0x1f0] sm:$0xff]
    %v1342 = vld [vmem:[#allocation2 + $0x208] sm:$0xff]
    %v1343 = vld [vmem:[#allocation2 + $0x210] sm:$0xff]
    %v1344 = vld [vmem:[#allocation2 + $0x228] sm:$0xff]
    %v1345 = vld [vmem:[#allocation2 + $0x230] sm:$0xff]
    %v1346 = vld [vmem:[#allocation2 + $0x248] sm:$0xff]
    %v1347 = vld [vmem:[#allocation2 + $0x250] sm:$0xff]
    %v1348 = vld [vmem:[#allocation2 + $0x268] sm:$0xff]
    %v1349 = vld [vmem:[#allocation2 + $0x270] sm:$0xff]
    %v1350 = vld [vmem:[#allocation2 + $0x288] sm:$0xff]
    %v1351 = vld [vmem:[#allocation2 + $0x290] sm:$0xff]
    %v1352 = vld [vmem:[#allocation2 + $0x2a8] sm:$0xff]
    %v1353 = vld [vmem:[#allocation2 + $0x2b0] sm:$0xff]
    %v1354 = vld [vmem:[#allocation2 + $0x2c8] sm:$0xff]
    %v1355 = vld [vmem:[#allocation2 + $0x2d0] sm:$0xff]
    %v1356 = vld [vmem:[#allocation2 + $0x2e8] sm:$0xff]
    %v1357 = vld [vmem:[#allocation2 + $0x2f0] sm:$0xff]
    %v1358 = vld [vmem:[#allocation2 + $0x308] sm:$0xff]
    %v1359 = vld [vmem:[#allocation2 + $0x310] sm:$0xff]
    %v1360 = vld [vmem:[#allocation2 + $0x328] sm:$0xff]
    %v1361 = vld [vmem:[#allocation2 + $0x330] sm:$0xff]
    %v1362 = vld [vmem:[#allocation2 + $0x348] sm:$0xff]
    %v1363 = vld [vmem:[#allocation2 + $0x350] sm:$0xff]
    %v1364 = vld [vmem:[#allocation2 + $0x368] sm:$0xff]
    %v1365 = vld [vmem:[#allocation2 + $0x370] sm:$0xff]
    %v1366 = vld [vmem:[#allocation2 + $0x388] sm:$0xff]
    %v1367 = vld [vmem:[#allocation2 + $0x390] sm:$0xff]
    %v1368 = vld [vmem:[#allocation2 + $0x3a8] sm:$0xff]
    %v1369 = vld [vmem:[#allocation2 + $0x3b0] sm:$0xff]
    %v1370 = vld [vmem:[#allocation2 + $0x3c8] sm:$0xff]
    %v1371 = vld [vmem:[#allocation2 + $0x3d0] sm:$0xff]
    %v1372 = vld [vmem:[#allocation2 + $0x3e8] sm:$0xff]
    %v1373 = vld [vmem:[#allocation2 + $0x3f0] sm:$0xff]
    %v1374 = vld [vmem:[#allocation2 + $0x408] sm:$0xff]
    %v1375 = vld [vmem:[#allocation2 + $0x410] sm:$0xff]
    %v1376 = vld [vmem:[#allocation2 + $0x428] sm:$0xff]
    %v1377 = vld [vmem:[#allocation2 + $0x430] sm:$0xff]
    %v1378 = vld [vmem:[#allocation2 + $0x448] sm:$0xff]
    %v1379 = vld [vmem:[#allocation2 + $0x450] sm:$0xff]
    %v1380 = vld [vmem:[#allocation2 + $0x468] sm:$0xff]
    %v1381 = vld [vmem:[#allocation2 + $0x470] sm:$0xff]
    %v1382 = vld [vmem:[#allocation2 + $0x488] sm:$0xff]
    %v1383 = vld [vmem:[#allocation2 + $0x490] sm:$0xff]
    %v1384 = vld [vmem:[#allocation2 + $0x4a8] sm:$0xff]
    %v1385 = vld [vmem:[#allocation2 + $0x4b0] sm:$0xff]
    %v1386 = vld [vmem:[#allocation2 + $0x4c8] sm:$0xff]
    %v1387 = vld [vmem:[#allocation2 + $0x4d0] sm:$0xff]
    %v1388 = vld [vmem:[#allocation2 + $0x4e8] sm:$0xff]
    %v1389 = vld [vmem:[#allocation2 + $0x4f0] sm:$0xff]
    %v1390 = vadd.f32 %v1230, %v1310
    %v1391 = vadd.f32 %v1231, %v1311
    %v1392 = vadd.f32 %v1232, %v1312
    %v1393 = vadd.f32 %v1233, %v1313
    %v1394 = vadd.f32 %v1234, %v1314
    %v1395 = vadd.f32 %v1235, %v1315
    %v1396 = vadd.f32 %v1236, %v1316
    %v1397 = vadd.f32 %v1237, %v1317
    %v1398 = vadd.f32 %v1238, %v1318
    %v1399 = vadd.f32 %v1239, %v1319
    %v1400 = vadd.f32 %v1240, %v1320
    %v1401 = vadd.f32 %v1241, %v1321
    %v1402 = vadd.f32 %v1242, %v1322
    %v1403 = vadd.f32 %v1243, %v1323
    %v1404 = vadd.f32 %v1244, %v1324
    %v1405 = vadd.f32 %v1245, %v1325
    %v1406 = vadd.f32 %v1246, %v1326
    %v1407 = vadd.f32 %v1247, %v1327
    %v1408 = vadd.f32 %v1248, %v1328
    %v1409 = vadd.f32 %v1249, %v1329
    %v1410 = vadd.f32 %v1250, %v1330
    %v1411 = vadd.f32 %v1251, %v1331
    %v1412 = vadd.f32 %v1252, %v1332
    %v1413 = vadd.f32 %v1253, %v1333
    %v1414 = vadd.f32 %v1254, %v1334
    %v1415 = vadd.f32 %v1255, %v1335
    %v1416 = vadd.f32 %v1256, %v1336
    %v1417 = vadd.f32 %v1257, %v1337
    %v1418 = vadd.f32 %v1258, %v1338
    %v1419 = vadd.f32 %v1259, %v1339
    %v1420 = vadd.f32 %v1260, %v1340
    %v1421 = vadd.f32 %v1261, %v1341
    %v1422 = vadd.f32 %v1262, %v1342
    %v1423 = vadd.f32 %v1263, %v1343
    %v1424 = vadd.f32 %v1264, %v1344
    %v1425 = vadd.f32 %v1265, %v1345
    %v1426 = vadd.f32 %v1266, %v1346
    %v1427 = vadd.f32 %v1267, %v1347
    %v1428 = vadd.f32 %v1268, %v1348
    %v1429 = vadd.f32 %v1269, %v1349
    %v1430 = vadd.f32 %v1270, %v1350
    %v1431 = vadd.f32 %v1271, %v1351
    %v1432 = vadd.f32 %v1272, %v1352
    %v1433 = vadd.f32 %v1273, %v1353
    %v1434 = vadd.f32 %v1274, %v1354
    %v1435 = vadd.f32 %v1275, %v1355
    %v1436 = vadd.f32 %v1276, %v1356
    %v1437 = vadd.f32 %v1277, %v1357
    %v1438 = vadd.f32 %v1278, %v1358
    %v1439 = vadd.f32 %v1279, %v1359
    %v1440 = vadd.f32 %v1280, %v1360
    %v1441 = vadd.f32 %v1281, %v1361
    %v1442 = vadd.f32 %v1282, %v1362
    %v1443 = vadd.f32 %v1283, %v1363
    %v1444 = vadd.f32 %v1284, %v1364
    %v1445 = vadd.f32 %v1285, %v1365
    %v1446 = vadd.f32 %v1286, %v1366
    %v1447 = vadd.f32 %v1287, %v1367
    %v1448 = vadd.f32 %v1288, %v1368
    %v1449 = vadd.f32 %v1289, %v1369
    %v1450 = vadd.f32 %v1290, %v1370
    %v1451 = vadd.f32 %v1291, %v1371
    %v1452 = vadd.f32 %v1292, %v1372
    %v1453 = vadd.f32 %v1293, %v1373
    %v1454 = vadd.f32 %v1294, %v1374
    %v1455 = vadd.f32 %v1295, %v1375
    %v1456 = vadd.f32 %v1296, %v1376
    %v1457 = vadd.f32 %v1297, %v1377
    %v1458 = vadd.f32 %v1298, %v1378
    %v1459 = vadd.f32 %v1299, %v1379
    %v1460 = vadd.f32 %v1300, %v1380
    %v1461 = vadd.f32 %v1301, %v1381
    %v1462 = vadd.f32 %v1302, %v1382
    %v1463 = vadd.f32 %v1303, %v1383
    %v1464 = vadd.f32 %v1304, %v1384
    %v1465 = vadd.f32 %v1305, %v1385
    %v1466 = vadd.f32 %v1306, %v1386
    %v1467 = vadd.f32 %v1307, %v1387
    %v1468 = vadd.f32 %v1308, %v1388
    %v1469 = vadd.f32 %v1309, %v1389
    %v1470 = vld [vmem:[#allocation2 + $0x9] sm:$0xff]
    %v1471 = vld [vmem:[#allocation2 + $0x11] sm:$0xff]
    %v1472 = vld [vmem:[#allocation2 + $0x29] sm:$0xff]
    %v1473 = vld [vmem:[#allocation2 + $0x31] sm:$0xff]
    %v1474 = vld [vmem:[#allocation2 + $0x49] sm:$0xff]
    %v1475 = vld [vmem:[#allocation2 + $0x51] sm:$0xff]
    %v1476 = vld [vmem:[#allocation2 + $0x69] sm:$0xff]
    %v1477 = vld [vmem:[#allocation2 + $0x71] sm:$0xff]
    %v1478 = vld [vmem:[#allocation2 + $0x89] sm:$0xff]
    %v1479 = vld [vmem:[#allocation2 + $0x91] sm:$0xff]
    %v1480 = vld [vmem:[#allocation2 + $0xa9] sm:$0xff]
    %v1481 = vld [vmem:[#allocation2 + $0xb1] sm:$0xff]
    %v1482 = vld [vmem:[#allocation2 + $0xc9] sm:$0xff]
    %v1483 = vld [vmem:[#allocation2 + $0xd1] sm:$0xff]
    %v1484 = vld [vmem:[#allocation2 + $0xe9] sm:$0xff]
    %v1485 = vld [vmem:[#allocation2 + $0xf1] sm:$0xff]
    %v1486 = vld [vmem:[#allocation2 + $0x109] sm:$0xff]
    %v1487 = vld [vmem:[#allocation2 + $0x111] sm:$0xff]
    %v1488 = vld [vmem:[#allocation2 + $0x129] sm:$0xff]
    %v1489 = vld [vmem:[#allocation2 + $0x131] sm:$0xff]
    %v1490 = vld [vmem:[#allocation2 + $0x149] sm:$0xff]
    %v1491 = vld [vmem:[#allocation2 + $0x151] sm:$0xff]
    %v1492 = vld [vmem:[#allocation2 + $0x169] sm:$0xff]
    %v1493 = vld [vmem:[#allocation2 + $0x171] sm:$0xff]
    %v1494 = vld [vmem:[#allocation2 + $0x189] sm:$0xff]
    %v1495 = vld [vmem:[#allocation2 + $0x191] sm:$0xff]
    %v1496 = vld [vmem:[#allocation2 + $0x1a9] sm:$0xff]
    %v1497 = vld [vmem:[#allocation2 + $0x1b1] sm:$0xff]
    %v1498 = vld [vmem:[#allocation2 + $0x1c9] sm:$0xff]
    %v1499 = vld [vmem:[#allocation2 + $0x1d1] sm:$0xff]
    %v1500 = vld [vmem:[#allocation2 + $0x1e9] sm:$0xff]
    %v1501 = vld [vmem:[#allocation2 + $0x1f1] sm:$0xff]
    %v1502 = vld [vmem:[#allocation2 + $0x209] sm:$0xff]
    %v1503 = vld [vmem:[#allocation2 + $0x211] sm:$0xff]
    %v1504 = vld [vmem:[#allocation2 + $0x229] sm:$0xff]
    %v1505 = vld [vmem:[#allocation2 + $0x231] sm:$0xff]
    %v1506 = vld [vmem:[#allocation2 + $0x249] sm:$0xff]
    %v1507 = vld [vmem:[#allocation2 + $0x251] sm:$0xff]
    %v1508 = vld [vmem:[#allocation2 + $0x269] sm:$0xff]
    %v1509 = vld [vmem:[#allocation2 + $0x271] sm:$0xff]
    %v1510 = vld [vmem:[#allocation2 + $0x289] sm:$0xff]
    %v1511 = vld [vmem:[#allocation2 + $0x291] sm:$0xff]
    %v1512 = vld [vmem:[#allocation2 + $0x2a9] sm:$0xff]
    %v1513 = vld [vmem:[#allocation2 + $0x2b1] sm:$0xff]
    %v1514 = vld [vmem:[#allocation2 + $0x2c9] sm:$0xff]
    %v1515 = vld [vmem:[#allocation2 + $0x2d1] sm:$0xff]
    %v1516 = vld [vmem:[#allocation2 + $0x2e9] sm:$0xff]
    %v1517 = vld [vmem:[#allocation2 + $0x2f1] sm:$0xff]
    %v1518 = vld [vmem:[#allocation2 + $0x309] sm:$0xff]
    %v1519 = vld [vmem:[#allocation2 + $0x311] sm:$0xff]
    %v1520 = vld [vmem:[#allocation2 + $0x329] sm:$0xff]
    %v1521 = vld [vmem:[#allocation2 + $0x331] sm:$0xff]
    %v1522 = vld [vmem:[#allocation2 + $0x349] sm:$0xff]
    %v1523 = vld [vmem:[#allocation2 + $0x351] sm:$0xff]
    %v1524 = vld [vmem:[#allocation2 + $0x369] sm:$0xff]
    %v1525 = vld [vmem:[#allocation2 + $0x371] sm:$0xff]
    %v1526 = vld [vmem:[#allocation2 + $0x389] sm:$0xff]
    %v1527 = vld [vmem:[#allocation2 + $0x391] sm:$0xff]
    %v1528 = vld [vmem:[#allocation2 + $0x3a9] sm:$0xff]
    %v1529 = vld [vmem:[#allocation2 + $0x3b1] sm:$0xff]
    %v1530 = vld [vmem:[#allocation2 + $0x3c9] sm:$0xff]
    %v1531 = vld [vmem:[#allocation2 + $0x3d1] sm:$0xff]
    %v1532 = vld [vmem:[#allocation2 + $0x3e9] sm:$0xff]
    %v1533 = vld [vmem:[#allocation2 + $0x3f1] sm:$0xff]
    %v1534 = vld [vmem:[#allocation2 + $0x409] sm:$0xff]
    %v1535 = vld [vmem:[#allocation2 + $0x411] sm:$0xff]
    %v1536 = vld [vmem:[#allocation2 + $0x429] sm:$0xff]
    %v1537 = vld [vmem:[#allocation2 + $0x431] sm:$0xff]
    %v1538 = vld [vmem:[#allocation2 + $0x449] sm:$0xff]
    %v1539 = vld [vmem:[#allocation2 + $0x451] sm:$0xff]
    %v1540 = vld [vmem:[#allocation2 + $0x469] sm:$0xff]
    %v1541 = vld [vmem:[#allocation2 + $0x471] sm:$0xff]
    %v1542 = vld [vmem:[#allocation2 + $0x489] sm:$0xff]
    %v1543 = vld [vmem:[#allocation2 + $0x491] sm:$0xff]
    %v1544 = vld [vmem:[#allocation2 + $0x4a9] sm:$0xff]
    %v1545 = vld [vmem:[#allocation2 + $0x4b1] sm:$0xff]
    %v1546 = vld [vmem:[#allocation2 + $0x4c9] sm:$0xff]
    %v1547 = vld [vmem:[#allocation2 + $0x4d1] sm:$0xff]
    %v1548 = vld [vmem:[#allocation2 + $0x4e9] sm:$0xff]
    %v1549 = vld [vmem:[#allocation2 + $0x4f1] sm:$0xff]
    %v1550 = vadd.f32 %v1390, %v1470
    %v1551 = vadd.f32 %v1391, %v1471
    %v1552 = vadd.f32 %v1392, %v1472
    %v1553 = vadd.f32 %v1393, %v1473
    %v1554 = vadd.f32 %v1394, %v1474
    %v1555 = vadd.f32 %v1395, %v1475
    %v1556 = vadd.f32 %v1396, %v1476
    %v1557 = vadd.f32 %v1397, %v1477
    %v1558 = vadd.f32 %v1398, %v1478
    %v1559 = vadd.f32 %v1399, %v1479
    %v1560 = vadd.f32 %v1400, %v1480
    %v1561 = vadd.f32 %v1401, %v1481
    %v1562 = vadd.f32 %v1402, %v1482
    %v1563 = vadd.f32 %v1403, %v1483
    %v1564 = vadd.f32 %v1404, %v1484
    %v1565 = vadd.f32 %v1405, %v1485
    %v1566 = vadd.f32 %v1406, %v1486
    %v1567 = vadd.f32 %v1407, %v1487
    %v1568 = vadd.f32 %v1408, %v1488
    %v1569 = vadd.f32 %v1409, %v1489
    %v1570 = vadd.f32 %v1410, %v1490
    %v1571 = vadd.f32 %v1411, %v1491
    %v1572 = vadd.f32 %v1412, %v1492
    %v1573 = vadd.f32 %v1413, %v1493
    %v1574 = vadd.f32 %v1414, %v1494
    %v1575 = vadd.f32 %v1415, %v1495
    %v1576 = vadd.f32 %v1416, %v1496
    %v1577 = vadd.f32 %v1417, %v1497
    %v1578 = vadd.f32 %v1418, %v1498
    %v1579 = vadd.f32 %v1419, %v1499
    %v1580 = vadd.f32 %v1420, %v1500
    %v1581 = vadd.f32 %v1421, %v1501
    %v1582 = vadd.f32 %v1422, %v1502
    %v1583 = vadd.f32 %v1423, %v1503
    %v1584 = vadd.f32 %v1424, %v1504
    %v1585 = vadd.f32 %v1425, %v1505
    %v1586 = vadd.f32 %v1426, %v1506
    %v1587 = vadd.f32 %v1427, %v1507
    %v1588 = vadd.f32 %v1428, %v1508
    %v1589 = vadd.f32 %v1429, %v1509
    %v1590 = vadd.f32 %v1430, %v1510
    %v1591 = vadd.f32 %v1431, %v1511
    %v1592 = vadd.f32 %v1432, %v1512
    %v1593 = vadd.f32 %v1433, %v1513
    %v1594 = vadd.f32 %v1434, %v1514
    %v1595 = vadd.f32 %v1435, %v1515
    %v1596 = vadd.f32 %v1436, %v1516
    %v1597 = vadd.f32 %v1437, %v1517
    %v1598 = vadd.f32 %v1438, %v1518
    %v1599 = vadd.f32 %v1439, %v1519
    %v1600 = vadd.f32 %v1440, %v1520
    %v1601 = vadd.f32 %v1441, %v1521
    %v1602 = vadd.f32 %v1442, %v1522
    %v1603 = vadd.f32 %v1443, %v1523
    %v1604 = vadd.f32 %v1444, %v1524
    %v1605 = vadd.f32 %v1445, %v1525
    %v1606 = vadd.f32 %v1446, %v1526
    %v1607 = vadd.f32 %v1447, %v1527
    %v1608 = vadd.f32 %v1448, %v1528
    %v1609 = vadd.f32 %v1449, %v1529
    %v1610 = vadd.f32 %v1450, %v1530
    %v1611 = vadd.f32 %v1451, %v1531
    %v1612 = vadd.f32 %v1452, %v1532
    %v1613 = vadd.f32 %v1453, %v1533
    %v1614 = vadd.f32 %v1454, %v1534
    %v1615 = vadd.f32 %v1455, %v1535
    %v1616 = vadd.f32 %v1456, %v1536
    %v1617 = vadd.f32 %v1457, %v1537
    %v1618 = vadd.f32 %v1458, %v1538
    %v1619 = vadd.f32 %v1459, %v1539
    %v1620 = vadd.f32 %v1460, %v1540
    %v1621 = vadd.f32 %v1461, %v1541
    %v1622 = vadd.f32 %v1462, %v1542
    %v1623 = vadd.f32 %v1463, %v1543
    %v1624 = vadd.f32 %v1464, %v1544
    %v1625 = vadd.f32 %v1465, %v1545
    %v1626 = vadd.f32 %v1466, %v1546
    %v1627 = vadd.f32 %v1467, %v1547
    %v1628 = vadd.f32 %v1468, %v1548
    %v1629 = vadd.f32 %v1469, %v1549
    %v1630 = vld [vmem:[#allocation2 + $0xa] sm:$0xff]
    %v1631 = vld [vmem:[#allocation2 + $0x12] sm:$0xff]
    %v1632 = vld [vmem:[#allocation2 + $0x2a] sm:$0xff]
    %v1633 = vld [vmem:[#allocation2 + $0x32] sm:$0xff]
    %v1634 = vld [vmem:[#allocation2 + $0x4a] sm:$0xff]
    %v1635 = vld [vmem:[#allocation2 + $0x52] sm:$0xff]
    %v1636 = vld [vmem:[#allocation2 + $0x6a] sm:$0xff]
    %v1637 = vld [vmem:[#allocation2 + $0x72] sm:$0xff]
    %v1638 = vld [vmem:[#allocation2 + $0x8a] sm:$0xff]
    %v1639 = vld [vmem:[#allocation2 + $0x92] sm:$0xff]
    %v1640 = vld [vmem:[#allocation2 + $0xaa] sm:$0xff]
    %v1641 = vld [vmem:[#allocation2 + $0xb2] sm:$0xff]
    %v1642 = vld [vmem:[#allocation2 + $0xca] sm:$0xff]
    %v1643 = vld [vmem:[#allocation2 + $0xd2] sm:$0xff]
    %v1644 = vld [vmem:[#allocation2 + $0xea] sm:$0xff]
    %v1645 = vld [vmem:[#allocation2 + $0xf2] sm:$0xff]
    %v1646 = vld [vmem:[#allocation2 + $0x10a] sm:$0xff]
    %v1647 = vld [vmem:[#allocation2 + $0x112] sm:$0xff]
    %v1648 = vld [vmem:[#allocation2 + $0x12a] sm:$0xff]
    %v1649 = vld [vmem:[#allocation2 + $0x132] sm:$0xff]
    %v1650 = vld [vmem:[#allocation2 + $0x14a] sm:$0xff]
    %v1651 = vld [vmem:[#allocation2 + $0x152] sm:$0xff]
    %v1652 = vld [vmem:[#allocation2 + $0x16a] sm:$0xff]
    %v1653 = vld [vmem:[#allocation2 + $0x172] sm:$0xff]
    %v1654 = vld [vmem:[#allocation2 + $0x18a] sm:$0xff]
    %v1655 = vld [vmem:[#allocation2 + $0x192] sm:$0xff]
    %v1656 = vld [vmem:[#allocation2 + $0x1aa] sm:$0xff]
    %v1657 = vld [vmem:[#allocation2 + $0x1b2] sm:$0xff]
    %v1658 = vld [vmem:[#allocation2 + $0x1ca] sm:$0xff]
    %v1659 = vld [vmem:[#allocation2 + $0x1d2] sm:$0xff]
    %v1660 = vld [vmem:[#allocation2 + $0x1ea] sm:$0xff]
    %v1661 = vld [vmem:[#allocation2 + $0x1f2] sm:$0xff]
    %v1662 = vld [vmem:[#allocation2 + $0x20a] sm:$0xff]
    %v1663 = vld [vmem:[#allocation2 + $0x212] sm:$0xff]
    %v1664 = vld [vmem:[#allocation2 + $0x22a] sm:$0xff]
    %v1665 = vld [vmem:[#allocation2 + $0x232] sm:$0xff]
    %v1666 = vld [vmem:[#allocation2 + $0x24a] sm:$0xff]
    %v1667 = vld [vmem:[#allocation2 + $0x252] sm:$0xff]
    %v1668 = vld [vmem:[#allocation2 + $0x26a] sm:$0xff]
    %v1669 = vld [vmem:[#allocation2 + $0x272] sm:$0xff]
    %v1670 = vld [vmem:[#allocation2 + $0x28a] sm:$0xff]
    %v1671 = vld [vmem:[#allocation2 + $0x292] sm:$0xff]
    %v1672 = vld [vmem:[#allocation2 + $0x2aa] sm:$0xff]
    %v1673 = vld [vmem:[#allocation2 + $0x2b2] sm:$0xff]
    %v1674 = vld [vmem:[#allocation2 + $0x2ca] sm:$0xff]
    %v1675 = vld [vmem:[#allocation2 + $0x2d2] sm:$0xff]
    %v1676 = vld [vmem:[#allocation2 + $0x2ea] sm:$0xff]
    %v1677 = vld [vmem:[#allocation2 + $0x2f2] sm:$0xff]
    %v1678 = vld [vmem:[#allocation2 + $0x30a] sm:$0xff]
    %v1679 = vld [vmem:[#allocation2 + $0x312] sm:$0xff]
    %v1680 = vld [vmem:[#allocation2 + $0x32a] sm:$0xff]
    %v1681 = vld [vmem:[#allocation2 + $0x332] sm:$0xff]
    %v1682 = vld [vmem:[#allocation2 + $0x34a] sm:$0xff]
    %v1683 = vld [vmem:[#allocation2 + $0x352] sm:$0xff]
    %v1684 = vld [vmem:[#allocation2 + $0x36a] sm:$0xff]
    %v1685 = vld [vmem:[#allocation2 + $0x372] sm:$0xff]
    %v1686 = vld [vmem:[#allocation2 + $0x38a] sm:$0xff]
    %v1687 = vld [vmem:[#allocation2 + $0x392] sm:$0xff]
    %v1688 = vld [vmem:[#allocation2 + $0x3aa] sm:$0xff]
    %v1689 = vld [vmem:[#allocation2 + $0x3b2] sm:$0xff]
    %v1690 = vld [vmem:[#allocation2 + $0x3ca] sm:$0xff]
    %v1691 = vld [vmem:[#allocation2 + $0x3d2] sm:$0xff]
    %v1692 = vld [vmem:[#allocation2 + $0x3ea] sm:$0xff]
    %v1693 = vld [vmem:[#allocation2 + $0x3f2] sm:$0xff]
    %v1694 = vld [vmem:[#allocation2 + $0x40a] sm:$0xff]
    %v1695 = vld [vmem:[#allocation2 + $0x412] sm:$0xff]
    %v1696 = vld [vmem:[#allocation2 + $0x42a] sm:$0xff]
    %v1697 = vld [vmem:[#allocation2 + $0x432] sm:$0xff]
    %v1698 = vld [vmem:[#allocation2 + $0x44a] sm:$0xff]
    %v1699 = vld [vmem:[#allocation2 + $0x452] sm:$0xff]
    %v1700 = vld [vmem:[#allocation2 + $0x46a] sm:$0xff]
    %v1701 = vld [vmem:[#allocation2 + $0x472] sm:$0xff]
    %v1702 = vld [vmem:[#allocation2 + $0x48a] sm:$0xff]
    %v1703 = vld [vmem:[#allocation2 + $0x492] sm:$0xff]
    %v1704 = vld [vmem:[#allocation2 + $0x4aa] sm:$0xff]
    %v1705 = vld [vmem:[#allocation2 + $0x4b2] sm:$0xff]
    %v1706 = vld [vmem:[#allocation2 + $0x4ca] sm:$0xff]
    %v1707 = vld [vmem:[#allocation2 + $0x4d2] sm:$0xff]
    %v1708 = vld [vmem:[#allocation2 + $0x4ea] sm:$0xff]
    %v1709 = vld [vmem:[#allocation2 + $0x4f2] sm:$0xff]
    %v1710 = vadd.f32 %v1550, %v1630
    %v1711 = vadd.f32 %v1551, %v1631
    %v1712 = vadd.f32 %v1552, %v1632
    %v1713 = vadd.f32 %v1553, %v1633
    %v1714 = vadd.f32 %v1554, %v1634
    %v1715 = vadd.f32 %v1555, %v1635
    %v1716 = vadd.f32 %v1556, %v1636
    %v1717 = vadd.f32 %v1557, %v1637
    %v1718 = vadd.f32 %v1558, %v1638
    %v1719 = vadd.f32 %v1559, %v1639
    %v1720 = vadd.f32 %v1560, %v1640
    %v1721 = vadd.f32 %v1561, %v1641
    %v1722 = vadd.f32 %v1562, %v1642
    %v1723 = vadd.f32 %v1563, %v1643
    %v1724 = vadd.f32 %v1564, %v1644
    %v1725 = vadd.f32 %v1565, %v1645
    %v1726 = vadd.f32 %v1566, %v1646
    %v1727 = vadd.f32 %v1567, %v1647
    %v1728 = vadd.f32 %v1568, %v1648
    %v1729 = vadd.f32 %v1569, %v1649
    %v1730 = vadd.f32 %v1570, %v1650
    %v1731 = vadd.f32 %v1571, %v1651
    %v1732 = vadd.f32 %v1572, %v1652
    %v1733 = vadd.f32 %v1573, %v1653
    %v1734 = vadd.f32 %v1574, %v1654
    %v1735 = vadd.f32 %v1575, %v1655
    %v1736 = vadd.f32 %v1576, %v1656
    %v1737 = vadd.f32 %v1577, %v1657
    %v1738 = vadd.f32 %v1578, %v1658
    %v1739 = vadd.f32 %v1579, %v1659
    %v1740 = vadd.f32 %v1580, %v1660
    %v1741 = vadd.f32 %v1581, %v1661
    %v1742 = vadd.f32 %v1582, %v1662
    %v1743 = vadd.f32 %v1583, %v1663
    %v1744 = vadd.f32 %v1584, %v1664
    %v1745 = vadd.f32 %v1585, %v1665
    %v1746 = vadd.f32 %v1586, %v1666
    %v1747 = vadd.f32 %v1587, %v1667
    %v1748 = vadd.f32 %v1588, %v1668
    %v1749 = vadd.f32 %v1589, %v1669
    %v1750 = vadd.f32 %v1590, %v1670
    %v1751 = vadd.f32 %v1591, %v1671
    %v1752 = vadd.f32 %v1592, %v1672
    %v1753 = vadd.f32 %v1593, %v1673
    %v1754 = vadd.f32 %v1594, %v1674
    %v1755 = vadd.f32 %v1595, %v1675
    %v1756 = vadd.f32 %v1596, %v1676
    %v1757 = vadd.f32 %v1597, %v1677
    %v1758 = vadd.f32 %v1598, %v1678
    %v1759 = vadd.f32 %v1599, %v1679
    %v1760 = vadd.f32 %v1600, %v1680
    %v1761 = vadd.f32 %v1601, %v1681
    %v1762 = vadd.f32 %v1602, %v1682
    %v1763 = vadd.f32 %v1603, %v1683
    %v1764 = vadd.f32 %v1604, %v1684
    %v1765 = vadd.f32 %v1605, %v1685
    %v1766 = vadd.f32 %v1606, %v1686
    %v1767 = vadd.f32 %v1607, %v1687
    %v1768 = vadd.f32 %v1608, %v1688
    %v1769 = vadd.f32 %v1609, %v1689
    %v1770 = vadd.f32 %v1610, %v1690
    %v1771 = vadd.f32 %v1611, %v1691
    %v1772 = vadd.f32 %v1612, %v1692
    %v1773 = vadd.f32 %v1613, %v1693
    %v1774 = vadd.f32 %v1614, %v1694
    %v1775 = vadd.f32 %v1615, %v1695
    %v1776 = vadd.f32 %v1616, %v1696
    %v1777 = vadd.f32 %v1617, %v1697
    %v1778 = vadd.f32 %v1618, %v1698
    %v1779 = vadd.f32 %v1619, %v1699
    %v1780 = vadd.f32 %v1620, %v1700
    %v1781 = vadd.f32 %v1621, %v1701
    %v1782 = vadd.f32 %v1622, %v1702
    %v1783 = vadd.f32 %v1623, %v1703
    %v1784 = vadd.f32 %v1624, %v1704
    %v1785 = vadd.f32 %v1625, %v1705
    %v1786 = vadd.f32 %v1626, %v1706
    %v1787 = vadd.f32 %v1627, %v1707
    %v1788 = vadd.f32 %v1628, %v1708
    %v1789 = vadd.f32 %v1629, %v1709
    %1870 = vrot.lane.b32.xlu0 %v1710, 2
    %v1871 = vpop.permute.xlu0 %1870
    %1872 = vrot.lane.b32.xlu0 %v1711, 2
    %v1873 = vpop.permute.xlu0 %1872
    %1874 = vrot.lane.b32.xlu0 %v1712, 2
    %v1875 = vpop.permute.xlu0 %1874
    %1876 = vrot.lane.b32.xlu0 %v1713, 2
    %v1877 = vpop.permute.xlu0 %1876
    %1878 = vrot.lane.b32.xlu0 %v1714, 2
    %v1879 = vpop.permute.xlu0 %1878
    %1880 = vrot.lane.b32.xlu0 %v1715, 2
    %v1881 = vpop.permute.xlu0 %1880
    %1882 = vrot.lane.b32.xlu0 %v1716, 2
    %v1883 = vpop.permute.xlu0 %1882
    %1884 = vrot.lane.b32.xlu0 %v1717, 2
    %v1885 = vpop.permute.xlu0 %1884
    %1886 = vrot.lane.b32.xlu0 %v1718, 2
    %v1887 = vpop.permute.xlu0 %1886
    %1888 = vrot.lane.b32.xlu0 %v1719, 2
    %v1889 = vpop.permute.xlu0 %1888
    %1890 = vrot.lane.b32.xlu0 %v1720, 2
    %v1891 = vpop.permute.xlu0 %1890
    %1892 = vrot.lane.b32.xlu0 %v1721, 2
    %v1893 = vpop.permute.xlu0 %1892
    %1894 = vrot.lane.b32.xlu0 %v1722, 2
    %v1895 = vpop.permute.xlu0 %1894
    %1896 = vrot.lane.b32.xlu0 %v1723, 2
    %v1897 = vpop.permute.xlu0 %1896
    %1898 = vrot.lane.b32.xlu0 %v1724, 2
    %v1899 = vpop.permute.xlu0 %1898
    %1900 = vrot.lane.b32.xlu0 %v1725, 2
    %v1901 = vpop.permute.xlu0 %1900
    %1902 = vrot.lane.b32.xlu0 %v1726, 2
    %v1903 = vpop.permute.xlu0 %1902
    %1904 = vrot.lane.b32.xlu0 %v1727, 2
    %v1905 = vpop.permute.xlu0 %1904
    %1906 = vrot.lane.b32.xlu0 %v1728, 2
    %v1907 = vpop.permute.xlu0 %1906
    %1908 = vrot.lane.b32.xlu0 %v1729, 2
    %v1909 = vpop.permute.xlu0 %1908
    %1910 = vrot.lane.b32.xlu0 %v1730, 2
    %v1911 = vpop.permute.xlu0 %1910
    %1912 = vrot.lane.b32.xlu0 %v1731, 2
    %v1913 = vpop.permute.xlu0 %1912
    %1914 = vrot.lane.b32.xlu0 %v1732, 2
    %v1915 = vpop.permute.xlu0 %1914
    %1916 = vrot.lane.b32.xlu0 %v1733, 2
    %v1917 = vpop.permute.xlu0 %1916
    %1918 = vrot.lane.b32.xlu0 %v1734, 2
    %v1919 = vpop.permute.xlu0 %1918
    %1920 = vrot.lane.b32.xlu0 %v1735, 2
    %v1921 = vpop.permute.xlu0 %1920
    %1922 = vrot.lane.b32.xlu0 %v1736, 2
    %v1923 = vpop.permute.xlu0 %1922
    %1924 = vrot.lane.b32.xlu0 %v1737, 2
    %v1925 = vpop.permute.xlu0 %1924
    %1926 = vrot.lane.b32.xlu0 %v1738, 2
    %v1927 = vpop.permute.xlu0 %1926
    %1928 = vrot.lane.b32.xlu0 %v1739, 2
    %v1929 = vpop.permute.xlu0 %1928
    %1930 = vrot.lane.b32.xlu0 %v1740, 2
    %v1931 = vpop.permute.xlu0 %1930
    %1932 = vrot.lane.b32.xlu0 %v1741, 2
    %v1933 = vpop.permute.xlu0 %1932
    %1934 = vrot.lane.b32.xlu0 %v1742, 2
    %v1935 = vpop.permute.xlu0 %1934
    %1936 = vrot.lane.b32.xlu0 %v1743, 2
    %v1937 = vpop.permute.xlu0 %1936
    %1938 = vrot.lane.b32.xlu0 %v1744, 2
    %v1939 = vpop.permute.xlu0 %1938
    %1940 = vrot.lane.b32.xlu0 %v1745, 2
    %v1941 = vpop.permute.xlu0 %1940
    %1942 = vrot.lane.b32.xlu0 %v1746, 2
    %v1943 = vpop.permute.xlu0 %1942
    %1944 = vrot.lane.b32.xlu0 %v1747, 2
    %v1945 = vpop.permute.xlu0 %1944
    %1946 = vrot.lane.b32.xlu0 %v1748, 2
    %v1947 = vpop.permute.xlu0 %1946
    %1948 = vrot.lane.b32.xlu0 %v1749, 2
    %v1949 = vpop.permute.xlu0 %1948
    %1950 = vrot.lane.b32.xlu0 %v1750, 2
    %v1951 = vpop.permute.xlu0 %1950
    %1952 = vrot.lane.b32.xlu0 %v1751, 2
    %v1953 = vpop.permute.xlu0 %1952
    %1954 = vrot.lane.b32.xlu0 %v1752, 2
    %v1955 = vpop.permute.xlu0 %1954
    %1956 = vrot.lane.b32.xlu0 %v1753, 2
    %v1957 = vpop.permute.xlu0 %1956
    %1958 = vrot.lane.b32.xlu0 %v1754, 2
    %v1959 = vpop.permute.xlu0 %1958
    %1960 = vrot.lane.b32.xlu0 %v1755, 2
    %v1961 = vpop.permute.xlu0 %1960
    %1962 = vrot.lane.b32.xlu0 %v1756, 2
    %v1963 = vpop.permute.xlu0 %1962
    %1964 = vrot.lane.b32.xlu0 %v1757, 2
    %v1965 = vpop.permute.xlu0 %1964
    %1966 = vrot.lane.b32.xlu0 %v1758, 2
    %v1967 = vpop.permute.xlu0 %1966
    %1968 = vrot.lane.b32.xlu0 %v1759, 2
    %v1969 = vpop.permute.xlu0 %1968
    %1970 = vrot.lane.b32.xlu0 %v1760, 2
    %v1971 = vpop.permute.xlu0 %1970
    %1972 = vrot.lane.b32.xlu0 %v1761, 2
    %v1973 = vpop.permute.xlu0 %1972
    %1974 = vrot.lane.b32.xlu0 %v1762, 2
    %v1975 = vpop.permute.xlu0 %1974
    %1976 = vrot.lane.b32.xlu0 %v1763, 2
    %v1977 = vpop.permute.xlu0 %1976
    %1978 = vrot.lane.b32.xlu0 %v1764, 2
    %v1979 = vpop.permute.xlu0 %1978
    %1980 = vrot.lane.b32.xlu0 %v1765, 2
    %v1981 = vpop.permute.xlu0 %1980
    %1982 = vrot.lane.b32.xlu0 %v1766, 2
    %v1983 = vpop.permute.xlu0 %1982
    %1984 = vrot.lane.b32.xlu0 %v1767, 2
    %v1985 = vpop.permute.xlu0 %1984
    %1986 = vrot.lane.b32.xlu0 %v1768, 2
    %v1987 = vpop.permute.xlu0 %1986
    %1988 = vrot.lane.b32.xlu0 %v1769, 2
    %v1989 = vpop.permute.xlu0 %1988
    %1990 = vrot.lane.b32.xlu0 %v1770, 2
    %v1991 = vpop.permute.xlu0 %1990
    %1992 = vrot.lane.b32.xlu0 %v1771, 2
    %v1993 = vpop.permute.xlu0 %1992
    %1994 = vrot.lane.b32.xlu0 %v1772, 2
    %v1995 = vpop.permute.xlu0 %1994
    %1996 = vrot.lane.b32.xlu0 %v1773, 2
    %v1997 = vpop.permute.xlu0 %1996
    %1998 = vrot.lane.b32.xlu0 %v1774, 2
    %v1999 = vpop.permute.xlu0 %1998
    %2000 = vrot.lane.b32.xlu0 %v1775, 2
    %v2001 = vpop.permute.xlu0 %2000
    %2002 = vrot.lane.b32.xlu0 %v1776, 2
    %v2003 = vpop.permute.xlu0 %2002
    %2004 = vrot.lane.b32.xlu0 %v1777, 2
    %v2005 = vpop.permute.xlu0 %2004
    %2006 = vrot.lane.b32.xlu0 %v1778, 2
    %v2007 = vpop.permute.xlu0 %2006
    %2008 = vrot.lane.b32.xlu0 %v1779, 2
    %v2009 = vpop.permute.xlu0 %2008
    %2010 = vrot.lane.b32.xlu0 %v1780, 2
    %v2011 = vpop.permute.xlu0 %2010
    %2012 = vrot.lane.b32.xlu0 %v1781, 2
    %v2013 = vpop.permute.xlu0 %2012
    %2014 = vrot.lane.b32.xlu0 %v1782, 2
    %v2015 = vpop.permute.xlu0 %2014
    %2016 = vrot.lane.b32.xlu0 %v1783, 2
    %v2017 = vpop.permute.xlu0 %2016
    %2018 = vrot.lane.b32.xlu0 %v1784, 2
    %v2019 = vpop.permute.xlu0 %2018
    %2020 = vrot.lane.b32.xlu0 %v1785, 2
    %v2021 = vpop.permute.xlu0 %2020
    %2022 = vrot.lane.b32.xlu0 %v1786, 2
    %v2023 = vpop.permute.xlu0 %2022
    %2024 = vrot.lane.b32.xlu0 %v1787, 2
    %v2025 = vpop.permute.xlu0 %2024
    %2026 = vrot.lane.b32.xlu0 %v1788, 2
    %v2027 = vpop.permute.xlu0 %2026
    %2028 = vrot.lane.b32.xlu0 %v1789, 2
    %v2029 = vpop.permute.xlu0 %2028
    %vm2110 = vcmask 15360
    %v2111 = vsel %vm2110, 0.0, %v1871
    %v2112 = vsel %vm2110, 0.0, %v1873
    %v2113 = vsel %vm2110, 0.0, %v1875
    %v2114 = vsel %vm2110, 0.0, %v1877
    %v2115 = vsel %vm2110, 0.0, %v1879
    %v2116 = vsel %vm2110, 0.0, %v1881
    %v2117 = vsel %vm2110, 0.0, %v1883
    %v2118 = vsel %vm2110, 0.0, %v1885
    %v2119 = vsel %vm2110, 0.0, %v1887
    %v2120 = vsel %vm2110, 0.0, %v1889
    %v2121 = vsel %vm2110, 0.0, %v1891
    %v2122 = vsel %vm2110, 0.0, %v1893
    %v2123 = vsel %vm2110, 0.0, %v1895
    %v2124 = vsel %vm2110, 0.0, %v1897
    %v2125 = vsel %vm2110, 0.0, %v1899
    %v2126 = vsel %vm2110, 0.0, %v1901
    %v2127 = vsel %vm2110, 0.0, %v1903
    %v2128 = vsel %vm2110, 0.0, %v1905
    %v2129 = vsel %vm2110, 0.0, %v1907
    %v2130 = vsel %vm2110, 0.0, %v1909
    %v2131 = vsel %vm2110, 0.0, %v1911
    %v2132 = vsel %vm2110, 0.0, %v1913
    %v2133 = vsel %vm2110, 0.0, %v1915
    %v2134 = vsel %vm2110, 0.0, %v1917
    %v2135 = vsel %vm2110, 0.0, %v1919
    %v2136 = vsel %vm2110, 0.0, %v1921
    %v2137 = vsel %vm2110, 0.0, %v1923
    %v2138 = vsel %vm2110, 0.0, %v1925
    %v2139 = vsel %vm2110, 0.0, %v1927
    %v2140 = vsel %vm2110, 0.0, %v1929
    %v2141 = vsel %vm2110, 0.0, %v1931
    %v2142 = vsel %vm2110, 0.0, %v1933
    %v2143 = vsel %vm2110, 0.0, %v1935
    %v2144 = vsel %vm2110, 0.0, %v1937
    %v2145 = vsel %vm2110, 0.0, %v1939
    %v2146 = vsel %vm2110, 0.0, %v1941
    %v2147 = vsel %vm2110, 0.0, %v1943
    %v2148 = vsel %vm2110, 0.0, %v1945
    %v2149 = vsel %vm2110, 0.0, %v1947
    %v2150 = vsel %vm2110, 0.0, %v1949
    %v2151 = vsel %vm2110, 0.0, %v1951
    %v2152 = vsel %vm2110, 0.0, %v1953
    %v2153 = vsel %vm2110, 0.0, %v1955
    %v2154 = vsel %vm2110, 0.0, %v1957
    %v2155 = vsel %vm2110, 0.0, %v1959
    %v2156 = vsel %vm2110, 0.0, %v1961
    %v2157 = vsel %vm2110, 0.0, %v1963
    %v2158 = vsel %vm2110, 0.0, %v1965
    %v2159 = vsel %vm2110, 0.0, %v1967
    %v2160 = vsel %vm2110, 0.0, %v1969
    %v2161 = vsel %vm2110, 0.0, %v1971
    %v2162 = vsel %vm2110, 0.0, %v1973
    %v2163 = vsel %vm2110, 0.0, %v1975
    %v2164 = vsel %vm2110, 0.0, %v1977
    %v2165 = vsel %vm2110, 0.0, %v1979
    %v2166 = vsel %vm2110, 0.0, %v1981
    %v2167 = vsel %vm2110, 0.0, %v1983
    %v2168 = vsel %vm2110, 0.0, %v1985
    %v2169 = vsel %vm2110, 0.0, %v1987
    %v2170 = vsel %vm2110, 0.0, %v1989
    %v2171 = vsel %vm2110, 0.0, %v1991
    %v2172 = vsel %vm2110, 0.0, %v1993
    %v2173 = vsel %vm2110, 0.0, %v1995
    %v2174 = vsel %vm2110, 0.0, %v1997
    %v2175 = vsel %vm2110, 0.0, %v1999
    %v2176 = vsel %vm2110, 0.0, %v2001
    %v2177 = vsel %vm2110, 0.0, %v2003
    %v2178 = vsel %vm2110, 0.0, %v2005
    %v2179 = vsel %vm2110, 0.0, %v2007
    %v2180 = vsel %vm2110, 0.0, %v2009
    %v2181 = vsel %vm2110, 0.0, %v2011
    %v2182 = vsel %vm2110, 0.0, %v2013
    %v2183 = vsel %vm2110, 0.0, %v2015
    %v2184 = vsel %vm2110, 0.0, %v2017
    %v2185 = vsel %vm2110, 0.0, %v2019
    %v2186 = vsel %vm2110, 0.0, %v2021
    %v2187 = vsel %vm2110, 0.0, %v2023
    %v2188 = vsel %vm2110, 0.0, %v2025
    %v2189 = vsel %vm2110, 0.0, %v2027
    %v2190 = vsel %vm2110, 0.0, %v2029
    %vm2191 = vcmask 146432
    %v2192 = vsel %vm2191, %v2111, 0.0
    %v2193 = vsel %vm2191, %v2112, 0.0
    %v2194 = vsel %vm2191, %v2113, 0.0
    %v2195 = vsel %vm2191, %v2114, 0.0
    %v2196 = vsel %vm2191, %v2115, 0.0
    %v2197 = vsel %vm2191, %v2116, 0.0
    %v2198 = vsel %vm2191, %v2117, 0.0
    %v2199 = vsel %vm2191, %v2118, 0.0
    %v2200 = vsel %vm2191, %v2119, 0.0
    %v2201 = vsel %vm2191, %v2120, 0.0
    %v2202 = vsel %vm2191, %v2121, 0.0
    %v2203 = vsel %vm2191, %v2122, 0.0
    %v2204 = vsel %vm2191, %v2123, 0.0
    %v2205 = vsel %vm2191, %v2124, 0.0
    %v2206 = vsel %vm2191, %v2125, 0.0
    %v2207 = vsel %vm2191, %v2126, 0.0
    %v2208 = vsel %vm2191, %v2127, 0.0
    %v2209 = vsel %vm2191, %v2128, 0.0
    %v2210 = vsel %vm2191, %v2129, 0.0
    %v2211 = vsel %vm2191, %v2130, 0.0
    %v2212 = vsel %vm2191, %v2131, 0.0
    %v2213 = vsel %vm2191, %v2132, 0.0
    %v2214 = vsel %vm2191, %v2133, 0.0
    %v2215 = vsel %vm2191, %v2134, 0.0
    %v2216 = vsel %vm2191, %v2135, 0.0
    %v2217 = vsel %vm2191, %v2136, 0.0
    %v2218 = vsel %vm2191, %v2137, 0.0
    %v2219 = vsel %vm2191, %v2138, 0.0
    %v2220 = vsel %vm2191, %v2139, 0.0
    %v2221 = vsel %vm2191, %v2140, 0.0
    %v2222 = vsel %vm2191, %v2141, 0.0
    %v2223 = vsel %vm2191, %v2142, 0.0
    %v2224 = vsel %vm2191, %v2143, 0.0
    %v2225 = vsel %vm2191, %v2144, 0.0
    %v2226 = vsel %vm2191, %v2145, 0.0
    %v2227 = vsel %vm2191, %v2146, 0.0
    %v2228 = vsel %vm2191, %v2147, 0.0
    %v2229 = vsel %vm2191, %v2148, 0.0
    %v2230 = vsel %vm2191, %v2149, 0.0
    %v2231 = vsel %vm2191, %v2150, 0.0
    %v2232 = vsel %vm2191, %v2151, 0.0
    %v2233 = vsel %vm2191, %v2152, 0.0
    %v2234 = vsel %vm2191, %v2153, 0.0
    %v2235 = vsel %vm2191, %v2154, 0.0
    %v2236 = vsel %vm2191, %v2155, 0.0
    %v2237 = vsel %vm2191, %v2156, 0.0
    %v2238 = vsel %vm2191, %v2157, 0.0
    %v2239 = vsel %vm2191, %v2158, 0.0
    %v2240 = vsel %vm2191, %v2159, 0.0
    %v2241 = vsel %vm2191, %v2160, 0.0
    %v2242 = vsel %vm2191, %v2161, 0.0
    %v2243 = vsel %vm2191, %v2162, 0.0
    %v2244 = vsel %vm2191, %v2163, 0.0
    %v2245 = vsel %vm2191, %v2164, 0.0
    %v2246 = vsel %vm2191, %v2165, 0.0
    %v2247 = vsel %vm2191, %v2166, 0.0
    %v2248 = vsel %vm2191, %v2167, 0.0
    %v2249 = vsel %vm2191, %v2168, 0.0
    %v2250 = vsel %vm2191, %v2169, 0.0
    %v2251 = vsel %vm2191, %v2170, 0.0
    %v2252 = vsel %vm2191, %v2171, 0.0
    %v2253 = vsel %vm2191, %v2172, 0.0
    %v2254 = vsel %vm2191, %v2173, 0.0
    %v2255 = vsel %vm2191, %v2174, 0.0
    %v2256 = vsel %vm2191, %v2175, 0.0
    %v2257 = vsel %vm2191, %v2176, 0.0
    %v2258 = vsel %vm2191, %v2177, 0.0
    %v2259 = vsel %vm2191, %v2178, 0.0
    %v2260 = vsel %vm2191, %v2179, 0.0
    %v2261 = vsel %vm2191, %v2180, 0.0
    %v2262 = vsel %vm2191, %v2181, 0.0
    %v2263 = vsel %vm2191, %v2182, 0.0
    %v2264 = vsel %vm2191, %v2183, 0.0
    %v2265 = vsel %vm2191, %v2184, 0.0
    %v2266 = vsel %vm2191, %v2185, 0.0
    %v2267 = vsel %vm2191, %v2186, 0.0
    %v2268 = vsel %vm2191, %v2187, 0.0
    %v2269 = vsel %vm2191, %v2188, 0.0
    %v2270 = vsel %vm2191, %v2189, 0.0
    %v2271 = vsel %vm2191, %v2190, 0.0
    %2352 = vrot.lane.b32.xlu0 %v2192, 127
    %v2353 = vpop.permute.xlu0 %2352
    %2354 = vrot.lane.b32.xlu0 %v2193, 127
    %v2355 = vpop.permute.xlu0 %2354
    %2356 = vrot.lane.b32.xlu0 %v2194, 127
    %v2357 = vpop.permute.xlu0 %2356
    %2358 = vrot.lane.b32.xlu0 %v2195, 127
    %v2359 = vpop.permute.xlu0 %2358
    %2360 = vrot.lane.b32.xlu0 %v2196, 127
    %v2361 = vpop.permute.xlu0 %2360
    %2362 = vrot.lane.b32.xlu0 %v2197, 127
    %v2363 = vpop.permute.xlu0 %2362
    %2364 = vrot.lane.b32.xlu0 %v2198, 127
    %v2365 = vpop.permute.xlu0 %2364
    %2366 = vrot.lane.b32.xlu0 %v2199, 127
    %v2367 = vpop.permute.xlu0 %2366
    %2368 = vrot.lane.b32.xlu0 %v2200, 127
    %v2369 = vpop.permute.xlu0 %2368
    %2370 = vrot.lane.b32.xlu0 %v2201, 127
    %v2371 = vpop.permute.xlu0 %2370
    %2372 = vrot.lane.b32.xlu0 %v2202, 127
    %v2373 = vpop.permute.xlu0 %2372
    %2374 = vrot.lane.b32.xlu0 %v2203, 127
    %v2375 = vpop.permute.xlu0 %2374
    %2376 = vrot.lane.b32.xlu0 %v2204, 127
    %v2377 = vpop.permute.xlu0 %2376
    %2378 = vrot.lane.b32.xlu0 %v2205, 127
    %v2379 = vpop.permute.xlu0 %2378
    %2380 = vrot.lane.b32.xlu0 %v2206, 127
    %v2381 = vpop.permute.xlu0 %2380
    %2382 = vrot.lane.b32.xlu0 %v2207, 127
    %v2383 = vpop.permute.xlu0 %2382
    %2384 = vrot.lane.b32.xlu0 %v2208, 127
    %v2385 = vpop.permute.xlu0 %2384
    %2386 = vrot.lane.b32.xlu0 %v2209, 127
    %v2387 = vpop.permute.xlu0 %2386
    %2388 = vrot.lane.b32.xlu0 %v2210, 127
    %v2389 = vpop.permute.xlu0 %2388
    %2390 = vrot.lane.b32.xlu0 %v2211, 127
    %v2391 = vpop.permute.xlu0 %2390
    %2392 = vrot.lane.b32.xlu0 %v2212, 127
    %v2393 = vpop.permute.xlu0 %2392
    %2394 = vrot.lane.b32.xlu0 %v2213, 127
    %v2395 = vpop.permute.xlu0 %2394
    %2396 = vrot.lane.b32.xlu0 %v2214, 127
    %v2397 = vpop.permute.xlu0 %2396
    %2398 = vrot.lane.b32.xlu0 %v2215, 127
    %v2399 = vpop.permute.xlu0 %2398
    %2400 = vrot.lane.b32.xlu0 %v2216, 127
    %v2401 = vpop.permute.xlu0 %2400
    %2402 = vrot.lane.b32.xlu0 %v2217, 127
    %v2403 = vpop.permute.xlu0 %2402
    %2404 = vrot.lane.b32.xlu0 %v2218, 127
    %v2405 = vpop.permute.xlu0 %2404
    %2406 = vrot.lane.b32.xlu0 %v2219, 127
    %v2407 = vpop.permute.xlu0 %2406
    %2408 = vrot.lane.b32.xlu0 %v2220, 127
    %v2409 = vpop.permute.xlu0 %2408
    %2410 = vrot.lane.b32.xlu0 %v2221, 127
    %v2411 = vpop.permute.xlu0 %2410
    %2412 = vrot.lane.b32.xlu0 %v2222, 127
    %v2413 = vpop.permute.xlu0 %2412
    %2414 = vrot.lane.b32.xlu0 %v2223, 127
    %v2415 = vpop.permute.xlu0 %2414
    %2416 = vrot.lane.b32.xlu0 %v2224, 127
    %v2417 = vpop.permute.xlu0 %2416
    %2418 = vrot.lane.b32.xlu0 %v2225, 127
    %v2419 = vpop.permute.xlu0 %2418
    %2420 = vrot.lane.b32.xlu0 %v2226, 127
    %v2421 = vpop.permute.xlu0 %2420
    %2422 = vrot.lane.b32.xlu0 %v2227, 127
    %v2423 = vpop.permute.xlu0 %2422
    %2424 = vrot.lane.b32.xlu0 %v2228, 127
    %v2425 = vpop.permute.xlu0 %2424
    %2426 = vrot.lane.b32.xlu0 %v2229, 127
    %v2427 = vpop.permute.xlu0 %2426
    %2428 = vrot.lane.b32.xlu0 %v2230, 127
    %v2429 = vpop.permute.xlu0 %2428
    %2430 = vrot.lane.b32.xlu0 %v2231, 127
    %v2431 = vpop.permute.xlu0 %2430
    %2432 = vrot.lane.b32.xlu0 %v2232, 127
    %v2433 = vpop.permute.xlu0 %2432
    %2434 = vrot.lane.b32.xlu0 %v2233, 127
    %v2435 = vpop.permute.xlu0 %2434
    %2436 = vrot.lane.b32.xlu0 %v2234, 127
    %v2437 = vpop.permute.xlu0 %2436
    %2438 = vrot.lane.b32.xlu0 %v2235, 127
    %v2439 = vpop.permute.xlu0 %2438
    %2440 = vrot.lane.b32.xlu0 %v2236, 127
    %v2441 = vpop.permute.xlu0 %2440
    %2442 = vrot.lane.b32.xlu0 %v2237, 127
    %v2443 = vpop.permute.xlu0 %2442
    %2444 = vrot.lane.b32.xlu0 %v2238, 127
    %v2445 = vpop.permute.xlu0 %2444
    %2446 = vrot.lane.b32.xlu0 %v2239, 127
    %v2447 = vpop.permute.xlu0 %2446
    %2448 = vrot.lane.b32.xlu0 %v2240, 127
    %v2449 = vpop.permute.xlu0 %2448
    %2450 = vrot.lane.b32.xlu0 %v2241, 127
    %v2451 = vpop.permute.xlu0 %2450
    %2452 = vrot.lane.b32.xlu0 %v2242, 127
    %v2453 = vpop.permute.xlu0 %2452
    %2454 = vrot.lane.b32.xlu0 %v2243, 127
    %v2455 = vpop.permute.xlu0 %2454
    %2456 = vrot.lane.b32.xlu0 %v2244, 127
    %v2457 = vpop.permute.xlu0 %2456
    %2458 = vrot.lane.b32.xlu0 %v2245, 127
    %v2459 = vpop.permute.xlu0 %2458
    %2460 = vrot.lane.b32.xlu0 %v2246, 127
    %v2461 = vpop.permute.xlu0 %2460
    %2462 = vrot.lane.b32.xlu0 %v2247, 127
    %v2463 = vpop.permute.xlu0 %2462
    %2464 = vrot.lane.b32.xlu0 %v2248, 127
    %v2465 = vpop.permute.xlu0 %2464
    %2466 = vrot.lane.b32.xlu0 %v2249, 127
    %v2467 = vpop.permute.xlu0 %2466
    %2468 = vrot.lane.b32.xlu0 %v2250, 127
    %v2469 = vpop.permute.xlu0 %2468
    %2470 = vrot.lane.b32.xlu0 %v2251, 127
    %v2471 = vpop.permute.xlu0 %2470
    %2472 = vrot.lane.b32.xlu0 %v2252, 127
    %v2473 = vpop.permute.xlu0 %2472
    %2474 = vrot.lane.b32.xlu0 %v2253, 127
    %v2475 = vpop.permute.xlu0 %2474
    %2476 = vrot.lane.b32.xlu0 %v2254, 127
    %v2477 = vpop.permute.xlu0 %2476
    %2478 = vrot.lane.b32.xlu0 %v2255, 127
    %v2479 = vpop.permute.xlu0 %2478
    %2480 = vrot.lane.b32.xlu0 %v2256, 127
    %v2481 = vpop.permute.xlu0 %2480
    %2482 = vrot.lane.b32.xlu0 %v2257, 127
    %v2483 = vpop.permute.xlu0 %2482
    %2484 = vrot.lane.b32.xlu0 %v2258, 127
    %v2485 = vpop.permute.xlu0 %2484
    %2486 = vrot.lane.b32.xlu0 %v2259, 127
    %v2487 = vpop.permute.xlu0 %2486
    %2488 = vrot.lane.b32.xlu0 %v2260, 127
    %v2489 = vpop.permute.xlu0 %2488
    %2490 = vrot.lane.b32.xlu0 %v2261, 127
    %v2491 = vpop.permute.xlu0 %2490
    %2492 = vrot.lane.b32.xlu0 %v2262, 127
    %v2493 = vpop.permute.xlu0 %2492
    %2494 = vrot.lane.b32.xlu0 %v2263, 127
    %v2495 = vpop.permute.xlu0 %2494
    %2496 = vrot.lane.b32.xlu0 %v2264, 127
    %v2497 = vpop.permute.xlu0 %2496
    %2498 = vrot.lane.b32.xlu0 %v2265, 127
    %v2499 = vpop.permute.xlu0 %2498
    %2500 = vrot.lane.b32.xlu0 %v2266, 127
    %v2501 = vpop.permute.xlu0 %2500
    %2502 = vrot.lane.b32.xlu0 %v2267, 127
    %v2503 = vpop.permute.xlu0 %2502
    %2504 = vrot.lane.b32.xlu0 %v2268, 127
    %v2505 = vpop.permute.xlu0 %2504
    %2506 = vrot.lane.b32.xlu0 %v2269, 127
    %v2507 = vpop.permute.xlu0 %2506
    %2508 = vrot.lane.b32.xlu0 %v2270, 127
    %v2509 = vpop.permute.xlu0 %2508
    %2510 = vrot.lane.b32.xlu0 %v2271, 127
    %v2511 = vpop.permute.xlu0 %2510
    %v2592 = vadd.f32 %v2192, %v2353
    %v2593 = vadd.f32 %v2193, %v2355
    %v2594 = vadd.f32 %v2194, %v2357
    %v2595 = vadd.f32 %v2195, %v2359
    %v2596 = vadd.f32 %v2196, %v2361
    %v2597 = vadd.f32 %v2197, %v2363
    %v2598 = vadd.f32 %v2198, %v2365
    %v2599 = vadd.f32 %v2199, %v2367
    %v2600 = vadd.f32 %v2200, %v2369
    %v2601 = vadd.f32 %v2201, %v2371
    %v2602 = vadd.f32 %v2202, %v2373
    %v2603 = vadd.f32 %v2203, %v2375
    %v2604 = vadd.f32 %v2204, %v2377
    %v2605 = vadd.f32 %v2205, %v2379
    %v2606 = vadd.f32 %v2206, %v2381
    %v2607 = vadd.f32 %v2207, %v2383
    %v2608 = vadd.f32 %v2208, %v2385
    %v2609 = vadd.f32 %v2209, %v2387
    %v2610 = vadd.f32 %v2210, %v2389
    %v2611 = vadd.f32 %v2211, %v2391
    %v2612 = vadd.f32 %v2212, %v2393
    %v2613 = vadd.f32 %v2213, %v2395
    %v2614 = vadd.f32 %v2214, %v2397
    %v2615 = vadd.f32 %v2215, %v2399
    %v2616 = vadd.f32 %v2216, %v2401
    %v2617 = vadd.f32 %v2217, %v2403
    %v2618 = vadd.f32 %v2218, %v2405
    %v2619 = vadd.f32 %v2219, %v2407
    %v2620 = vadd.f32 %v2220, %v2409
    %v2621 = vadd.f32 %v2221, %v2411
    %v2622 = vadd.f32 %v2222, %v2413
    %v2623 = vadd.f32 %v2223, %v2415
    %v2624 = vadd.f32 %v2224, %v2417
    %v2625 = vadd.f32 %v2225, %v2419
    %v2626 = vadd.f32 %v2226, %v2421
    %v2627 = vadd.f32 %v2227, %v2423
    %v2628 = vadd.f32 %v2228, %v2425
    %v2629 = vadd.f32 %v2229, %v2427
    %v2630 = vadd.f32 %v2230, %v2429
    %v2631 = vadd.f32 %v2231, %v2431
    %v2632 = vadd.f32 %v2232, %v2433
    %v2633 = vadd.f32 %v2233, %v2435
    %v2634 = vadd.f32 %v2234, %v2437
    %v2635 = vadd.f32 %v2235, %v2439
    %v2636 = vadd.f32 %v2236, %v2441
    %v2637 = vadd.f32 %v2237, %v2443
    %v2638 = vadd.f32 %v2238, %v2445
    %v2639 = vadd.f32 %v2239, %v2447
    %v2640 = vadd.f32 %v2240, %v2449
    %v2641 = vadd.f32 %v2241, %v2451
    %v2642 = vadd.f32 %v2242, %v2453
    %v2643 = vadd.f32 %v2243, %v2455
    %v2644 = vadd.f32 %v2244, %v2457
    %v2645 = vadd.f32 %v2245, %v2459
    %v2646 = vadd.f32 %v2246, %v2461
    %v2647 = vadd.f32 %v2247, %v2463
    %v2648 = vadd.f32 %v2248, %v2465
    %v2649 = vadd.f32 %v2249, %v2467
    %v2650 = vadd.f32 %v2250, %v2469
    %v2651 = vadd.f32 %v2251, %v2471
    %v2652 = vadd.f32 %v2252, %v2473
    %v2653 = vadd.f32 %v2253, %v2475
    %v2654 = vadd.f32 %v2254, %v2477
    %v2655 = vadd.f32 %v2255, %v2479
    %v2656 = vadd.f32 %v2256, %v2481
    %v2657 = vadd.f32 %v2257, %v2483
    %v2658 = vadd.f32 %v2258, %v2485
    %v2659 = vadd.f32 %v2259, %v2487
    %v2660 = vadd.f32 %v2260, %v2489
    %v2661 = vadd.f32 %v2261, %v2491
    %v2662 = vadd.f32 %v2262, %v2493
    %v2663 = vadd.f32 %v2263, %v2495
    %v2664 = vadd.f32 %v2264, %v2497
    %v2665 = vadd.f32 %v2265, %v2499
    %v2666 = vadd.f32 %v2266, %v2501
    %v2667 = vadd.f32 %v2267, %v2503
    %v2668 = vadd.f32 %v2268, %v2505
    %v2669 = vadd.f32 %v2269, %v2507
    %v2670 = vadd.f32 %v2270, %v2509
    %v2671 = vadd.f32 %v2271, %v2511
    %2752 = vrot.lane.b32.xlu0 %v2592, 126
    %v2753 = vpop.permute.xlu0 %2752
    %2754 = vrot.lane.b32.xlu0 %v2593, 126
    %v2755 = vpop.permute.xlu0 %2754
    %2756 = vrot.lane.b32.xlu0 %v2594, 126
    %v2757 = vpop.permute.xlu0 %2756
    %2758 = vrot.lane.b32.xlu0 %v2595, 126
    %v2759 = vpop.permute.xlu0 %2758
    %2760 = vrot.lane.b32.xlu0 %v2596, 126
    %v2761 = vpop.permute.xlu0 %2760
    %2762 = vrot.lane.b32.xlu0 %v2597, 126
    %v2763 = vpop.permute.xlu0 %2762
    %2764 = vrot.lane.b32.xlu0 %v2598, 126
    %v2765 = vpop.permute.xlu0 %2764
    %2766 = vrot.lane.b32.xlu0 %v2599, 126
    %v2767 = vpop.permute.xlu0 %2766
    %2768 = vrot.lane.b32.xlu0 %v2600, 126
    %v2769 = vpop.permute.xlu0 %2768
    %2770 = vrot.lane.b32.xlu0 %v2601, 126
    %v2771 = vpop.permute.xlu0 %2770
    %2772 = vrot.lane.b32.xlu0 %v2602, 126
    %v2773 = vpop.permute.xlu0 %2772
    %2774 = vrot.lane.b32.xlu0 %v2603, 126
    %v2775 = vpop.permute.xlu0 %2774
    %2776 = vrot.lane.b32.xlu0 %v2604, 126
    %v2777 = vpop.permute.xlu0 %2776
    %2778 = vrot.lane.b32.xlu0 %v2605, 126
    %v2779 = vpop.permute.xlu0 %2778
    %2780 = vrot.lane.b32.xlu0 %v2606, 126
    %v2781 = vpop.permute.xlu0 %2780
    %2782 = vrot.lane.b32.xlu0 %v2607, 126
    %v2783 = vpop.permute.xlu0 %2782
    %2784 = vrot.lane.b32.xlu0 %v2608, 126
    %v2785 = vpop.permute.xlu0 %2784
    %2786 = vrot.lane.b32.xlu0 %v2609, 126
    %v2787 = vpop.permute.xlu0 %2786
    %2788 = vrot.lane.b32.xlu0 %v2610, 126
    %v2789 = vpop.permute.xlu0 %2788
    %2790 = vrot.lane.b32.xlu0 %v2611, 126
    %v2791 = vpop.permute.xlu0 %2790
    %2792 = vrot.lane.b32.xlu0 %v2612, 126
    %v2793 = vpop.permute.xlu0 %2792
    %2794 = vrot.lane.b32.xlu0 %v2613, 126
    %v2795 = vpop.permute.xlu0 %2794
    %2796 = vrot.lane.b32.xlu0 %v2614, 126
    %v2797 = vpop.permute.xlu0 %2796
    %2798 = vrot.lane.b32.xlu0 %v2615, 126
    %v2799 = vpop.permute.xlu0 %2798
    %2800 = vrot.lane.b32.xlu0 %v2616, 126
    %v2801 = vpop.permute.xlu0 %2800
    %2802 = vrot.lane.b32.xlu0 %v2617, 126
    %v2803 = vpop.permute.xlu0 %2802
    %2804 = vrot.lane.b32.xlu0 %v2618, 126
    %v2805 = vpop.permute.xlu0 %2804
    %2806 = vrot.lane.b32.xlu0 %v2619, 126
    %v2807 = vpop.permute.xlu0 %2806
    %2808 = vrot.lane.b32.xlu0 %v2620, 126
    %v2809 = vpop.permute.xlu0 %2808
    %2810 = vrot.lane.b32.xlu0 %v2621, 126
    %v2811 = vpop.permute.xlu0 %2810
    %2812 = vrot.lane.b32.xlu0 %v2622, 126
    %v2813 = vpop.permute.xlu0 %2812
    %2814 = vrot.lane.b32.xlu0 %v2623, 126
    %v2815 = vpop.permute.xlu0 %2814
    %2816 = vrot.lane.b32.xlu0 %v2624, 126
    %v2817 = vpop.permute.xlu0 %2816
    %2818 = vrot.lane.b32.xlu0 %v2625, 126
    %v2819 = vpop.permute.xlu0 %2818
    %2820 = vrot.lane.b32.xlu0 %v2626, 126
    %v2821 = vpop.permute.xlu0 %2820
    %2822 = vrot.lane.b32.xlu0 %v2627, 126
    %v2823 = vpop.permute.xlu0 %2822
    %2824 = vrot.lane.b32.xlu0 %v2628, 126
    %v2825 = vpop.permute.xlu0 %2824
    %2826 = vrot.lane.b32.xlu0 %v2629, 126
    %v2827 = vpop.permute.xlu0 %2826
    %2828 = vrot.lane.b32.xlu0 %v2630, 126
    %v2829 = vpop.permute.xlu0 %2828
    %2830 = vrot.lane.b32.xlu0 %v2631, 126
    %v2831 = vpop.permute.xlu0 %2830
    %2832 = vrot.lane.b32.xlu0 %v2632, 126
    %v2833 = vpop.permute.xlu0 %2832
    %2834 = vrot.lane.b32.xlu0 %v2633, 126
    %v2835 = vpop.permute.xlu0 %2834
    %2836 = vrot.lane.b32.xlu0 %v2634, 126
    %v2837 = vpop.permute.xlu0 %2836
    %2838 = vrot.lane.b32.xlu0 %v2635, 126
    %v2839 = vpop.permute.xlu0 %2838
    %2840 = vrot.lane.b32.xlu0 %v2636, 126
    %v2841 = vpop.permute.xlu0 %2840
    %2842 = vrot.lane.b32.xlu0 %v2637, 126
    %v2843 = vpop.permute.xlu0 %2842
    %2844 = vrot.lane.b32.xlu0 %v2638, 126
    %v2845 = vpop.permute.xlu0 %2844
    %2846 = vrot.lane.b32.xlu0 %v2639, 126
    %v2847 = vpop.permute.xlu0 %2846
    %2848 = vrot.lane.b32.xlu0 %v2640, 126
    %v2849 = vpop.permute.xlu0 %2848
    %2850 = vrot.lane.b32.xlu0 %v2641, 126
    %v2851 = vpop.permute.xlu0 %2850
    %2852 = vrot.lane.b32.xlu0 %v2642, 126
    %v2853 = vpop.permute.xlu0 %2852
    %2854 = vrot.lane.b32.xlu0 %v2643, 126
    %v2855 = vpop.permute.xlu0 %2854
    %2856 = vrot.lane.b32.xlu0 %v2644, 126
    %v2857 = vpop.permute.xlu0 %2856
    %2858 = vrot.lane.b32.xlu0 %v2645, 126
    %v2859 = vpop.permute.xlu0 %2858
    %2860 = vrot.lane.b32.xlu0 %v2646, 126
    %v2861 = vpop.permute.xlu0 %2860
    %2862 = vrot.lane.b32.xlu0 %v2647, 126
    %v2863 = vpop.permute.xlu0 %2862
    %2864 = vrot.lane.b32.xlu0 %v2648, 126
    %v2865 = vpop.permute.xlu0 %2864
    %2866 = vrot.lane.b32.xlu0 %v2649, 126
    %v2867 = vpop.permute.xlu0 %2866
    %2868 = vrot.lane.b32.xlu0 %v2650, 126
    %v2869 = vpop.permute.xlu0 %2868
    %2870 = vrot.lane.b32.xlu0 %v2651, 126
    %v2871 = vpop.permute.xlu0 %2870
    %2872 = vrot.lane.b32.xlu0 %v2652, 126
    %v2873 = vpop.permute.xlu0 %2872
    %2874 = vrot.lane.b32.xlu0 %v2653, 126
    %v2875 = vpop.permute.xlu0 %2874
    %2876 = vrot.lane.b32.xlu0 %v2654, 126
    %v2877 = vpop.permute.xlu0 %2876
    %2878 = vrot.lane.b32.xlu0 %v2655, 126
    %v2879 = vpop.permute.xlu0 %2878
    %2880 = vrot.lane.b32.xlu0 %v2656, 126
    %v2881 = vpop.permute.xlu0 %2880
    %2882 = vrot.lane.b32.xlu0 %v2657, 126
    %v2883 = vpop.permute.xlu0 %2882
    %2884 = vrot.lane.b32.xlu0 %v2658, 126
    %v2885 = vpop.permute.xlu0 %2884
    %2886 = vrot.lane.b32.xlu0 %v2659, 126
    %v2887 = vpop.permute.xlu0 %2886
    %2888 = vrot.lane.b32.xlu0 %v2660, 126
    %v2889 = vpop.permute.xlu0 %2888
    %2890 = vrot.lane.b32.xlu0 %v2661, 126
    %v2891 = vpop.permute.xlu0 %2890
    %2892 = vrot.lane.b32.xlu0 %v2662, 126
    %v2893 = vpop.permute.xlu0 %2892
    %2894 = vrot.lane.b32.xlu0 %v2663, 126
    %v2895 = vpop.permute.xlu0 %2894
    %2896 = vrot.lane.b32.xlu0 %v2664, 126
    %v2897 = vpop.permute.xlu0 %2896
    %2898 = vrot.lane.b32.xlu0 %v2665, 126
    %v2899 = vpop.permute.xlu0 %2898
    %2900 = vrot.lane.b32.xlu0 %v2666, 126
    %v2901 = vpop.permute.xlu0 %2900
    %2902 = vrot.lane.b32.xlu0 %v2667, 126
    %v2903 = vpop.permute.xlu0 %2902
    %2904 = vrot.lane.b32.xlu0 %v2668, 126
    %v2905 = vpop.permute.xlu0 %2904
    %2906 = vrot.lane.b32.xlu0 %v2669, 126
    %v2907 = vpop.permute.xlu0 %2906
    %2908 = vrot.lane.b32.xlu0 %v2670, 126
    %v2909 = vpop.permute.xlu0 %2908
    %2910 = vrot.lane.b32.xlu0 %v2671, 126
    %v2911 = vpop.permute.xlu0 %2910
    %v2992 = vadd.f32 %v2592, %v2753
    %v2993 = vadd.f32 %v2593, %v2755
    %v2994 = vadd.f32 %v2594, %v2757
    %v2995 = vadd.f32 %v2595, %v2759
    %v2996 = vadd.f32 %v2596, %v2761
    %v2997 = vadd.f32 %v2597, %v2763
    %v2998 = vadd.f32 %v2598, %v2765
    %v2999 = vadd.f32 %v2599, %v2767
    %v3000 = vadd.f32 %v2600, %v2769
    %v3001 = vadd.f32 %v2601, %v2771
    %v3002 = vadd.f32 %v2602, %v2773
    %v3003 = vadd.f32 %v2603, %v2775
    %v3004 = vadd.f32 %v2604, %v2777
    %v3005 = vadd.f32 %v2605, %v2779
    %v3006 = vadd.f32 %v2606, %v2781
    %v3007 = vadd.f32 %v2607, %v2783
    %v3008 = vadd.f32 %v2608, %v2785
    %v3009 = vadd.f32 %v2609, %v2787
    %v3010 = vadd.f32 %v2610, %v2789
    %v3011 = vadd.f32 %v2611, %v2791
    %v3012 = vadd.f32 %v2612, %v2793
    %v3013 = vadd.f32 %v2613, %v2795
    %v3014 = vadd.f32 %v2614, %v2797
    %v3015 = vadd.f32 %v2615, %v2799
    %v3016 = vadd.f32 %v2616, %v2801
    %v3017 = vadd.f32 %v2617, %v2803
    %v3018 = vadd.f32 %v2618, %v2805
    %v3019 = vadd.f32 %v2619, %v2807
    %v3020 = vadd.f32 %v2620, %v2809
    %v3021 = vadd.f32 %v2621, %v2811
    %v3022 = vadd.f32 %v2622, %v2813
    %v3023 = vadd.f32 %v2623, %v2815
    %v3024 = vadd.f32 %v2624, %v2817
    %v3025 = vadd.f32 %v2625, %v2819
    %v3026 = vadd.f32 %v2626, %v2821
    %v3027 = vadd.f32 %v2627, %v2823
    %v3028 = vadd.f32 %v2628, %v2825
    %v3029 = vadd.f32 %v2629, %v2827
    %v3030 = vadd.f32 %v2630, %v2829
    %v3031 = vadd.f32 %v2631, %v2831
    %v3032 = vadd.f32 %v2632, %v2833
    %v3033 = vadd.f32 %v2633, %v2835
    %v3034 = vadd.f32 %v2634, %v2837
    %v3035 = vadd.f32 %v2635, %v2839
    %v3036 = vadd.f32 %v2636, %v2841
    %v3037 = vadd.f32 %v2637, %v2843
    %v3038 = vadd.f32 %v2638, %v2845
    %v3039 = vadd.f32 %v2639, %v2847
    %v3040 = vadd.f32 %v2640, %v2849
    %v3041 = vadd.f32 %v2641, %v2851
    %v3042 = vadd.f32 %v2642, %v2853
    %v3043 = vadd.f32 %v2643, %v2855
    %v3044 = vadd.f32 %v2644, %v2857
    %v3045 = vadd.f32 %v2645, %v2859
    %v3046 = vadd.f32 %v2646, %v2861
    %v3047 = vadd.f32 %v2647, %v2863
    %v3048 = vadd.f32 %v2648, %v2865
    %v3049 = vadd.f32 %v2649, %v2867
    %v3050 = vadd.f32 %v2650, %v2869
    %v3051 = vadd.f32 %v2651, %v2871
    %v3052 = vadd.f32 %v2652, %v2873
    %v3053 = vadd.f32 %v2653, %v2875
    %v3054 = vadd.f32 %v2654, %v2877
    %v3055 = vadd.f32 %v2655, %v2879
    %v3056 = vadd.f32 %v2656, %v2881
    %v3057 = vadd.f32 %v2657, %v2883
    %v3058 = vadd.f32 %v2658, %v2885
    %v3059 = vadd.f32 %v2659, %v2887
    %v3060 = vadd.f32 %v2660, %v2889
    %v3061 = vadd.f32 %v2661, %v2891
    %v3062 = vadd.f32 %v2662, %v2893
    %v3063 = vadd.f32 %v2663, %v2895
    %v3064 = vadd.f32 %v2664, %v2897
    %v3065 = vadd.f32 %v2665, %v2899
    %v3066 = vadd.f32 %v2666, %v2901
    %v3067 = vadd.f32 %v2667, %v2903
    %v3068 = vadd.f32 %v2668, %v2905
    %v3069 = vadd.f32 %v2669, %v2907
    %v3070 = vadd.f32 %v2670, %v2909
    %v3071 = vadd.f32 %v2671, %v2911
    %3072 = vrot.lane.b32.xlu0 %v2192, 124
    %v3073 = vpop.permute.xlu0 %3072
    %3074 = vrot.lane.b32.xlu0 %v2193, 124
    %v3075 = vpop.permute.xlu0 %3074
    %3076 = vrot.lane.b32.xlu0 %v2194, 124
    %v3077 = vpop.permute.xlu0 %3076
    %3078 = vrot.lane.b32.xlu0 %v2195, 124
    %v3079 = vpop.permute.xlu0 %3078
    %3080 = vrot.lane.b32.xlu0 %v2196, 124
    %v3081 = vpop.permute.xlu0 %3080
    %3082 = vrot.lane.b32.xlu0 %v2197, 124
    %v3083 = vpop.permute.xlu0 %3082
    %3084 = vrot.lane.b32.xlu0 %v2198, 124
    %v3085 = vpop.permute.xlu0 %3084
    %3086 = vrot.lane.b32.xlu0 %v2199, 124
    %v3087 = vpop.permute.xlu0 %3086
    %3088 = vrot.lane.b32.xlu0 %v2200, 124
    %v3089 = vpop.permute.xlu0 %3088
    %3090 = vrot.lane.b32.xlu0 %v2201, 124
    %v3091 = vpop.permute.xlu0 %3090
    %3092 = vrot.lane.b32.xlu0 %v2202, 124
    %v3093 = vpop.permute.xlu0 %3092
    %3094 = vrot.lane.b32.xlu0 %v2203, 124
    %v3095 = vpop.permute.xlu0 %3094
    %3096 = vrot.lane.b32.xlu0 %v2204, 124
    %v3097 = vpop.permute.xlu0 %3096
    %3098 = vrot.lane.b32.xlu0 %v2205, 124
    %v3099 = vpop.permute.xlu0 %3098
    %3100 = vrot.lane.b32.xlu0 %v2206, 124
    %v3101 = vpop.permute.xlu0 %3100
    %3102 = vrot.lane.b32.xlu0 %v2207, 124
    %v3103 = vpop.permute.xlu0 %3102
    %3104 = vrot.lane.b32.xlu0 %v2208, 124
    %v3105 = vpop.permute.xlu0 %3104
    %3106 = vrot.lane.b32.xlu0 %v2209, 124
    %v3107 = vpop.permute.xlu0 %3106
    %3108 = vrot.lane.b32.xlu0 %v2210, 124
    %v3109 = vpop.permute.xlu0 %3108
    %3110 = vrot.lane.b32.xlu0 %v2211, 124
    %v3111 = vpop.permute.xlu0 %3110
    %3112 = vrot.lane.b32.xlu0 %v2212, 124
    %v3113 = vpop.permute.xlu0 %3112
    %3114 = vrot.lane.b32.xlu0 %v2213, 124
    %v3115 = vpop.permute.xlu0 %3114
    %3116 = vrot.lane.b32.xlu0 %v2214, 124
    %v3117 = vpop.permute.xlu0 %3116
    %3118 = vrot.lane.b32.xlu0 %v2215, 124
    %v3119 = vpop.permute.xlu0 %3118
    %3120 = vrot.lane.b32.xlu0 %v2216, 124
    %v3121 = vpop.permute.xlu0 %3120
    %3122 = vrot.lane.b32.xlu0 %v2217, 124
    %v3123 = vpop.permute.xlu0 %3122
    %3124 = vrot.lane.b32.xlu0 %v2218, 124
    %v3125 = vpop.permute.xlu0 %3124
    %3126 = vrot.lane.b32.xlu0 %v2219, 124
    %v3127 = vpop.permute.xlu0 %3126
    %3128 = vrot.lane.b32.xlu0 %v2220, 124
    %v3129 = vpop.permute.xlu0 %3128
    %3130 = vrot.lane.b32.xlu0 %v2221, 124
    %v3131 = vpop.permute.xlu0 %3130
    %3132 = vrot.lane.b32.xlu0 %v2222, 124
    %v3133 = vpop.permute.xlu0 %3132
    %3134 = vrot.lane.b32.xlu0 %v2223, 124
    %v3135 = vpop.permute.xlu0 %3134
    %3136 = vrot.lane.b32.xlu0 %v2224, 124
    %v3137 = vpop.permute.xlu0 %3136
    %3138 = vrot.lane.b32.xlu0 %v2225, 124
    %v3139 = vpop.permute.xlu0 %3138
    %3140 = vrot.lane.b32.xlu0 %v2226, 124
    %v3141 = vpop.permute.xlu0 %3140
    %3142 = vrot.lane.b32.xlu0 %v2227, 124
    %v3143 = vpop.permute.xlu0 %3142
    %3144 = vrot.lane.b32.xlu0 %v2228, 124
    %v3145 = vpop.permute.xlu0 %3144
    %3146 = vrot.lane.b32.xlu0 %v2229, 124
    %v3147 = vpop.permute.xlu0 %3146
    %3148 = vrot.lane.b32.xlu0 %v2230, 124
    %v3149 = vpop.permute.xlu0 %3148
    %3150 = vrot.lane.b32.xlu0 %v2231, 124
    %v3151 = vpop.permute.xlu0 %3150
    %3152 = vrot.lane.b32.xlu0 %v2232, 124
    %v3153 = vpop.permute.xlu0 %3152
    %3154 = vrot.lane.b32.xlu0 %v2233, 124
    %v3155 = vpop.permute.xlu0 %3154
    %3156 = vrot.lane.b32.xlu0 %v2234, 124
    %v3157 = vpop.permute.xlu0 %3156
    %3158 = vrot.lane.b32.xlu0 %v2235, 124
    %v3159 = vpop.permute.xlu0 %3158
    %3160 = vrot.lane.b32.xlu0 %v2236, 124
    %v3161 = vpop.permute.xlu0 %3160
    %3162 = vrot.lane.b32.xlu0 %v2237, 124
    %v3163 = vpop.permute.xlu0 %3162
    %3164 = vrot.lane.b32.xlu0 %v2238, 124
    %v3165 = vpop.permute.xlu0 %3164
    %3166 = vrot.lane.b32.xlu0 %v2239, 124
    %v3167 = vpop.permute.xlu0 %3166
    %3168 = vrot.lane.b32.xlu0 %v2240, 124
    %v3169 = vpop.permute.xlu0 %3168
    %3170 = vrot.lane.b32.xlu0 %v2241, 124
    %v3171 = vpop.permute.xlu0 %3170
    %3172 = vrot.lane.b32.xlu0 %v2242, 124
    %v3173 = vpop.permute.xlu0 %3172
    %3174 = vrot.lane.b32.xlu0 %v2243, 124
    %v3175 = vpop.permute.xlu0 %3174
    %3176 = vrot.lane.b32.xlu0 %v2244, 124
    %v3177 = vpop.permute.xlu0 %3176
    %3178 = vrot.lane.b32.xlu0 %v2245, 124
    %v3179 = vpop.permute.xlu0 %3178
    %3180 = vrot.lane.b32.xlu0 %v2246, 124
    %v3181 = vpop.permute.xlu0 %3180
    %3182 = vrot.lane.b32.xlu0 %v2247, 124
    %v3183 = vpop.permute.xlu0 %3182
    %3184 = vrot.lane.b32.xlu0 %v2248, 124
    %v3185 = vpop.permute.xlu0 %3184
    %3186 = vrot.lane.b32.xlu0 %v2249, 124
    %v3187 = vpop.permute.xlu0 %3186
    %3188 = vrot.lane.b32.xlu0 %v2250, 124
    %v3189 = vpop.permute.xlu0 %3188
    %3190 = vrot.lane.b32.xlu0 %v2251, 124
    %v3191 = vpop.permute.xlu0 %3190
    %3192 = vrot.lane.b32.xlu0 %v2252, 124
    %v3193 = vpop.permute.xlu0 %3192
    %3194 = vrot.lane.b32.xlu0 %v2253, 124
    %v3195 = vpop.permute.xlu0 %3194
    %3196 = vrot.lane.b32.xlu0 %v2254, 124
    %v3197 = vpop.permute.xlu0 %3196
    %3198 = vrot.lane.b32.xlu0 %v2255, 124
    %v3199 = vpop.permute.xlu0 %3198
    %3200 = vrot.lane.b32.xlu0 %v2256, 124
    %v3201 = vpop.permute.xlu0 %3200
    %3202 = vrot.lane.b32.xlu0 %v2257, 124
    %v3203 = vpop.permute.xlu0 %3202
    %3204 = vrot.lane.b32.xlu0 %v2258, 124
    %v3205 = vpop.permute.xlu0 %3204
    %3206 = vrot.lane.b32.xlu0 %v2259, 124
    %v3207 = vpop.permute.xlu0 %3206
    %3208 = vrot.lane.b32.xlu0 %v2260, 124
    %v3209 = vpop.permute.xlu0 %3208
    %3210 = vrot.lane.b32.xlu0 %v2261, 124
    %v3211 = vpop.permute.xlu0 %3210
    %3212 = vrot.lane.b32.xlu0 %v2262, 124
    %v3213 = vpop.permute.xlu0 %3212
    %3214 = vrot.lane.b32.xlu0 %v2263, 124
    %v3215 = vpop.permute.xlu0 %3214
    %3216 = vrot.lane.b32.xlu0 %v2264, 124
    %v3217 = vpop.permute.xlu0 %3216
    %3218 = vrot.lane.b32.xlu0 %v2265, 124
    %v3219 = vpop.permute.xlu0 %3218
    %3220 = vrot.lane.b32.xlu0 %v2266, 124
    %v3221 = vpop.permute.xlu0 %3220
    %3222 = vrot.lane.b32.xlu0 %v2267, 124
    %v3223 = vpop.permute.xlu0 %3222
    %3224 = vrot.lane.b32.xlu0 %v2268, 124
    %v3225 = vpop.permute.xlu0 %3224
    %3226 = vrot.lane.b32.xlu0 %v2269, 124
    %v3227 = vpop.permute.xlu0 %3226
    %3228 = vrot.lane.b32.xlu0 %v2270, 124
    %v3229 = vpop.permute.xlu0 %3228
    %3230 = vrot.lane.b32.xlu0 %v2271, 124
    %v3231 = vpop.permute.xlu0 %3230
    %v3312 = vadd.f32 %v2992, %v3073
    %v3313 = vadd.f32 %v2993, %v3075
    %v3314 = vadd.f32 %v2994, %v3077
    %v3315 = vadd.f32 %v2995, %v3079
    %v3316 = vadd.f32 %v2996, %v3081
    %v3317 = vadd.f32 %v2997, %v3083
    %v3318 = vadd.f32 %v2998, %v3085
    %v3319 = vadd.f32 %v2999, %v3087
    %v3320 = vadd.f32 %v3000, %v3089
    %v3321 = vadd.f32 %v3001, %v3091
    %v3322 = vadd.f32 %v3002, %v3093
    %v3323 = vadd.f32 %v3003, %v3095
    %v3324 = vadd.f32 %v3004, %v3097
    %v3325 = vadd.f32 %v3005, %v3099
    %v3326 = vadd.f32 %v3006, %v3101
    %v3327 = vadd.f32 %v3007, %v3103
    %v3328 = vadd.f32 %v3008, %v3105
    %v3329 = vadd.f32 %v3009, %v3107
    %v3330 = vadd.f32 %v3010, %v3109
    %v3331 = vadd.f32 %v3011, %v3111
    %v3332 = vadd.f32 %v3012, %v3113
    %v3333 = vadd.f32 %v3013, %v3115
    %v3334 = vadd.f32 %v3014, %v3117
    %v3335 = vadd.f32 %v3015, %v3119
    %v3336 = vadd.f32 %v3016, %v3121
    %v3337 = vadd.f32 %v3017, %v3123
    %v3338 = vadd.f32 %v3018, %v3125
    %v3339 = vadd.f32 %v3019, %v3127
    %v3340 = vadd.f32 %v3020, %v3129
    %v3341 = vadd.f32 %v3021, %v3131
    %v3342 = vadd.f32 %v3022, %v3133
    %v3343 = vadd.f32 %v3023, %v3135
    %v3344 = vadd.f32 %v3024, %v3137
    %v3345 = vadd.f32 %v3025, %v3139
    %v3346 = vadd.f32 %v3026, %v3141
    %v3347 = vadd.f32 %v3027, %v3143
    %v3348 = vadd.f32 %v3028, %v3145
    %v3349 = vadd.f32 %v3029, %v3147
    %v3350 = vadd.f32 %v3030, %v3149
    %v3351 = vadd.f32 %v3031, %v3151
    %v3352 = vadd.f32 %v3032, %v3153
    %v3353 = vadd.f32 %v3033, %v3155
    %v3354 = vadd.f32 %v3034, %v3157
    %v3355 = vadd.f32 %v3035, %v3159
    %v3356 = vadd.f32 %v3036, %v3161
    %v3357 = vadd.f32 %v3037, %v3163
    %v3358 = vadd.f32 %v3038, %v3165
    %v3359 = vadd.f32 %v3039, %v3167
    %v3360 = vadd.f32 %v3040, %v3169
    %v3361 = vadd.f32 %v3041, %v3171
    %v3362 = vadd.f32 %v3042, %v3173
    %v3363 = vadd.f32 %v3043, %v3175
    %v3364 = vadd.f32 %v3044, %v3177
    %v3365 = vadd.f32 %v3045, %v3179
    %v3366 = vadd.f32 %v3046, %v3181
    %v3367 = vadd.f32 %v3047, %v3183
    %v3368 = vadd.f32 %v3048, %v3185
    %v3369 = vadd.f32 %v3049, %v3187
    %v3370 = vadd.f32 %v3050, %v3189
    %v3371 = vadd.f32 %v3051, %v3191
    %v3372 = vadd.f32 %v3052, %v3193
    %v3373 = vadd.f32 %v3053, %v3195
    %v3374 = vadd.f32 %v3054, %v3197
    %v3375 = vadd.f32 %v3055, %v3199
    %v3376 = vadd.f32 %v3056, %v3201
    %v3377 = vadd.f32 %v3057, %v3203
    %v3378 = vadd.f32 %v3058, %v3205
    %v3379 = vadd.f32 %v3059, %v3207
    %v3380 = vadd.f32 %v3060, %v3209
    %v3381 = vadd.f32 %v3061, %v3211
    %v3382 = vadd.f32 %v3062, %v3213
    %v3383 = vadd.f32 %v3063, %v3215
    %v3384 = vadd.f32 %v3064, %v3217
    %v3385 = vadd.f32 %v3065, %v3219
    %v3386 = vadd.f32 %v3066, %v3221
    %v3387 = vadd.f32 %v3067, %v3223
    %v3388 = vadd.f32 %v3068, %v3225
    %v3389 = vadd.f32 %v3069, %v3227
    %v3390 = vadd.f32 %v3070, %v3229
    %v3391 = vadd.f32 %v3071, %v3231
    %v3392 = vmul.f32 %v3312, %v3328
    %v3393 = vmul.f32 %v3313, %v3329
    %v3394 = vmul.f32 %v3314, %v3330
    %v3395 = vmul.f32 %v3315, %v3331
    %v3396 = vmul.f32 %v3316, %v3332
    %v3397 = vmul.f32 %v3317, %v3333
    %v3398 = vmul.f32 %v3318, %v3334
    %v3399 = vmul.f32 %v3319, %v3335
    %v3400 = vmul.f32 %v3320, %v3336
    %v3401 = vmul.f32 %v3321, %v3337
    %v3402 = vmul.f32 %v3322, %v3338
    %v3403 = vmul.f32 %v3323, %v3339
    %v3404 = vmul.f32 %v3324, %v3340
    %v3405 = vmul.f32 %v3325, %v3341
    %v3406 = vmul.f32 %v3326, %v3342
    %v3407 = vmul.f32 %v3327, %v3343
    %v3408 = vmul.f32 %v3312, %v3312
    %v3409 = vmul.f32 %v3313, %v3313
    %v3410 = vmul.f32 %v3314, %v3314
    %v3411 = vmul.f32 %v3315, %v3315
    %v3412 = vmul.f32 %v3316, %v3316
    %v3413 = vmul.f32 %v3317, %v3317
    %v3414 = vmul.f32 %v3318, %v3318
    %v3415 = vmul.f32 %v3319, %v3319
    %v3416 = vmul.f32 %v3320, %v3320
    %v3417 = vmul.f32 %v3321, %v3321
    %v3418 = vmul.f32 %v3322, %v3322
    %v3419 = vmul.f32 %v3323, %v3323
    %v3420 = vmul.f32 %v3324, %v3324
    %v3421 = vmul.f32 %v3325, %v3325
    %v3422 = vmul.f32 %v3326, %v3326
    %v3423 = vmul.f32 %v3327, %v3327
    %v3424 = vmul.f32 %v3328, %v3328
    %v3425 = vmul.f32 %v3329, %v3329
    %v3426 = vmul.f32 %v3330, %v3330
    %v3427 = vmul.f32 %v3331, %v3331
    %v3428 = vmul.f32 %v3332, %v3332
    %v3429 = vmul.f32 %v3333, %v3333
    %v3430 = vmul.f32 %v3334, %v3334
    %v3431 = vmul.f32 %v3335, %v3335
    %v3432 = vmul.f32 %v3336, %v3336
    %v3433 = vmul.f32 %v3337, %v3337
    %v3434 = vmul.f32 %v3338, %v3338
    %v3435 = vmul.f32 %v3339, %v3339
    %v3436 = vmul.f32 %v3340, %v3340
    %v3437 = vmul.f32 %v3341, %v3341
    %v3438 = vmul.f32 %v3342, %v3342
    %v3439 = vmul.f32 %v3343, %v3343
    %v3440 = vmul.f32 %v3344, 25.0
    %v3441 = vmul.f32 %v3345, 25.0
    %v3442 = vmul.f32 %v3346, 25.0
    %v3443 = vmul.f32 %v3347, 25.0
    %v3444 = vmul.f32 %v3348, 25.0
    %v3445 = vmul.f32 %v3349, 25.0
    %v3446 = vmul.f32 %v3350, 25.0
    %v3447 = vmul.f32 %v3351, 25.0
    %v3448 = vmul.f32 %v3352, 25.0
    %v3449 = vmul.f32 %v3353, 25.0
    %v3450 = vmul.f32 %v3354, 25.0
    %v3451 = vmul.f32 %v3355, 25.0
    %v3452 = vmul.f32 %v3356, 25.0
    %v3453 = vmul.f32 %v3357, 25.0
    %v3454 = vmul.f32 %v3358, 25.0
    %v3455 = vmul.f32 %v3359, 25.0
    %v3456 = vsub.f32 %v3440, %v3408
    %v3457 = vsub.f32 %v3441, %v3409
    %v3458 = vsub.f32 %v3442, %v3410
    %v3459 = vsub.f32 %v3443, %v3411
    %v3460 = vsub.f32 %v3444, %v3412
    %v3461 = vsub.f32 %v3445, %v3413
    %v3462 = vsub.f32 %v3446, %v3414
    %v3463 = vsub.f32 %v3447, %v3415
    %v3464 = vsub.f32 %v3448, %v3416
    %v3465 = vsub.f32 %v3449, %v3417
    %v3466 = vsub.f32 %v3450, %v3418
    %v3467 = vsub.f32 %v3451, %v3419
    %v3468 = vsub.f32 %v3452, %v3420
    %v3469 = vsub.f32 %v3453, %v3421
    %v3470 = vsub.f32 %v3454, %v3422
    %v3471 = vsub.f32 %v3455, %v3423
    %v3472 = vmax.f32 %v3456, 0.000625
    %v3473 = vmax.f32 %v3457, 0.000625
    %v3474 = vmax.f32 %v3458, 0.000625
    %v3475 = vmax.f32 %v3459, 0.000625
    %v3476 = vmax.f32 %v3460, 0.000625
    %v3477 = vmax.f32 %v3461, 0.000625
    %v3478 = vmax.f32 %v3462, 0.000625
    %v3479 = vmax.f32 %v3463, 0.000625
    %v3480 = vmax.f32 %v3464, 0.000625
    %v3481 = vmax.f32 %v3465, 0.000625
    %v3482 = vmax.f32 %v3466, 0.000625
    %v3483 = vmax.f32 %v3467, 0.000625
    %v3484 = vmax.f32 %v3468, 0.000625
    %v3485 = vmax.f32 %v3469, 0.000625
    %v3486 = vmax.f32 %v3470, 0.000625
    %v3487 = vmax.f32 %v3471, 0.000625
    %v3488 = vmul.f32 %v3360, 25.0
    %v3489 = vmul.f32 %v3361, 25.0
    %v3490 = vmul.f32 %v3362, 25.0
    %v3491 = vmul.f32 %v3363, 25.0
    %v3492 = vmul.f32 %v3364, 25.0
    %v3493 = vmul.f32 %v3365, 25.0
    %v3494 = vmul.f32 %v3366, 25.0
    %v3495 = vmul.f32 %v3367, 25.0
    %v3496 = vmul.f32 %v3368, 25.0
    %v3497 = vmul.f32 %v3369, 25.0
    %v3498 = vmul.f32 %v3370, 25.0
    %v3499 = vmul.f32 %v3371, 25.0
    %v3500 = vmul.f32 %v3372, 25.0
    %v3501 = vmul.f32 %v3373, 25.0
    %v3502 = vmul.f32 %v3374, 25.0
    %v3503 = vmul.f32 %v3375, 25.0
    %v3504 = vsub.f32 %v3488, %v3424
    %v3505 = vsub.f32 %v3489, %v3425
    %v3506 = vsub.f32 %v3490, %v3426
    %v3507 = vsub.f32 %v3491, %v3427
    %v3508 = vsub.f32 %v3492, %v3428
    %v3509 = vsub.f32 %v3493, %v3429
    %v3510 = vsub.f32 %v3494, %v3430
    %v3511 = vsub.f32 %v3495, %v3431
    %v3512 = vsub.f32 %v3496, %v3432
    %v3513 = vsub.f32 %v3497, %v3433
    %v3514 = vsub.f32 %v3498, %v3434
    %v3515 = vsub.f32 %v3499, %v3435
    %v3516 = vsub.f32 %v3500, %v3436
    %v3517 = vsub.f32 %v3501, %v3437
    %v3518 = vsub.f32 %v3502, %v3438
    %v3519 = vsub.f32 %v3503, %v3439
    %v3520 = vmax.f32 %v3504, 0.000625
    %v3521 = vmax.f32 %v3505, 0.000625
    %v3522 = vmax.f32 %v3506, 0.000625
    %v3523 = vmax.f32 %v3507, 0.000625
    %v3524 = vmax.f32 %v3508, 0.000625
    %v3525 = vmax.f32 %v3509, 0.000625
    %v3526 = vmax.f32 %v3510, 0.000625
    %v3527 = vmax.f32 %v3511, 0.000625
    %v3528 = vmax.f32 %v3512, 0.000625
    %v3529 = vmax.f32 %v3513, 0.000625
    %v3530 = vmax.f32 %v3514, 0.000625
    %v3531 = vmax.f32 %v3515, 0.000625
    %v3532 = vmax.f32 %v3516, 0.000625
    %v3533 = vmax.f32 %v3517, 0.000625
    %v3534 = vmax.f32 %v3518, 0.000625
    %v3535 = vmax.f32 %v3519, 0.000625
    %v3536 = vmul.f32 %v3376, 25.0
    %v3537 = vmul.f32 %v3377, 25.0
    %v3538 = vmul.f32 %v3378, 25.0
    %v3539 = vmul.f32 %v3379, 25.0
    %v3540 = vmul.f32 %v3380, 25.0
    %v3541 = vmul.f32 %v3381, 25.0
    %v3542 = vmul.f32 %v3382, 25.0
    %v3543 = vmul.f32 %v3383, 25.0
    %v3544 = vmul.f32 %v3384, 25.0
    %v3545 = vmul.f32 %v3385, 25.0
    %v3546 = vmul.f32 %v3386, 25.0
    %v3547 = vmul.f32 %v3387, 25.0
    %v3548 = vmul.f32 %v3388, 25.0
    %v3549 = vmul.f32 %v3389, 25.0
    %v3550 = vmul.f32 %v3390, 25.0
    %v3551 = vmul.f32 %v3391, 25.0
    %v3552 = vsub.f32 %v3536, %v3392
    %v3553 = vsub.f32 %v3537, %v3393
    %v3554 = vsub.f32 %v3538, %v3394
    %v3555 = vsub.f32 %v3539, %v3395
    %v3556 = vsub.f32 %v3540, %v3396
    %v3557 = vsub.f32 %v3541, %v3397
    %v3558 = vsub.f32 %v3542, %v3398
    %v3559 = vsub.f32 %v3543, %v3399
    %v3560 = vsub.f32 %v3544, %v3400
    %v3561 = vsub.f32 %v3545, %v3401
    %v3562 = vsub.f32 %v3546, %v3402
    %v3563 = vsub.f32 %v3547, %v3403
    %v3564 = vsub.f32 %v3548, %v3404
    %v3565 = vsub.f32 %v3549, %v3405
    %v3566 = vsub.f32 %v3550, %v3406
    %v3567 = vsub.f32 %v3551, %v3407
    %v3568 = vmax.f32 %v3552, 0.000625
    %v3569 = vmax.f32 %v3553, 0.000625
    %v3570 = vmax.f32 %v3554, 0.000625
    %v3571 = vmax.f32 %v3555, 0.000625
    %v3572 = vmax.f32 %v3556, 0.000625
    %v3573 = vmax.f32 %v3557, 0.000625
    %v3574 = vmax.f32 %v3558, 0.000625
    %v3575 = vmax.f32 %v3559, 0.000625
    %v3576 = vmax.f32 %v3560, 0.000625
    %v3577 = vmax.f32 %v3561, 0.000625
    %v3578 = vmax.f32 %v3562, 0.000625
    %v3579 = vmax.f32 %v3563, 0.000625
    %v3580 = vmax.f32 %v3564, 0.000625
    %v3581 = vmax.f32 %v3565, 0.000625
    %v3582 = vmax.f32 %v3566, 0.000625
    %v3583 = vmax.f32 %v3567, 0.000625
    %v3584 = vmul.f32 %v3392, 2.0
    %v3585 = vmul.f32 %v3393, 2.0
    %v3586 = vmul.f32 %v3394, 2.0
    %v3587 = vmul.f32 %v3395, 2.0
    %v3588 = vmul.f32 %v3396, 2.0
    %v3589 = vmul.f32 %v3397, 2.0
    %v3590 = vmul.f32 %v3398, 2.0
    %v3591 = vmul.f32 %v3399, 2.0
    %v3592 = vmul.f32 %v3400, 2.0
    %v3593 = vmul.f32 %v3401, 2.0
    %v3594 = vmul.f32 %v3402, 2.0
    %v3595 = vmul.f32 %v3403, 2.0
    %v3596 = vmul.f32 %v3404, 2.0
    %v3597 = vmul.f32 %v3405, 2.0
    %v3598 = vmul.f32 %v3406, 2.0
    %v3599 = vmul.f32 %v3407, 2.0
    %v3600 = vadd.f32 %v3584, 0.0625
    %v3601 = vadd.f32 %v3585, 0.0625
    %v3602 = vadd.f32 %v3586, 0.0625
    %v3603 = vadd.f32 %v3587, 0.0625
    %v3604 = vadd.f32 %v3588, 0.0625
    %v3605 = vadd.f32 %v3589, 0.0625
    %v3606 = vadd.f32 %v3590, 0.0625
    %v3607 = vadd.f32 %v3591, 0.0625
    %v3608 = vadd.f32 %v3592, 0.0625
    %v3609 = vadd.f32 %v3593, 0.0625
    %v3610 = vadd.f32 %v3594, 0.0625
    %v3611 = vadd.f32 %v3595, 0.0625
    %v3612 = vadd.f32 %v3596, 0.0625
    %v3613 = vadd.f32 %v3597, 0.0625
    %v3614 = vadd.f32 %v3598, 0.0625
    %v3615 = vadd.f32 %v3599, 0.0625
    %v3616 = vmul.f32 %v3568, 2.0
    %v3617 = vmul.f32 %v3569, 2.0
    %v3618 = vmul.f32 %v3570, 2.0
    %v3619 = vmul.f32 %v3571, 2.0
    %v3620 = vmul.f32 %v3572, 2.0
    %v3621 = vmul.f32 %v3573, 2.0
    %v3622 = vmul.f32 %v3574, 2.0
    %v3623 = vmul.f32 %v3575, 2.0
    %v3624 = vmul.f32 %v3576, 2.0
    %v3625 = vmul.f32 %v3577, 2.0
    %v3626 = vmul.f32 %v3578, 2.0
    %v3627 = vmul.f32 %v3579, 2.0
    %v3628 = vmul.f32 %v3580, 2.0
    %v3629 = vmul.f32 %v3581, 2.0
    %v3630 = vmul.f32 %v3582, 2.0
    %v3631 = vmul.f32 %v3583, 2.0
    %v3632 = vadd.f32 %v3616, 0.5625
    %v3633 = vadd.f32 %v3617, 0.5625
    %v3634 = vadd.f32 %v3618, 0.5625
    %v3635 = vadd.f32 %v3619, 0.5625
    %v3636 = vadd.f32 %v3620, 0.5625
    %v3637 = vadd.f32 %v3621, 0.5625
    %v3638 = vadd.f32 %v3622, 0.5625
    %v3639 = vadd.f32 %v3623, 0.5625
    %v3640 = vadd.f32 %v3624, 0.5625
    %v3641 = vadd.f32 %v3625, 0.5625
    %v3642 = vadd.f32 %v3626, 0.5625
    %v3643 = vadd.f32 %v3627, 0.5625
    %v3644 = vadd.f32 %v3628, 0.5625
    %v3645 = vadd.f32 %v3629, 0.5625
    %v3646 = vadd.f32 %v3630, 0.5625
    %v3647 = vadd.f32 %v3631, 0.5625
    %v3648 = vmul.f32 %v3600, %v3632
    %v3649 = vmul.f32 %v3601, %v3633
    %v3650 = vmul.f32 %v3602, %v3634
    %v3651 = vmul.f32 %v3603, %v3635
    %v3652 = vmul.f32 %v3604, %v3636
    %v3653 = vmul.f32 %v3605, %v3637
    %v3654 = vmul.f32 %v3606, %v3638
    %v3655 = vmul.f32 %v3607, %v3639
    %v3656 = vmul.f32 %v3608, %v3640
    %v3657 = vmul.f32 %v3609, %v3641
    %v3658 = vmul.f32 %v3610, %v3642
    %v3659 = vmul.f32 %v3611, %v3643
    %v3660 = vmul.f32 %v3612, %v3644
    %v3661 = vmul.f32 %v3613, %v3645
    %v3662 = vmul.f32 %v3614, %v3646
    %v3663 = vmul.f32 %v3615, %v3647
    %v3664 = vadd.f32 %v3408, %v3424
    %v3665 = vadd.f32 %v3409, %v3425
    %v3666 = vadd.f32 %v3410, %v3426
    %v3667 = vadd.f32 %v3411, %v3427
    %v3668 = vadd.f32 %v3412, %v3428
    %v3669 = vadd.f32 %v3413, %v3429
    %v3670 = vadd.f32 %v3414, %v3430
    %v3671 = vadd.f32 %v3415, %v3431
    %v3672 = vadd.f32 %v3416, %v3432
    %v3673 = vadd.f32 %v3417, %v3433
    %v3674 = vadd.f32 %v3418, %v3434
    %v3675 = vadd.f32 %v3419, %v3435
    %v3676 = vadd.f32 %v3420, %v3436
    %v3677 = vadd.f32 %v3421, %v3437
    %v3678 = vadd.f32 %v3422, %v3438
    %v3679 = vadd.f32 %v3423, %v3439
    %v3680 = vadd.f32 %v3664, 0.0625
    %v3681 = vadd.f32 %v3665, 0.0625
    %v3682 = vadd.f32 %v3666, 0.0625
    %v3683 = vadd.f32 %v3667, 0.0625
    %v3684 = vadd.f32 %v3668, 0.0625
    %v3685 = vadd.f32 %v3669, 0.0625
    %v3686 = vadd.f32 %v3670, 0.0625
    %v3687 = vadd.f32 %v3671, 0.0625
    %v3688 = vadd.f32 %v3672, 0.0625
    %v3689 = vadd.f32 %v3673, 0.0625
    %v3690 = vadd.f32 %v3674, 0.0625
    %v3691 = vadd.f32 %v3675, 0.0625
    %v3692 = vadd.f32 %v3676, 0.0625
    %v3693 = vadd.f32 %v3677, 0.0625
    %v3694 = vadd.f32 %v3678, 0.0625
    %v3695 = vadd.f32 %v3679, 0.0625
    %v3696 = vadd.f32 %v3472, %v3520
    %v3697 = vadd.f32 %v3473, %v3521
    %v3698 = vadd.f32 %v3474, %v3522
    %v3699 = vadd.f32 %v3475, %v3523
    %v3700 = vadd.f32 %v3476, %v3524
    %v3701 = vadd.f32 %v3477, %v3525
    %v3702 = vadd.f32 %v3478, %v3526
    %v3703 = vadd.f32 %v3479, %v3527
    %v3704 = vadd.f32 %v3480, %v3528
    %v3705 = vadd.f32 %v3481, %v3529
    %v3706 = vadd.f32 %v3482, %v3530
    %v3707 = vadd.f32 %v3483, %v3531
    %v3708 = vadd.f32 %v3484, %v3532
    %v3709 = vadd.f32 %v3485, %v3533
    %v3710 = vadd.f32 %v3486, %v3534
    %v3711 = vadd.f32 %v3487, %v3535
    %v3712 = vadd.f32 %v3696, 0.5625
    %v3713 = vadd.f32 %v3697, 0.5625
    %v3714 = vadd.f32 %v3698, 0.5625
    %v3715 = vadd.f32 %v3699, 0.5625
    %v3716 = vadd.f32 %v3700, 0.5625
    %v3717 = vadd.f32 %v3701, 0.5625
    %v3718 = vadd.f32 %v3702, 0.5625
    %v3719 = vadd.f32 %v3703, 0.5625
    %v3720 = vadd.f32 %v3704, 0.5625
    %v3721 = vadd.f32 %v3705, 0.5625
    %v3722 = vadd.f32 %v3706, 0.5625
    %v3723 = vadd.f32 %v3707, 0.5625
    %v3724 = vadd.f32 %v3708, 0.5625
    %v3725 = vadd.f32 %v3709, 0.5625
    %v3726 = vadd.f32 %v3710, 0.5625
    %v3727 = vadd.f32 %v3711, 0.5625
    %v3728 = vmul.f32 %v3680, %v3712
    %v3729 = vmul.f32 %v3681, %v3713
    %v3730 = vmul.f32 %v3682, %v3714
    %v3731 = vmul.f32 %v3683, %v3715
    %v3732 = vmul.f32 %v3684, %v3716
    %v3733 = vmul.f32 %v3685, %v3717
    %v3734 = vmul.f32 %v3686, %v3718
    %v3735 = vmul.f32 %v3687, %v3719
    %v3736 = vmul.f32 %v3688, %v3720
    %v3737 = vmul.f32 %v3689, %v3721
    %v3738 = vmul.f32 %v3690, %v3722
    %v3739 = vmul.f32 %v3691, %v3723
    %v3740 = vmul.f32 %v3692, %v3724
    %v3741 = vmul.f32 %v3693, %v3725
    %v3742 = vmul.f32 %v3694, %v3726
    %v3743 = vmul.f32 %v3695, %v3727
    %v3744 = vrcp.pop %v3728
    %v3745 = vmul.f32 %v3728, %v3744
    %v3746 = vsub.f32 1.0, %v3745
    %v3747 = vmul.f32 %v3744, %v3746
    %v3748 = vadd.f32 %v3744, %v3747
    %vm3749 = vweird.f32 %v3728
    %vm3750 = vweird.f32 %v3744
    %vm3751 = vmor %vm3749, %vm3750
    %v3752 = vsel %vm3751, %v3744, %v3748
    %v3753 = vand.u32 2147483647, %v3728
    %vm3754 = vcmp.eq.f32.partialorder %v3753, 8.507059e+37
    %v3755 = vand.u32 %v3728, 2147483648
    %v3756 = vor.u32 1.1754944e-38, %v3755
    %v3757 = vsel %vm3754, %v3756, %v3752
    %v3758 = vmul.f32 1.0, %v3757
    %v3759 = vrcp.pop %v3729
    %v3760 = vmul.f32 %v3729, %v3759
    %v3761 = vsub.f32 1.0, %v3760
    %v3762 = vmul.f32 %v3759, %v3761
    %v3763 = vadd.f32 %v3759, %v3762
    %vm3764 = vweird.f32 %v3729
    %vm3765 = vweird.f32 %v3759
    %vm3766 = vmor %vm3764, %vm3765
    %v3767 = vsel %vm3766, %v3759, %v3763
    %v3768 = vand.u32 2147483647, %v3729
    %vm3769 = vcmp.eq.f32.partialorder %v3768, 8.507059e+37
    %v3770 = vand.u32 %v3729, 2147483648
    %v3771 = vor.u32 1.1754944e-38, %v3770
    %v3772 = vsel %vm3769, %v3771, %v3767
    %v3773 = vmul.f32 1.0, %v3772
    %v3774 = vrcp.pop %v3730
    %v3775 = vmul.f32 %v3730, %v3774
    %v3776 = vsub.f32 1.0, %v3775
    %v3777 = vmul.f32 %v3774, %v3776
    %v3778 = vadd.f32 %v3774, %v3777
    %vm3779 = vweird.f32 %v3730
    %vm3780 = vweird.f32 %v3774
    %vm3781 = vmor %vm3779, %vm3780
    %v3782 = vsel %vm3781, %v3774, %v3778
    %v3783 = vand.u32 2147483647, %v3730
    %vm3784 = vcmp.eq.f32.partialorder %v3783, 8.507059e+37
    %v3785 = vand.u32 %v3730, 2147483648
    %v3786 = vor.u32 1.1754944e-38, %v3785
    %v3787 = vsel %vm3784, %v3786, %v3782
    %v3788 = vmul.f32 1.0, %v3787
    %v3789 = vrcp.pop %v3731
    %v3790 = vmul.f32 %v3731, %v3789
    %v3791 = vsub.f32 1.0, %v3790
    %v3792 = vmul.f32 %v3789, %v3791
    %v3793 = vadd.f32 %v3789, %v3792
    %vm3794 = vweird.f32 %v3731
    %vm3795 = vweird.f32 %v3789
    %vm3796 = vmor %vm3794, %vm3795
    %v3797 = vsel %vm3796, %v3789, %v3793
    %v3798 = vand.u32 2147483647, %v3731
    %vm3799 = vcmp.eq.f32.partialorder %v3798, 8.507059e+37
    %v3800 = vand.u32 %v3731, 2147483648
    %v3801 = vor.u32 1.1754944e-38, %v3800
    %v3802 = vsel %vm3799, %v3801, %v3797
    %v3803 = vmul.f32 1.0, %v3802
    %v3804 = vrcp.pop %v3732
    %v3805 = vmul.f32 %v3732, %v3804
    %v3806 = vsub.f32 1.0, %v3805
    %v3807 = vmul.f32 %v3804, %v3806
    %v3808 = vadd.f32 %v3804, %v3807
    %vm3809 = vweird.f32 %v3732
    %vm3810 = vweird.f32 %v3804
    %vm3811 = vmor %vm3809, %vm3810
    %v3812 = vsel %vm3811, %v3804, %v3808
    %v3813 = vand.u32 2147483647, %v3732
    %vm3814 = vcmp.eq.f32.partialorder %v3813, 8.507059e+37
    %v3815 = vand.u32 %v3732, 2147483648
    %v3816 = vor.u32 1.1754944e-38, %v3815
    %v3817 = vsel %vm3814, %v3816, %v3812
    %v3818 = vmul.f32 1.0, %v3817
    %v3819 = vrcp.pop %v3733
    %v3820 = vmul.f32 %v3733, %v3819
    %v3821 = vsub.f32 1.0, %v3820
    %v3822 = vmul.f32 %v3819, %v3821
    %v3823 = vadd.f32 %v3819, %v3822
    %vm3824 = vweird.f32 %v3733
    %vm3825 = vweird.f32 %v3819
    %vm3826 = vmor %vm3824, %vm3825
    %v3827 = vsel %vm3826, %v3819, %v3823
    %v3828 = vand.u32 2147483647, %v3733
    %vm3829 = vcmp.eq.f32.partialorder %v3828, 8.507059e+37
    %v3830 = vand.u32 %v3733, 2147483648
    %v3831 = vor.u32 1.1754944e-38, %v3830
    %v3832 = vsel %vm3829, %v3831, %v3827
    %v3833 = vmul.f32 1.0, %v3832
    %v3834 = vrcp.pop %v3734
    %v3835 = vmul.f32 %v3734, %v3834
    %v3836 = vsub.f32 1.0, %v3835
    %v3837 = vmul.f32 %v3834, %v3836
    %v3838 = vadd.f32 %v3834, %v3837
    %vm3839 = vweird.f32 %v3734
    %vm3840 = vweird.f32 %v3834
    %vm3841 = vmor %vm3839, %vm3840
    %v3842 = vsel %vm3841, %v3834, %v3838
    %v3843 = vand.u32 2147483647, %v3734
    %vm3844 = vcmp.eq.f32.partialorder %v3843, 8.507059e+37
    %v3845 = vand.u32 %v3734, 2147483648
    %v3846 = vor.u32 1.1754944e-38, %v3845
    %v3847 = vsel %vm3844, %v3846, %v3842
    %v3848 = vmul.f32 1.0, %v3847
    %v3849 = vrcp.pop %v3735
    %v3850 = vmul.f32 %v3735, %v3849
    %v3851 = vsub.f32 1.0, %v3850
    %v3852 = vmul.f32 %v3849, %v3851
    %v3853 = vadd.f32 %v3849, %v3852
    %vm3854 = vweird.f32 %v3735
    %vm3855 = vweird.f32 %v3849
    %vm3856 = vmor %vm3854, %vm3855
    %v3857 = vsel %vm3856, %v3849, %v3853
    %v3858 = vand.u32 2147483647, %v3735
    %vm3859 = vcmp.eq.f32.partialorder %v3858, 8.507059e+37
    %v3860 = vand.u32 %v3735, 2147483648
    %v3861 = vor.u32 1.1754944e-38, %v3860
    %v3862 = vsel %vm3859, %v3861, %v3857
    %v3863 = vmul.f32 1.0, %v3862
    %v3864 = vrcp.pop %v3736
    %v3865 = vmul.f32 %v3736, %v3864
    %v3866 = vsub.f32 1.0, %v3865
    %v3867 = vmul.f32 %v3864, %v3866
    %v3868 = vadd.f32 %v3864, %v3867
    %vm3869 = vweird.f32 %v3736
    %vm3870 = vweird.f32 %v3864
    %vm3871 = vmor %vm3869, %vm3870
    %v3872 = vsel %vm3871, %v3864, %v3868
    %v3873 = vand.u32 2147483647, %v3736
    %vm3874 = vcmp.eq.f32.partialorder %v3873, 8.507059e+37
    %v3875 = vand.u32 %v3736, 2147483648
    %v3876 = vor.u32 1.1754944e-38, %v3875
    %v3877 = vsel %vm3874, %v3876, %v3872
    %v3878 = vmul.f32 1.0, %v3877
    %v3879 = vrcp.pop %v3737
    %v3880 = vmul.f32 %v3737, %v3879
    %v3881 = vsub.f32 1.0, %v3880
    %v3882 = vmul.f32 %v3879, %v3881
    %v3883 = vadd.f32 %v3879, %v3882
    %vm3884 = vweird.f32 %v3737
    %vm3885 = vweird.f32 %v3879
    %vm3886 = vmor %vm3884, %vm3885
    %v3887 = vsel %vm3886, %v3879, %v3883
    %v3888 = vand.u32 2147483647, %v3737
    %vm3889 = vcmp.eq.f32.partialorder %v3888, 8.507059e+37
    %v3890 = vand.u32 %v3737, 2147483648
    %v3891 = vor.u32 1.1754944e-38, %v3890
    %v3892 = vsel %vm3889, %v3891, %v3887
    %v3893 = vmul.f32 1.0, %v3892
    %v3894 = vrcp.pop %v3738
    %v3895 = vmul.f32 %v3738, %v3894
    %v3896 = vsub.f32 1.0, %v3895
    %v3897 = vmul.f32 %v3894, %v3896
    %v3898 = vadd.f32 %v3894, %v3897
    %vm3899 = vweird.f32 %v3738
    %vm3900 = vweird.f32 %v3894
    %vm3901 = vmor %vm3899, %vm3900
    %v3902 = vsel %vm3901, %v3894, %v3898
    %v3903 = vand.u32 2147483647, %v3738
    %vm3904 = vcmp.eq.f32.partialorder %v3903, 8.507059e+37
    %v3905 = vand.u32 %v3738, 2147483648
    %v3906 = vor.u32 1.1754944e-38, %v3905
    %v3907 = vsel %vm3904, %v3906, %v3902
    %v3908 = vmul.f32 1.0, %v3907
    %v3909 = vrcp.pop %v3739
    %v3910 = vmul.f32 %v3739, %v3909
    %v3911 = vsub.f32 1.0, %v3910
    %v3912 = vmul.f32 %v3909, %v3911
    %v3913 = vadd.f32 %v3909, %v3912
    %vm3914 = vweird.f32 %v3739
    %vm3915 = vweird.f32 %v3909
    %vm3916 = vmor %vm3914, %vm3915
    %v3917 = vsel %vm3916, %v3909, %v3913
    %v3918 = vand.u32 2147483647, %v3739
    %vm3919 = vcmp.eq.f32.partialorder %v3918, 8.507059e+37
    %v3920 = vand.u32 %v3739, 2147483648
    %v3921 = vor.u32 1.1754944e-38, %v3920
    %v3922 = vsel %vm3919, %v3921, %v3917
    %v3923 = vmul.f32 1.0, %v3922
    %v3924 = vrcp.pop %v3740
    %v3925 = vmul.f32 %v3740, %v3924
    %v3926 = vsub.f32 1.0, %v3925
    %v3927 = vmul.f32 %v3924, %v3926
    %v3928 = vadd.f32 %v3924, %v3927
    %vm3929 = vweird.f32 %v3740
    %vm3930 = vweird.f32 %v3924
    %vm3931 = vmor %vm3929, %vm3930
    %v3932 = vsel %vm3931, %v3924, %v3928
    %v3933 = vand.u32 2147483647, %v3740
    %vm3934 = vcmp.eq.f32.partialorder %v3933, 8.507059e+37
    %v3935 = vand.u32 %v3740, 2147483648
    %v3936 = vor.u32 1.1754944e-38, %v3935
    %v3937 = vsel %vm3934, %v3936, %v3932
    %v3938 = vmul.f32 1.0, %v3937
    %v3939 = vrcp.pop %v3741
    %v3940 = vmul.f32 %v3741, %v3939
    %v3941 = vsub.f32 1.0, %v3940
    %v3942 = vmul.f32 %v3939, %v3941
    %v3943 = vadd.f32 %v3939, %v3942
    %vm3944 = vweird.f32 %v3741
    %vm3945 = vweird.f32 %v3939
    %vm3946 = vmor %vm3944, %vm3945
    %v3947 = vsel %vm3946, %v3939, %v3943
    %v3948 = vand.u32 2147483647, %v3741
    %vm3949 = vcmp.eq.f32.partialorder %v3948, 8.507059e+37
    %v3950 = vand.u32 %v3741, 2147483648
    %v3951 = vor.u32 1.1754944e-38, %v3950
    %v3952 = vsel %vm3949, %v3951, %v3947
    %v3953 = vmul.f32 1.0, %v3952
    %v3954 = vrcp.pop %v3742
    %v3955 = vmul.f32 %v3742, %v3954
    %v3956 = vsub.f32 1.0, %v3955
    %v3957 = vmul.f32 %v3954, %v3956
    %v3958 = vadd.f32 %v3954, %v3957
    %vm3959 = vweird.f32 %v3742
    %vm3960 = vweird.f32 %v3954
    %vm3961 = vmor %vm3959, %vm3960
    %v3962 = vsel %vm3961, %v3954, %v3958
    %v3963 = vand.u32 2147483647, %v3742
    %vm3964 = vcmp.eq.f32.partialorder %v3963, 8.507059e+37
    %v3965 = vand.u32 %v3742, 2147483648
    %v3966 = vor.u32 1.1754944e-38, %v3965
    %v3967 = vsel %vm3964, %v3966, %v3962
    %v3968 = vmul.f32 1.0, %v3967
    %v3969 = vrcp.pop %v3743
    %v3970 = vmul.f32 %v3743, %v3969
    %v3971 = vsub.f32 1.0, %v3970
    %v3972 = vmul.f32 %v3969, %v3971
    %v3973 = vadd.f32 %v3969, %v3972
    %vm3974 = vweird.f32 %v3743
    %vm3975 = vweird.f32 %v3969
    %vm3976 = vmor %vm3974, %vm3975
    %v3977 = vsel %vm3976, %v3969, %v3973
    %v3978 = vand.u32 2147483647, %v3743
    %vm3979 = vcmp.eq.f32.partialorder %v3978, 8.507059e+37
    %v3980 = vand.u32 %v3743, 2147483648
    %v3981 = vor.u32 1.1754944e-38, %v3980
    %v3982 = vsel %vm3979, %v3981, %v3977
    %v3983 = vmul.f32 1.0, %v3982
    %v3984 = vmul.f32 %v3648, %v3758
    %v3985 = vmul.f32 %v3649, %v3773
    %v3986 = vmul.f32 %v3650, %v3788
    %v3987 = vmul.f32 %v3651, %v3803
    %v3988 = vmul.f32 %v3652, %v3818
    %v3989 = vmul.f32 %v3653, %v3833
    %v3990 = vmul.f32 %v3654, %v3848
    %v3991 = vmul.f32 %v3655, %v3863
    %v3992 = vmul.f32 %v3656, %v3878
    %v3993 = vmul.f32 %v3657, %v3893
    %v3994 = vmul.f32 %v3658, %v3908
    %v3995 = vmul.f32 %v3659, %v3923
    %v3996 = vmul.f32 %v3660, %v3938
    %v3997 = vmul.f32 %v3661, %v3953
    %v3998 = vmul.f32 %v3662, %v3968
    %v3999 = vmul.f32 %v3663, %v3983
    %v4000 = vsel %vm444, %v3984, 0.0
    %v4001 = vsel %vm444, %v3985, 0.0
    %v4002 = vadd.f32 %v4000, %v4001
    %v4003 = vsel %vm444, %v3986, 0.0
    %v4004 = vadd.f32 %v4002, %v4003
    %v4005 = vsel %vm444, %v3987, 0.0
    %v4006 = vadd.f32 %v4004, %v4005
    %v4007 = vsel %vm444, %v3988, 0.0
    %v4008 = vadd.f32 %v4006, %v4007
    %v4009 = vsel %vm444, %v3989, 0.0
    %v4010 = vadd.f32 %v4008, %v4009
    %v4011 = vsel %vm444, %v3990, 0.0
    %v4012 = vadd.f32 %v4010, %v4011
    %v4013 = vsel %vm444, %v3991, 0.0
    %v4014 = vadd.f32 %v4012, %v4013
    %v4015 = vsel %vm444, %v3992, 0.0
    %v4016 = vadd.f32 %v4014, %v4015
    %v4017 = vsel %vm444, %v3993, 0.0
    %v4018 = vadd.f32 %v4016, %v4017
    %v4019 = vsel %vm444, %v3994, 0.0
    %v4020 = vadd.f32 %v4018, %v4019
    %v4021 = vsel %vm444, %v3995, 0.0
    %v4022 = vadd.f32 %v4020, %v4021
    %v4023 = vsel %vm444, %v3996, 0.0
    %v4024 = vadd.f32 %v4022, %v4023
    %v4025 = vsel %vm444, %v3997, 0.0
    %v4026 = vadd.f32 %v4024, %v4025
    %v4027 = vsel %vm444, %v3998, 0.0
    %v4028 = vadd.f32 %v4026, %v4027
    %v4029 = vsel %vm444, %v3999, 0.0
    %v4030 = vadd.f32 %v4028, %v4029
    %4031 = vadd.xlane.f32.xlu0 %v4030
    %v4032 = vpop.xlane.xlu0 %4031
    %v4033 = vrot.slane %v4032, 4
    %v4034 = vadd.f32 %v4032, %v4033
    %v4035 = vrot.slane %v4034, 2
    %v4036 = vadd.f32 %v4034, %v4035
    %v4037 = vrot.slane %v4036, 1
    %v4038 = vadd.f32 %v4036, %v4037
    %s4039 = vtos %v4038
    %v4040 = vlaneseq
    %v4041 = vshrl.u32 %v4040, 7
    %v4042 = vlaneseq
    %v4043 = vand.u32 %v4042, 127
    %vm4044 = vcmp.eq.s32.totalorder %v4043, 0
    %vm4045 = vcmp.eq.s32.totalorder %v4041, 0
    %vm4046 = vmand %vm4045, %vm4044
    %v4047 = vstv %s484
    %v4048 = vsel %vm4046, %v4047, 0.0
    %vm4049 = vcmp.eq.s32.totalorder %v4041, 1
    %vm4050 = vmand %vm4049, %vm4044
    %v4051 = vstv %s4039
    %v4052 = vsel %vm4050, %v4051, 0.0
    %v4053 = vadd.f32 %v4048, %v4052
    %vm4054 = vcmp.eq.s32.totalorder %v4041, 2
    %vm4055 = vmand %vm4054, %vm4044
    %v4056 = vstv %s671
    %v4057 = vsel %vm4055, %v4056, 0.0
    %v4058 = vadd.f32 %v4053, %v4057
    %vm4059 = vcmp.eq.s32.totalorder %v4041, 3
    %vm4060 = vmand %vm4059, %vm4044
    %v4061 = vstv %s856
    %v4062 = vsel %vm4060, %v4061, 0.0
    %v4063 = vadd.f32 %v4058, %v4062
    %4064 = vst [vmem:[#allocation8] sm:$0xff] %v4063
    // Predicated region
    $region18: #{tpu_custom_call.1} parent=1 // pred_check
      _
    $region19: #{tpu_custom_call.1} parent=1 // pred_check_branch
      %4066 = sbr.rel (0) target = $region21
    $region20: #{tpu_custom_call.1} parent=1 // pred_region
      %4068 = vsyncadd [#allocation5], 0
      %s4070 = sshll.u32 [#allocation8], 4
      %s4071 = int_to_ptr.vmem [resolvable:$true] %s4070
      %s4072 = sshll.u32 %s2, 4
      %s4073 = int_to_ptr.hbm [resolvable:$true] %s4072
      %4075 = dma.vmem_to_hbm [thread:$0]  %s4071, 128, %s4073, [#allocation5]
    $region21: #{tpu_custom_call.1} parent=1 // pred_fallthru
      _
    // Predicated region
    $region22: #{tpu_custom_call.1} parent=1 // pred_check
      _
    $region23: #{tpu_custom_call.1} parent=1 // pred_check_branch
      %4077 = sbr.rel (0) target = $region25
    $region24: #{tpu_custom_call.1} parent=1 // pred_region
      %4079 = dma.done [#allocation5], 128
    $region25: #{tpu_custom_call.1} parent=1 // pred_fallthru
      _
    %4080 = vsyncpa [#allocation4], 1
    %4081 = vsyncpa [#allocation7], 1
    %4082 = vsyncpa [#allocation5], 1

</llo_original>
